<compile_context>
chip_gen: v6e
topology: v6e:2x2x1
jax: 0.10.0
libtpu: 0.0.40
codegen_flags: <defaults>
</compile_context>

<pallas_src>
import functools

import jax
import jax.numpy as jnp
from jax.experimental import pallas as pl
from jax.experimental.pallas import tpu as pltpu

_EPS = 1e-5                      # nn.BatchNorm2d default eps
_LANE = 128                      # channel padding target (lane-dense)
_VMEM_LIMIT = 48 * 1024 * 1024   # <= ~48 MiB keeps headroom on v7x (64 MiB VMEM)


def _round_up(x, m):
    return (x + m - 1) // m * m


def _pad_axis(a, axis, target):
    pad = [(0, 0)] * a.ndim
    pad[axis] = (0, target - a.shape[axis])
    return jnp.pad(a, pad)


def _mosaic(semantics):
    return pltpu.CompilerParams(dimension_semantics=semantics,
                                vmem_limit_bytes=_VMEM_LIMIT)


def _pick_row_block(h_out, n, w_out, *, target_m=512, max_rows=32):
    """Row block R dividing h_out: prefer >=2 grid steps (megacore) and an
    MXU-friendly M = R*N*W per step."""
    divisors = [r for r in range(1, min(h_out, max_rows) + 1) if h_out % r == 0]
    cand = [r for r in divisors if h_out // r >= 2] or divisors
    for r in cand:                              # ascending
        if r * n * w_out >= target_m:
            return r
    return cand[-1]


def _pick_tile_m(m, *, max_tile=1024):
    """Row tile for the matmul/finalize kernels; avoid M padding if possible."""
    if m <= max_tile:
        return m, m
    best = None
    for t in range(8, max_tile + 1, 8):
        if m % t == 0:
            best = t
    if best is not None:
        return best, m
    return 512, _round_up(m, 512)


# ----------------------------- Pallas kernels ------------------------------ #

def _conv3x3_s1_kernel(x_ref, w_ref, sc_ref, bs_ref, y_ref, st_ref, *,
                       rows, n_batch, h_valid, w_valid, c_in_p, apply_affine):
    """One block of `rows` output rows of a stride-1 3x3 conv (pad 1).

    x_ref : (H+2, N, W+2, Cp)   zero-ring padded input, VMEM resident (bf16)
    w_ref : (9*Cp, Coutp)       weights, K order = (kh, kw, cin), VMEM resident
    y_ref : (rows, N, W, Coutp) output row block (bf16)
    st_ref: (1, 2, Coutp)       partial (sum, sum_sq) of this block's raw output
    """
    r0 = pl.multiple_of(pl.program_id(0) * rows, rows)
    win = x_ref[pl.ds(r0, rows + 2)]                     # (rows+2, N, W+2, Cp)
    if apply_affine:
        # Folded BN1 + ReLU of the previous stage, applied once per row block.
        v = win.astype(jnp.float32) * sc_ref[...] + bs_ref[...]
        v = jnp.maximum(v, 0.0)
        # The conv's zero padding ring must stay zero after the affine.
        gr = jax.lax.broadcasted_iota(jnp.int32, v.shape, 0) + r0
        gc = jax.lax.broadcasted_iota(jnp.int32, v.shape, 2)
        interior = ((gr >= 1) & (gr <= h_valid) & (gc >= 1) & (gc <= w_valid))
        win = jnp.where(interior, v, 0.0).astype(jnp.bfloat16)
    # All 9 (kh, kw) taps concatenated along the K/lane axis -> one MXU matmul.
    taps = [win[kh:kh + rows, :, kw:kw + w_valid, :]
            for kh in range(3) for kw in range(3)]
    lhs = jnp.concatenate(taps, axis=-1)
    lhs = lhs.reshape(rows * n_batch * w_valid, 9 * c_in_p)
    acc = jnp.dot(lhs, w_ref[...], preferred_element_type=jnp.float32)
    y_ref[...] = acc.reshape(y_ref.shape).astype(y_ref.dtype)
    s1 = jnp.sum(acc, axis=0, keepdims=True)
    s2 = jnp.sum(acc * acc, axis=0, keepdims=True)
    st_ref[...] = jnp.concatenate([s1, s2], axis=0).reshape(st_ref.shape)


def _conv3x3_s2_kernel(xe_ref, xo_ref, w_ref, y_ref, st_ref, *,
                       rows, n_batch, w_out, c_in_p):
    """One block of `rows` output rows of a stride-2 3x3 conv (pad 1).

    xe_ref: (h_out+1, N, w_out+1, 2*Cp)  even-H-parity plane of the padded input
    xo_ref: (h_out+1, N, w_out+1, 2*Cp)  odd-H-parity plane
        lane block [0:Cp]   = even padded column (= original column 2j-1)
        lane block [Cp:2Cp] = odd  padded column (= original column 2j)
    """
    r0 = pl.multiple_of(pl.program_id(0) * rows, rows)
    we = xe_ref[pl.ds(r0, rows + 1)]                     # (rows+1, N, Wh, 2Cp)
    wo = xo_ref[pl.ds(r0, rows)]                         # (rows,   N, Wh, 2Cp)
    rows_kh = (we[:rows], wo, we[1:rows + 1])            # kh = 0, 1, 2
    taps = []
    for kh in range(3):
        blk = rows_kh[kh]
        taps.append(blk[:, :, 0:w_out, 0:c_in_p])              # kw = 0
        taps.append(blk[:, :, 0:w_out, c_in_p:2 * c_in_p])     # kw = 1
        taps.append(blk[:, :, 1:w_out + 1, 0:c_in_p])          # kw = 2
    lhs = jnp.concatenate(taps, axis=-1)
    lhs = lhs.reshape(rows * n_batch * w_out, 9 * c_in_p)
    acc = jnp.dot(lhs, w_ref[...], preferred_element_type=jnp.float32)
    y_ref[...] = acc.reshape(y_ref.shape).astype(y_ref.dtype)
    s1 = jnp.sum(acc, axis=0, keepdims=True)
    s2 = jnp.sum(acc * acc, axis=0, keepdims=True)
    st_ref[...] = jnp.concatenate([s1, s2], axis=0).reshape(st_ref.shape)


def _matmul_stats_kernel(x_ref, w_ref, y_ref, st_ref):
    """Tiled 1x1 conv (matmul) + per-tile partial BN statistics."""
    acc = jnp.dot(x_ref[...], w_ref[...], preferred_element_type=jnp.float32)
    y_ref[...] = acc.astype(y_ref.dtype)
    s1 = jnp.sum(acc, axis=0, keepdims=True)
    s2 = jnp.sum(acc * acc, axis=0, keepdims=True)
    st_ref[...] = jnp.concatenate([s1, s2], axis=0).reshape(st_ref.shape)


def _finalize_kernel(y_ref, r_ref, s2_ref, b2_ref, sr_ref, br_ref, o_ref):
    """out = relu(BN2(y2) + BN_d(residual)) with pre-folded affines (bf16 out)."""
    y = y_ref[...].astype(jnp.float32) * s2_ref[...] + b2_ref[...]
    r = r_ref[...].astype(jnp.float32) * sr_ref[...] + br_ref[...]
    o_ref[...] = jnp.maximum(y + r, 0.0).astype(o_ref.dtype)


# ----------------------------- pallas_call glue ----------------------------- #

def _conv3x3_s1_call(x_pad, w_flat, in_scale, in_bias, *, rows, n, h_out, w_out,
                     c_in_p, c_out_p, apply_affine):
    nb = h_out // rows
    kernel = functools.partial(
        _conv3x3_s1_kernel, rows=rows, n_batch=n, h_valid=h_out, w_valid=w_out,
        c_in_p=c_in_p, apply_affine=apply_affine)
    m = n * h_out * w_out
    cost = pl.CostEstimate(
        flops=2 * m * 9 * c_in_p * c_out_p, transcendentals=0,
        bytes_accessed=(x_pad.size + w_flat.size + m * c_out_p) * 2
        + nb * 2 * c_out_p * 4)
    return pl.pallas_call(
        kernel,
        grid=(nb,),
        in_specs=[
            pl.BlockSpec(x_pad.shape, lambda i: (0, 0, 0, 0)),   # VMEM resident
            pl.BlockSpec((9 * c_in_p, c_out_p), lambda i: (0, 0)),
            pl.BlockSpec((1, c_in_p), lambda i: (0, 0)),
            pl.BlockSpec((1, c_in_p), lambda i: (0, 0)),
        ],
        out_specs=[
            pl.BlockSpec((rows, n, w_out, c_out_p), lambda i: (i, 0, 0, 0)),
            pl.BlockSpec((1, 2, c_out_p), lambda i: (i, 0, 0)),
        ],
        out_shape=[
            jax.ShapeDtypeStruct((h_out, n, w_out, c_out_p), jnp.bfloat16),
            jax.ShapeDtypeStruct((nb, 2, c_out_p), jnp.float32),
        ],
        compiler_params=_mosaic(("parallel",)),
        cost_estimate=cost,
    )(x_pad, w_flat, in_scale, in_bias)


def _conv3x3_s2_call(x_even, x_odd, w_flat, *, rows, n, h_out, w_out,
                     c_in_p, c_out_p):
    nb = h_out // rows
    kernel = functools.partial(_conv3x3_s2_kernel, rows=rows, n_batch=n,
                               w_out=w_out, c_in_p=c_in_p)
    m = n * h_out * w_out
    cost = pl.CostEstimate(
        flops=2 * m * 9 * c_in_p * c_out_p, transcendentals=0,
        bytes_accessed=(x_even.size + x_odd.size + w_flat.size
                        + m * c_out_p) * 2 + nb * 2 * c_out_p * 4)
    return pl.pallas_call(
        kernel,
        grid=(nb,),
        in_specs=[
            pl.BlockSpec(x_even.shape, lambda i: (0, 0, 0, 0)),
            pl.BlockSpec(x_odd.shape, lambda i: (0, 0, 0, 0)),
            pl.BlockSpec((9 * c_in_p, c_out_p), lambda i: (0, 0)),
        ],
        out_specs=[
            pl.BlockSpec((rows, n, w_out, c_out_p), lambda i: (i, 0, 0, 0)),
            pl.BlockSpec((1, 2, c_out_p), lambda i: (i, 0, 0)),
        ],
        out_shape=[
            jax.ShapeDtypeStruct((h_out, n, w_out, c_out_p), jnp.bfloat16),
            jax.ShapeDtypeStruct((nb, 2, c_out_p), jnp.float32),
        ],
        compiler_params=_mosaic(("parallel",)),
        cost_estimate=cost,
    )(x_even, x_odd, w_flat)


def _matmul_stats_call(x2d, w, *, tile_m, c_in_p, c_out_p):
    mp = x2d.shape[0]
    nt = mp // tile_m
    cost = pl.CostEstimate(
        flops=2 * mp * c_in_p * c_out_p, transcendentals=0,
        bytes_accessed=(x2d.size + w.size + mp * c_out_p) * 2
        + nt * 2 * c_out_p * 4)
    return pl.pallas_call(
        _matmul_stats_kernel,
        grid=(nt,),
        in_specs=[pl.BlockSpec((tile_m, c_in_p), lambda i: (i, 0)),
                  pl.BlockSpec((c_in_p, c_out_p), lambda i: (0, 0))],
        out_specs=[pl.BlockSpec((tile_m, c_out_p), lambda i: (i, 0)),
                   pl.BlockSpec((1, 2, c_out_p), lambda i: (i, 0, 0))],
        out_shape=[jax.ShapeDtypeStruct((mp, c_out_p), jnp.bfloat16),
                   jax.ShapeDtypeStruct((nt, 2, c_out_p), jnp.float32)],
        compiler_params=_mosaic(("parallel",)),
        cost_estimate=cost,
    )(x2d, w)


def _finalize_call(y2d, r2d, s2, b2, sr, br, *, tile_m, c_out_p):
    mp = y2d.shape[0]
    nt = mp // tile_m
    vec = pl.BlockSpec((1, c_out_p), lambda i: (0, 0))
    cost = pl.CostEstimate(
        flops=4 * mp * c_out_p, transcendentals=0,
        bytes_accessed=(y2d.size + r2d.size + mp * c_out_p) * 2)
    return pl.pallas_call(
        _finalize_kernel,
        grid=(nt,),
        in_specs=[pl.BlockSpec((tile_m, c_out_p), lambda i: (i, 0)),
                  pl.BlockSpec((tile_m, c_out_p), lambda i: (i, 0)),
                  vec, vec, vec, vec],
        out_specs=pl.BlockSpec((tile_m, c_out_p), lambda i: (i, 0)),
        out_shape=jax.ShapeDtypeStruct((mp, c_out_p), jnp.bfloat16),
        compiler_params=_mosaic(("parallel",)),
        cost_estimate=cost,
    )(y2d, r2d, s2, b2, sr, br)


# ------------------------------- JAX wrapper -------------------------------- #

def _fold_bn(stats, count, gamma, beta, c_p):
    """Reduce partial (sum, sum_sq) and fold training-mode BN into scale/bias."""
    s1 = jnp.sum(stats[:, 0, :], axis=0)
    s2 = jnp.sum(stats[:, 1, :], axis=0)
    mean = s1 / count
    var = jnp.maximum(s2 / count - mean * mean, 0.0)     # biased variance
    g = jnp.pad(gamma, (0, c_p - gamma.shape[0])).astype(jnp.float32)
    b = jnp.pad(beta, (0, c_p - beta.shape[0])).astype(jnp.float32)
    scale = g * jax.lax.rsqrt(var + _EPS)
    bias = b - mean * scale
    return scale.reshape(1, c_p), bias.reshape(1, c_p)


def _prep_w3x3(w, c_in_p, c_out_p):
    # (Cout, Cin, 3, 3) -> (kh, kw, Cin_p, Cout_p) -> (9*Cin_p, Cout_p) bf16
    w = jnp.transpose(w, (2, 3, 1, 0))
    w = _pad_axis(_pad_axis(w, 2, c_in_p), 3, c_out_p)
    return w.reshape(9 * c_in_p, c_out_p).astype(jnp.bfloat16)


def basic_block_forward(x_nchw, params, c_in, c_out, is_downsample):
    stride = 2 if is_downsample else 1
    use_ds = is_downsample or (c_in != c_out)   # mirrors the PyTorch flag fixup

    n, _, h, w = x_nchw.shape
    c_in_p = _round_up(c_in, _LANE)
    c_out_p = _round_up(c_out, _LANE)
    h_out = (h - 1) // stride + 1
    w_out = (w - 1) // stride + 1
    m = n * h_out * w_out

    # conv1 input layout (one XLA chain): NCHW -> (H, N, W, C), lane-padded
    # channels, +1 zero ring for the conv padding, bf16, and (stride 2 only)
    # even/odd row & column de-interleave so every in-kernel tap is a
    # unit-stride, lane-aligned slice.
    x = jnp.transpose(x_nchw.astype(jnp.bfloat16), (2, 0, 3, 1))   # (H, N, W, C)
    x = _pad_axis(x, 3, c_in_p)
    if stride == 1:
        x1_in = jnp.pad(x, ((1, 1), (0, 0), (1, 1), (0, 0)))
        x_even = x_odd = None
    else:
        hp = _round_up(h + 2, 2)
        wp = _round_up(w + 2, 2)
        xp = jnp.pad(x, ((1, hp - h - 1), (0, 0), (1, wp - w - 1), (0, 0)))
        t = xp.reshape(hp // 2, 2, n, wp // 2, 2, c_in_p)
        t = jnp.transpose(t, (1, 0, 2, 3, 4, 5))
        t = t.reshape(2, hp // 2, n, wp // 2, 2 * c_in_p)
        x_even, x_odd = t[0], t[1]   # plane[a, b, j, q*Cp+c] = xp[2a+{0,1}, b, 2j+q, c]
        x1_in = None

    rows = _pick_row_block(h_out, n, w_out)

    # ---- conv1 (3x3, stride, pad 1) + BN1 batch statistics ----
    w1 = _prep_w3x3(params["w1"], c_in_p, c_out_p)
    if stride == 1:
        zero_vec = jnp.zeros((1, c_in_p), jnp.float32)
        y1, st1 = _conv3x3_s1_call(x1_in, w1, zero_vec, zero_vec, rows=rows,
                                   n=n, h_out=h_out, w_out=w_out,
                                   c_in_p=c_in_p, c_out_p=c_out_p,
                                   apply_affine=False)
    else:
        y1, st1 = _conv3x3_s2_call(x_even, x_odd, w1, rows=rows, n=n,
                                   h_out=h_out, w_out=w_out,
                                   c_in_p=c_in_p, c_out_p=c_out_p)
    sc1, bs1 = _fold_bn(st1, m, params["g1"], params["b1"], c_out_p)

    # ---- conv2 (3x3, stride 1, pad 1); BN1 + ReLU folded into its input ----
    w2 = _prep_w3x3(params["w2"], c_out_p, c_out_p)
    y1_pad = jnp.pad(y1, ((1, 1), (0, 0), (1, 1), (0, 0)))
    y2, st2 = _conv3x3_s1_call(y1_pad, w2, sc1, bs1, rows=rows, n=n,
                               h_out=h_out, w_out=w_out, c_in_p=c_out_p,
                               c_out_p=c_out_p, apply_affine=True)
    sc2, bs2 = _fold_bn(st2, m, params["g2"], params["b2"], c_out_p)

    tile_m, mp = _pick_tile_m(m)

    def to_rows(a):
        a = a.reshape(m, a.shape[-1])
        return a if mp == m else jnp.pad(a, ((0, mp - m), (0, 0)))

    y2_2d = to_rows(y2)

    # ---- residual path ----
    if use_ds:
        if stride == 2:
            # original even rows / even cols == odd-H plane, odd-W lane block
            x_s = x_odd[:h_out, :, :w_out, c_in_p:]
        else:
            x_s = x1_in[1:h + 1, :, 1:w + 1, :]
        wd = params["wd"].reshape(c_out, c_in).T                  # (Cin, Cout)
        wd = _pad_axis(_pad_axis(wd, 0, c_in_p), 1, c_out_p).astype(jnp.bfloat16)
        xd, std = _matmul_stats_call(to_rows(x_s), wd, tile_m=tile_m,
                                     c_in_p=c_in_p, c_out_p=c_out_p)
        rsc, rbs = _fold_bn(std, m, params["gd"], params["bd"], c_out_p)
        resid = xd
    else:
        resid = to_rows(x1_in[1:h + 1, :, 1:w + 1, :])
        rsc = jnp.ones((1, c_out_p), jnp.float32)
        rbs = jnp.zeros((1, c_out_p), jnp.float32)

    # ---- BN2 + downsample-BN + residual add + ReLU (bf16 writeback) ----
    out2d = _finalize_call(y2_2d, resid, sc2, bs2, rsc, rbs,
                           tile_m=tile_m, c_out_p=c_out_p)
    out = out2d[:m, :c_out].reshape(h_out, n, w_out, c_out)
    # NCHW f32 to match the PyTorch module (skip if downstream takes NHWC/bf16).
    return jnp.transpose(out, (1, 3, 0, 2)).astype(jnp.float32)


# ------------------------------- parameters --------------------------------- #

def init_params(key, c_in, c_out, is_downsample):
    """Deterministic synthetic parameters (PyTorch layouts)."""
    ks = jax.random.split(key, 9)
    use_ds = is_downsample or (c_in != c_out)
    p = {
        "w1": 0.1 * jax.random.normal(ks[0], (c_out, c_in, 3, 3), jnp.float32),
        "g1": 1.0 + 0.1 * jax.random.normal(ks[1], (c_out,), jnp.float32),
        "b1": 0.1 * jax.random.normal(ks[2], (c_out,), jnp.float32),
        "w2": 0.1 * jax.random.normal(ks[3], (c_out, c_out, 3, 3), jnp.float32),
        "g2": 1.0 + 0.1 * jax.random.normal(ks[4], (c_out,), jnp.float32),
        "b2": 0.1 * jax.random.normal(ks[5], (c_out,), jnp.float32),
    }
    if use_ds:
        p["wd"] = 0.1 * jax.random.normal(ks[6], (c_out, c_in, 1, 1), jnp.float32)
        p["gd"] = 1.0 + 0.05 * jax.random.normal(ks[7], (c_out,), jnp.float32)
        p["bd"] = 0.05 * jax.random.normal(ks[8], (c_out,), jnp.float32)
    return p


# ---------------------------- pure-JAX reference ----------------------------- #

def _bn_train_ref(y, g, b):
    mean = y.mean(axis=(0, 2, 3), keepdims=True)
    var = ((y - mean) ** 2).mean(axis=(0, 2, 3), keepdims=True)
    return (y - mean) * jax.lax.rsqrt(var + _EPS) * g.reshape(1, -1, 1, 1) \
        + b.reshape(1, -1, 1, 1)


def _ref_forward(x, p, c_in, c_out, is_downsample):
    stride = 2 if is_downsample else 1
    use_ds = is_downsample or (c_in != c_out)
    conv = lambda a, w, s, pad: jax.lax.conv_general_dilated(
        a, w, (s, s), pad, dimension_numbers=("NCHW", "OIHW", "NCHW"))
    y = conv(x, p["w1"], stride, [(1, 1), (1, 1)])
    y = jnp.maximum(_bn_train_ref(y, p["g1"], p["b1"]), 0.0)
    y = conv(y, p["w2"], 1, [(1, 1), (1, 1)])
    y = _bn_train_ref(y, p["g2"], p["b2"])
    if use_ds:
        xd = conv(x, p["wd"], stride, [(0, 0), (0, 0)])
        xd = _bn_train_ref(xd, p["gd"], p["bd"])
    else:
        xd = x
    return jnp.maximum(xd + y, 0.0)


# ----------------------------------- main ------------------------------------ #

if __name__ == "__main__":
    key = jax.random.PRNGKey(0)
    fwd = jax.jit(basic_block_forward,
                  static_argnames=("c_in", "c_out", "is_downsample"))
    configs = [
        # (c_in, c_out, is_downsample, x shape NCHW)
        (4, 8, True, (2, 4, 16, 16)),
        (8, 8, False, (2, 8, 16, 16)),
    ]
    for idx, (c_in, c_out, is_ds, xshape) in enumerate(configs):
        kx, kp = jax.random.split(jax.random.fold_in(key, idx))
        x = jax.random.normal(kx, xshape, jnp.float32)
        params = init_params(kp, c_in, c_out, is_ds)

        out = jax.block_until_ready(
            fwd(x, params, c_in=c_in, c_out=c_out, is_downsample=is_ds))
        ref = jax.block_until_ready(_ref_forward(x, params, c_in, c_out, is_ds))

        assert out.shape == ref.shape, (out.shape, ref.shape)
        assert bool(jnp.all(jnp.isfinite(out)))
        # bf16 MXU operands (f32 accumulation) + bf16 writeback -> relaxed check
        assert bool(jnp.allclose(out, ref, rtol=2e-2, atol=5e-2)), \
            float(jnp.max(jnp.abs(out - ref)))

    print("KERNEL_OK")
</pallas_src>

<mosaic_0001>
module attributes {stable_mosaic.version = 11 : i64} {
  func.func @_conv3x3_s2_kernel(%arg0: i32, %arg1: memref<9x2x9x256xbf16, #tpu.memory_space<vmem>>, %arg2: memref<9x2x9x256xbf16, #tpu.memory_space<vmem>>, %arg3: memref<1152x128xbf16, #tpu.memory_space<vmem>>, %arg4: memref<4x2x8x128xbf16, #tpu.memory_space<vmem>>, %arg5: memref<1x2x128xf32, #tpu.memory_space<vmem>>) attributes {dimension_semantics = [#tpu.dimension_semantics<parallel>], iteration_bounds = array<i64: 2>, scalar_prefetch = 0 : i64, scratch_operands = 0 : i64, tpu.core_type = #tpu.core_type<tc>, window_params = [{pipeline_mode = #tpu.pipeline_mode<synchronous>, transform_indices = @transform_0, window_bounds = array<i64: 9, 2, 9, 256>}, {pipeline_mode = #tpu.pipeline_mode<synchronous>, transform_indices = @transform_1, window_bounds = array<i64: 9, 2, 9, 256>}, {pipeline_mode = #tpu.pipeline_mode<synchronous>, transform_indices = @transform_2, window_bounds = array<i64: 1152, 128>}, {transform_indices = @transform_3, window_bounds = array<i64: 4, 2, 8, 128>}, {transform_indices = @transform_4, window_bounds = array<i64: 1, 2, 128>}]} {
    %c4_i32 = arith.constant 4 : i32
    %0 = arith.muli %arg0, %c4_i32 : i32
    %1 = tpu.assume_multiple %0, 4 : i32
    %2 = arith.index_cast %1 : i32 to index
    %c0 = arith.constant 0 : index
    %c0_0 = arith.constant 0 : index
    %c0_1 = arith.constant 0 : index
    %3 = vector.load %arg1[%2, %c0, %c0_0, %c0_1] : memref<9x2x9x256xbf16, #tpu.memory_space<vmem>>, vector<5x2x9x256xbf16>
    %4 = arith.index_cast %1 : i32 to index
    %c0_2 = arith.constant 0 : index
    %c0_3 = arith.constant 0 : index
    %c0_4 = arith.constant 0 : index
    %5 = vector.load %arg2[%4, %c0_2, %c0_3, %c0_4] : memref<9x2x9x256xbf16, #tpu.memory_space<vmem>>, vector<4x2x9x256xbf16>
    %6 = vector.extract_strided_slice %3 {offsets = [0, 0, 0, 0], sizes = [4, 2, 9, 256], strides = [1, 1, 1, 1]} : vector<5x2x9x256xbf16> to vector<4x2x9x256xbf16>
    %7 = vector.extract_strided_slice %3 {offsets = [1, 0, 0, 0], sizes = [4, 2, 9, 256], strides = [1, 1, 1, 1]} : vector<5x2x9x256xbf16> to vector<4x2x9x256xbf16>
    %8 = vector.extract_strided_slice %6 {offsets = [0, 0, 0, 0], sizes = [4, 2, 8, 128], strides = [1, 1, 1, 1]} : vector<4x2x9x256xbf16> to vector<4x2x8x128xbf16>
    %9 = vector.extract_strided_slice %6 {offsets = [0, 0, 0, 128], sizes = [4, 2, 8, 128], strides = [1, 1, 1, 1]} : vector<4x2x9x256xbf16> to vector<4x2x8x128xbf16>
    %10 = vector.extract_strided_slice %6 {offsets = [0, 0, 1, 0], sizes = [4, 2, 8, 128], strides = [1, 1, 1, 1]} : vector<4x2x9x256xbf16> to vector<4x2x8x128xbf16>
    %11 = vector.extract_strided_slice %5 {offsets = [0, 0, 0, 0], sizes = [4, 2, 8, 128], strides = [1, 1, 1, 1]} : vector<4x2x9x256xbf16> to vector<4x2x8x128xbf16>
    %12 = vector.extract_strided_slice %5 {offsets = [0, 0, 0, 128], sizes = [4, 2, 8, 128], strides = [1, 1, 1, 1]} : vector<4x2x9x256xbf16> to vector<4x2x8x128xbf16>
    %13 = vector.extract_strided_slice %5 {offsets = [0, 0, 1, 0], sizes = [4, 2, 8, 128], strides = [1, 1, 1, 1]} : vector<4x2x9x256xbf16> to vector<4x2x8x128xbf16>
    %14 = vector.extract_strided_slice %7 {offsets = [0, 0, 0, 0], sizes = [4, 2, 8, 128], strides = [1, 1, 1, 1]} : vector<4x2x9x256xbf16> to vector<4x2x8x128xbf16>
    %15 = vector.extract_strided_slice %7 {offsets = [0, 0, 0, 128], sizes = [4, 2, 8, 128], strides = [1, 1, 1, 1]} : vector<4x2x9x256xbf16> to vector<4x2x8x128xbf16>
    %16 = vector.extract_strided_slice %7 {offsets = [0, 0, 1, 0], sizes = [4, 2, 8, 128], strides = [1, 1, 1, 1]} : vector<4x2x9x256xbf16> to vector<4x2x8x128xbf16>
    %17 = tpu.concatenate %8, %9, %10, %11, %12, %13, %14, %15, %16 in 3 : vector<4x2x8x128xbf16>, vector<4x2x8x128xbf16>, vector<4x2x8x128xbf16>, vector<4x2x8x128xbf16>, vector<4x2x8x128xbf16>, vector<4x2x8x128xbf16>, vector<4x2x8x128xbf16>, vector<4x2x8x128xbf16>, vector<4x2x8x128xbf16> -> vector<4x2x8x1152xbf16>
    %18 = vector.shape_cast %17 : vector<4x2x8x1152xbf16> to vector<64x1152xbf16>
    %c0_5 = arith.constant 0 : index
    %c0_6 = arith.constant 0 : index
    %19 = vector.load %arg3[%c0_5, %c0_6] : memref<1152x128xbf16, #tpu.memory_space<vmem>>, vector<1152x128xbf16>
    %cst = arith.constant dense<0.000000e+00> : vector<64x128xf32>
    %20 = tpu.matmul %18, %19, %cst {dimension_numbers = #tpu.dot_dimension_numbers<[1], [0], [0], [1], [0, 0, 1, 1], [], []>} : vector<64x1152xbf16>, vector<1152x128xbf16>, vector<64x128xf32> -> vector<64x128xf32>
    %21 = vector.shape_cast %20 : vector<64x128xf32> to vector<4x2x8x128xf32>
    %22 = arith.truncf %21 : vector<4x2x8x128xf32> to vector<4x2x8x128xbf16>
    %c0_7 = arith.constant 0 : index
    %c0_8 = arith.constant 0 : index
    %c0_9 = arith.constant 0 : index
    %c0_10 = arith.constant 0 : index
    %23 = vector.load %arg4[%c0_7, %c0_8, %c0_9, %c0_10] : memref<4x2x8x128xbf16, #tpu.memory_space<vmem>>, vector<4x2x8x128xbf16>
    tpu.vector_store %arg4[%c0_7, %c0_8, %c0_9, %c0_10], %22 {strides = array<i32>} : memref<4x2x8x128xbf16, #tpu.memory_space<vmem>>, vector<4x2x8x128xbf16>,
    %cst_11 = arith.constant dense<0.000000e+00> : vector<128xf32>
    %24 = vector.multi_reduction <add>, %20, %cst_11 [0] : vector<64x128xf32> to vector<128xf32>
    %25 = vector.shape_cast %24 : vector<128xf32> to vector<1x128xf32>
    %26 = arith.mulf %20, %20 : vector<64x128xf32>
    %cst_12 = arith.constant dense<0.000000e+00> : vector<128xf32>
    %27 = vector.multi_reduction <add>, %26, %cst_12 [0] : vector<64x128xf32> to vector<128xf32>
    %28 = vector.shape_cast %27 : vector<128xf32> to vector<1x128xf32>
    %29 = tpu.concatenate %25, %28 in 0 : vector<1x128xf32>, vector<1x128xf32> -> vector<2x128xf32>
    %30 = vector.shape_cast %29 : vector<2x128xf32> to vector<1x2x128xf32>
    %c0_13 = arith.constant 0 : index
    %c0_14 = arith.constant 0 : index
    %c0_15 = arith.constant 0 : index
    %31 = vector.load %arg5[%c0_13, %c0_14, %c0_15] : memref<1x2x128xf32, #tpu.memory_space<vmem>>, vector<1x2x128xf32>
    tpu.vector_store %arg5[%c0_13, %c0_14, %c0_15], %30 {strides = array<i32>} : memref<1x2x128xf32, #tpu.memory_space<vmem>>, vector<1x2x128xf32>,
    return
  }
  func.func @transform_0(%arg0: i32) -> (i32, i32, i32, i32) {
    %c0_i32 = arith.constant 0 : i32
    %c0_i32_0 = arith.constant 0 : i32
    %c0_i32_1 = arith.constant 0 : i32
    %c0_i32_2 = arith.constant 0 : i32
    %c0_i32_3 = arith.constant 0 : i32
    return %c0_i32, %c0_i32_0, %c0_i32_1, %c0_i32_2 : i32, i32, i32, i32
  }
  func.func @transform_1(%arg0: i32) -> (i32, i32, i32, i32) {
    %c0_i32 = arith.constant 0 : i32
    %c0_i32_0 = arith.constant 0 : i32
    %c0_i32_1 = arith.constant 0 : i32
    %c0_i32_2 = arith.constant 0 : i32
    %c0_i32_3 = arith.constant 0 : i32
    return %c0_i32, %c0_i32_0, %c0_i32_1, %c0_i32_2 : i32, i32, i32, i32
  }
  func.func @transform_2(%arg0: i32) -> (i32, i32) {
    %c0_i32 = arith.constant 0 : i32
    %c0_i32_0 = arith.constant 0 : i32
    %c0_i32_1 = arith.constant 0 : i32
    return %c0_i32, %c0_i32_0 : i32, i32
  }
  func.func @transform_3(%arg0: i32) -> (i32, i32, i32, i32) {
    %c0_i32 = arith.constant 0 : i32
    %c0_i32_0 = arith.constant 0 : i32
    %c0_i32_1 = arith.constant 0 : i32
    %c0_i32_2 = arith.constant 0 : i32
    return %arg0, %c0_i32, %c0_i32_0, %c0_i32_1 : i32, i32, i32, i32
  }
  func.func @transform_4(%arg0: i32) -> (i32, i32, i32) {
    %c0_i32 = arith.constant 0 : i32
    %c0_i32_0 = arith.constant 0 : i32
    %c0_i32_1 = arith.constant 0 : i32
    return %arg0, %c0_i32, %c0_i32_0 : i32, i32, i32
  }
}

module attributes {stable_mosaic.version = 11 : i64} {
  func.func @_conv3x3_s1_kernel(%arg0: i32, %arg1: memref<10x2x10x128xbf16, #tpu.memory_space<vmem>>, %arg2: memref<1152x128xbf16, #tpu.memory_space<vmem>>, %arg3: memref<1x128xf32, #tpu.memory_space<vmem>>, %arg4: memref<1x128xf32, #tpu.memory_space<vmem>>, %arg5: memref<4x2x8x128xbf16, #tpu.memory_space<vmem>>, %arg6: memref<1x2x128xf32, #tpu.memory_space<vmem>>) attributes {dimension_semantics = [#tpu.dimension_semantics<parallel>], iteration_bounds = array<i64: 2>, scalar_prefetch = 0 : i64, scratch_operands = 0 : i64, tpu.core_type = #tpu.core_type<tc>, window_params = [{pipeline_mode = #tpu.pipeline_mode<synchronous>, transform_indices = @transform_0, window_bounds = array<i64: 10, 2, 10, 128>}, {pipeline_mode = #tpu.pipeline_mode<synchronous>, transform_indices = @transform_1, window_bounds = array<i64: 1152, 128>}, {pipeline_mode = #tpu.pipeline_mode<synchronous>, transform_indices = @transform_2, window_bounds = array<i64: 1, 128>}, {pipeline_mode = #tpu.pipeline_mode<synchronous>, transform_indices = @transform_3, window_bounds = array<i64: 1, 128>}, {transform_indices = @transform_4, window_bounds = array<i64: 4, 2, 8, 128>}, {transform_indices = @transform_5, window_bounds = array<i64: 1, 2, 128>}]} {
    %c4_i32 = arith.constant 4 : i32
    %0 = arith.muli %arg0, %c4_i32 : i32
    %1 = tpu.assume_multiple %0, 4 : i32
    %2 = arith.index_cast %1 : i32 to index
    %c0 = arith.constant 0 : index
    %c0_0 = arith.constant 0 : index
    %c0_1 = arith.constant 0 : index
    %3 = vector.load %arg1[%2, %c0, %c0_0, %c0_1] : memref<10x2x10x128xbf16, #tpu.memory_space<vmem>>, vector<6x2x10x128xbf16>
    %4 = arith.extf %3 : vector<6x2x10x128xbf16> to vector<6x2x10x128xf32>
    %c0_2 = arith.constant 0 : index
    %c0_3 = arith.constant 0 : index
    %5 = vector.load %arg3[%c0_2, %c0_3] : memref<1x128xf32, #tpu.memory_space<vmem>>, vector<1x128xf32>
    %6 = vector.shape_cast %5 : vector<1x128xf32> to vector<1x1x1x128xf32>
    %7 = vector.broadcast %6 : vector<1x1x1x128xf32> to vector<6x2x10x128xf32>
    %8 = arith.mulf %4, %7 : vector<6x2x10x128xf32>
    %c0_4 = arith.constant 0 : index
    %c0_5 = arith.constant 0 : index
    %9 = vector.load %arg4[%c0_4, %c0_5] : memref<1x128xf32, #tpu.memory_space<vmem>>, vector<1x128xf32>
    %10 = vector.shape_cast %9 : vector<1x128xf32> to vector<1x1x1x128xf32>
    %11 = vector.broadcast %10 : vector<1x1x1x128xf32> to vector<6x2x10x128xf32>
    %12 = arith.addf %8, %11 : vector<6x2x10x128xf32>
    %cst = arith.constant 0.000000e+00 : f32
    %13 = vector.broadcast %cst : f32 to vector<6x2x10x128xf32>
    %14 = arith.maximumf %12, %13 : vector<6x2x10x128xf32>
    %15 = tpu.iota {dimensions = array<i32: 0>} : vector<6x2x10x128xi32>
    %16 = vector.broadcast %1 : i32 to vector<6x2x10x128xi32>
    %17 = arith.addi %15, %16 : vector<6x2x10x128xi32>
    %18 = tpu.iota {dimensions = array<i32: 2>} : vector<6x2x10x128xi32>
    %c1_i32 = arith.constant 1 : i32
    %19 = vector.broadcast %c1_i32 : i32 to vector<6x2x10x128xi32>
    %20 = arith.cmpi sge, %17, %19 : vector<6x2x10x128xi32>
    %c8_i32 = arith.constant 8 : i32
    %21 = vector.broadcast %c8_i32 : i32 to vector<6x2x10x128xi32>
    %22 = arith.cmpi sle, %17, %21 : vector<6x2x10x128xi32>
    %23 = arith.andi %20, %22 : vector<6x2x10x128xi1>
    %c1_i32_6 = arith.constant 1 : i32
    %24 = vector.broadcast %c1_i32_6 : i32 to vector<6x2x10x128xi32>
    %25 = arith.cmpi sge, %18, %24 : vector<6x2x10x128xi32>
    %26 = arith.andi %23, %25 : vector<6x2x10x128xi1>
    %c8_i32_7 = arith.constant 8 : i32
    %27 = vector.broadcast %c8_i32_7 : i32 to vector<6x2x10x128xi32>
    %28 = arith.cmpi sle, %18, %27 : vector<6x2x10x128xi32>
    %29 = arith.andi %26, %28 : vector<6x2x10x128xi1>
    %cst_8 = arith.constant 0.000000e+00 : f32
    %30 = vector.broadcast %cst_8 : f32 to vector<6x2x10x128xf32>
    %31 = arith.select %29, %14, %30 : vector<6x2x10x128xi1>, vector<6x2x10x128xf32>
    %32 = arith.truncf %31 : vector<6x2x10x128xf32> to vector<6x2x10x128xbf16>
    %33 = vector.extract_strided_slice %32 {offsets = [0, 0, 0, 0], sizes = [4, 2, 8, 128], strides = [1, 1, 1, 1]} : vector<6x2x10x128xbf16> to vector<4x2x8x128xbf16>
    %34 = vector.extract_strided_slice %32 {offsets = [0, 0, 1, 0], sizes = [4, 2, 8, 128], strides = [1, 1, 1, 1]} : vector<6x2x10x128xbf16> to vector<4x2x8x128xbf16>
    %35 = vector.extract_strided_slice %32 {offsets = [0, 0, 2, 0], sizes = [4, 2, 8, 128], strides = [1, 1, 1, 1]} : vector<6x2x10x128xbf16> to vector<4x2x8x128xbf16>
    %36 = vector.extract_strided_slice %32 {offsets = [1, 0, 0, 0], sizes = [4, 2, 8, 128], strides = [1, 1, 1, 1]} : vector<6x2x10x128xbf16> to vector<4x2x8x128xbf16>
    %37 = vector.extract_strided_slice %32 {offsets = [1, 0, 1, 0], sizes = [4, 2, 8, 128], strides = [1, 1, 1, 1]} : vector<6x2x10x128xbf16> to vector<4x2x8x128xbf16>
    %38 = vector.extract_strided_slice %32 {offsets = [1, 0, 2, 0], sizes = [4, 2, 8, 128], strides = [1, 1, 1, 1]} : vector<6x2x10x128xbf16> to vector<4x2x8x128xbf16>
    %39 = vector.extract_strided_slice %32 {offsets = [2, 0, 0, 0], sizes = [4, 2, 8, 128], strides = [1, 1, 1, 1]} : vector<6x2x10x128xbf16> to vector<4x2x8x128xbf16>
    %40 = vector.extract_strided_slice %32 {offsets = [2, 0, 1, 0], sizes = [4, 2, 8, 128], strides = [1, 1, 1, 1]} : vector<6x2x10x128xbf16> to vector<4x2x8x128xbf16>
    %41 = vector.extract_strided_slice %32 {offsets = [2, 0, 2, 0], sizes = [4, 2, 8, 128], strides = [1, 1, 1, 1]} : vector<6x2x10x128xbf16> to vector<4x2x8x128xbf16>
    %42 = tpu.concatenate %33, %34, %35, %36, %37, %38, %39, %40, %41 in 3 : vector<4x2x8x128xbf16>, vector<4x2x8x128xbf16>, vector<4x2x8x128xbf16>, vector<4x2x8x128xbf16>, vector<4x2x8x128xbf16>, vector<4x2x8x128xbf16>, vector<4x2x8x128xbf16>, vector<4x2x8x128xbf16>, vector<4x2x8x128xbf16> -> vector<4x2x8x1152xbf16>
    %43 = vector.shape_cast %42 : vector<4x2x8x1152xbf16> to vector<64x1152xbf16>
    %c0_9 = arith.constant 0 : index
    %c0_10 = arith.constant 0 : index
    %44 = vector.load %arg2[%c0_9, %c0_10] : memref<1152x128xbf16, #tpu.memory_space<vmem>>, vector<1152x128xbf16>
    %cst_11 = arith.constant dense<0.000000e+00> : vector<64x128xf32>
    %45 = tpu.matmul %43, %44, %cst_11 {dimension_numbers = #tpu.dot_dimension_numbers<[1], [0], [0], [1], [0, 0, 1, 1], [], []>} : vector<64x1152xbf16>, vector<1152x128xbf16>, vector<64x128xf32> -> vector<64x128xf32>
    %46 = vector.shape_cast %45 : vector<64x128xf32> to vector<4x2x8x128xf32>
    %47 = arith.truncf %46 : vector<4x2x8x128xf32> to vector<4x2x8x128xbf16>
    %c0_12 = arith.constant 0 : index
    %c0_13 = arith.constant 0 : index
    %c0_14 = arith.constant 0 : index
    %c0_15 = arith.constant 0 : index
    %48 = vector.load %arg5[%c0_12, %c0_13, %c0_14, %c0_15] : memref<4x2x8x128xbf16, #tpu.memory_space<vmem>>, vector<4x2x8x128xbf16>
    tpu.vector_store %arg5[%c0_12, %c0_13, %c0_14, %c0_15], %47 {strides = array<i32>} : memref<4x2x8x128xbf16, #tpu.memory_space<vmem>>, vector<4x2x8x128xbf16>,
    %cst_16 = arith.constant dense<0.000000e+00> : vector<128xf32>
    %49 = vector.multi_reduction <add>, %45, %cst_16 [0] : vector<64x128xf32> to vector<128xf32>
    %50 = vector.shape_cast %49 : vector<128xf32> to vector<1x128xf32>
    %51 = arith.mulf %45, %45 : vector<64x128xf32>
    %cst_17 = arith.constant dense<0.000000e+00> : vector<128xf32>
    %52 = vector.multi_reduction <add>, %51, %cst_17 [0] : vector<64x128xf32> to vector<128xf32>
    %53 = vector.shape_cast %52 : vector<128xf32> to vector<1x128xf32>
    %54 = tpu.concatenate %50, %53 in 0 : vector<1x128xf32>, vector<1x128xf32> -> vector<2x128xf32>
    %55 = vector.shape_cast %54 : vector<2x128xf32> to vector<1x2x128xf32>
    %c0_18 = arith.constant 0 : index
    %c0_19 = arith.constant 0 : index
    %c0_20 = arith.constant 0 : index
    %56 = vector.load %arg6[%c0_18, %c0_19, %c0_20] : memref<1x2x128xf32, #tpu.memory_space<vmem>>, vector<1x2x128xf32>
    tpu.vector_store %arg6[%c0_18, %c0_19, %c0_20], %55 {strides = array<i32>} : memref<1x2x128xf32, #tpu.memory_space<vmem>>, vector<1x2x128xf32>,
    return
  }
  func.func @transform_0(%arg0: i32) -> (i32, i32, i32, i32) {
    %c0_i32 = arith.constant 0 : i32
    %c0_i32_0 = arith.constant 0 : i32
    %c0_i32_1 = arith.constant 0 : i32
    %c0_i32_2 = arith.constant 0 : i32
    %c0_i32_3 = arith.constant 0 : i32
    return %c0_i32, %c0_i32_0, %c0_i32_1, %c0_i32_2 : i32, i32, i32, i32
  }
  func.func @transform_1(%arg0: i32) -> (i32, i32) {
    %c0_i32 = arith.constant 0 : i32
    %c0_i32_0 = arith.constant 0 : i32
    %c0_i32_1 = arith.constant 0 : i32
    return %c0_i32, %c0_i32_0 : i32, i32
  }
  func.func @transform_2(%arg0: i32) -> (i32, i32) {
    %c0_i32 = arith.constant 0 : i32
    %c0_i32_0 = arith.constant 0 : i32
    %c0_i32_1 = arith.constant 0 : i32
    return %c0_i32, %c0_i32_0 : i32, i32
  }
  func.func @transform_3(%arg0: i32) -> (i32, i32) {
    %c0_i32 = arith.constant 0 : i32
    %c0_i32_0 = arith.constant 0 : i32
    %c0_i32_1 = arith.constant 0 : i32
    return %c0_i32, %c0_i32_0 : i32, i32
  }
  func.func @transform_4(%arg0: i32) -> (i32, i32, i32, i32) {
    %c0_i32 = arith.constant 0 : i32
    %c0_i32_0 = arith.constant 0 : i32
    %c0_i32_1 = arith.constant 0 : i32
    %c0_i32_2 = arith.constant 0 : i32
    return %arg0, %c0_i32, %c0_i32_0, %c0_i32_1 : i32, i32, i32, i32
  }
  func.func @transform_5(%arg0: i32) -> (i32, i32, i32) {
    %c0_i32 = arith.constant 0 : i32
    %c0_i32_0 = arith.constant 0 : i32
    %c0_i32_1 = arith.constant 0 : i32
    return %arg0, %c0_i32, %c0_i32_0 : i32, i32, i32
  }
}

module attributes {stable_mosaic.version = 11 : i64} {
  func.func @_matmul_stats_kernel(%arg0: i32, %arg1: memref<128x128xbf16, #tpu.memory_space<vmem>>, %arg2: memref<128x128xbf16, #tpu.memory_space<vmem>>, %arg3: memref<128x128xbf16, #tpu.memory_space<vmem>>, %arg4: memref<1x2x128xf32, #tpu.memory_space<vmem>>) attributes {dimension_semantics = [#tpu.dimension_semantics<parallel>], iteration_bounds = array<i64: 1>, scalar_prefetch = 0 : i64, scratch_operands = 0 : i64, tpu.core_type = #tpu.core_type<tc>, window_params = [{transform_indices = @transform_0, window_bounds = array<i64: 128, 128>}, {pipeline_mode = #tpu.pipeline_mode<synchronous>, transform_indices = @transform_1, window_bounds = array<i64: 128, 128>}, {transform_indices = @transform_2, window_bounds = array<i64: 128, 128>}, {transform_indices = @transform_3, window_bounds = array<i64: 1, 2, 128>}]} {
    %c0 = arith.constant 0 : index
    %c0_0 = arith.constant 0 : index
    %0 = vector.load %arg1[%c0, %c0_0] : memref<128x128xbf16, #tpu.memory_space<vmem>>, vector<128x128xbf16>
    %c0_1 = arith.constant 0 : index
    %c0_2 = arith.constant 0 : index
    %1 = vector.load %arg2[%c0_1, %c0_2] : memref<128x128xbf16, #tpu.memory_space<vmem>>, vector<128x128xbf16>
    %cst = arith.constant dense<0.000000e+00> : vector<128x128xf32>
    %2 = tpu.matmul %0, %1, %cst {dimension_numbers = #tpu.dot_dimension_numbers<[1], [0], [0], [1], [0, 0, 1, 1], [], []>} : vector<128x128xbf16>, vector<128x128xbf16>, vector<128x128xf32> -> vector<128x128xf32>
    %3 = arith.truncf %2 : vector<128x128xf32> to vector<128x128xbf16>
    %c0_3 = arith.constant 0 : index
    %c0_4 = arith.constant 0 : index
    %4 = vector.load %arg3[%c0_3, %c0_4] : memref<128x128xbf16, #tpu.memory_space<vmem>>, vector<128x128xbf16>
    tpu.vector_store %arg3[%c0_3, %c0_4], %3 {strides = array<i32>} : memref<128x128xbf16, #tpu.memory_space<vmem>>, vector<128x128xbf16>,
    %cst_5 = arith.constant dense<0.000000e+00> : vector<128xf32>
    %5 = vector.multi_reduction <add>, %2, %cst_5 [0] : vector<128x128xf32> to vector<128xf32>
    %6 = vector.shape_cast %5 : vector<128xf32> to vector<1x128xf32>
    %7 = arith.mulf %2, %2 : vector<128x128xf32>
    %cst_6 = arith.constant dense<0.000000e+00> : vector<128xf32>
    %8 = vector.multi_reduction <add>, %7, %cst_6 [0] : vector<128x128xf32> to vector<128xf32>
    %9 = vector.shape_cast %8 : vector<128xf32> to vector<1x128xf32>
    %10 = tpu.concatenate %6, %9 in 0 : vector<1x128xf32>, vector<1x128xf32> -> vector<2x128xf32>
    %11 = vector.shape_cast %10 : vector<2x128xf32> to vector<1x2x128xf32>
    %c0_7 = arith.constant 0 : index
    %c0_8 = arith.constant 0 : index
    %c0_9 = arith.constant 0 : index
    %12 = vector.load %arg4[%c0_7, %c0_8, %c0_9] : memref<1x2x128xf32, #tpu.memory_space<vmem>>, vector<1x2x128xf32>
    tpu.vector_store %arg4[%c0_7, %c0_8, %c0_9], %11 {strides = array<i32>} : memref<1x2x128xf32, #tpu.memory_space<vmem>>, vector<1x2x128xf32>,
    return
  }
  func.func @transform_0(%arg0: i32) -> (i32, i32) {
    %c0_i32 = arith.constant 0 : i32
    %c0_i32_0 = arith.constant 0 : i32
    return %arg0, %c0_i32 : i32, i32
  }
  func.func @transform_1(%arg0: i32) -> (i32, i32) {
    %c0_i32 = arith.constant 0 : i32
    %c0_i32_0 = arith.constant 0 : i32
    %c0_i32_1 = arith.constant 0 : i32
    return %c0_i32, %c0_i32_0 : i32, i32
  }
  func.func @transform_2(%arg0: i32) -> (i32, i32) {
    %c0_i32 = arith.constant 0 : i32
    %c0_i32_0 = arith.constant 0 : i32
    return %arg0, %c0_i32 : i32, i32
  }
  func.func @transform_3(%arg0: i32) -> (i32, i32, i32) {
    %c0_i32 = arith.constant 0 : i32
    %c0_i32_0 = arith.constant 0 : i32
    %c0_i32_1 = arith.constant 0 : i32
    return %arg0, %c0_i32, %c0_i32_0 : i32, i32, i32
  }
}

module attributes {stable_mosaic.version = 11 : i64} {
  func.func @_finalize_kernel(%arg0: i32, %arg1: memref<128x128xbf16, #tpu.memory_space<vmem>>, %arg2: memref<128x128xbf16, #tpu.memory_space<vmem>>, %arg3: memref<1x128xf32, #tpu.memory_space<vmem>>, %arg4: memref<1x128xf32, #tpu.memory_space<vmem>>, %arg5: memref<1x128xf32, #tpu.memory_space<vmem>>, %arg6: memref<1x128xf32, #tpu.memory_space<vmem>>, %arg7: memref<128x128xbf16, #tpu.memory_space<vmem>>) attributes {dimension_semantics = [#tpu.dimension_semantics<parallel>], iteration_bounds = array<i64: 1>, scalar_prefetch = 0 : i64, scratch_operands = 0 : i64, tpu.core_type = #tpu.core_type<tc>, window_params = [{transform_indices = @transform_0, window_bounds = array<i64: 128, 128>}, {transform_indices = @transform_1, window_bounds = array<i64: 128, 128>}, {pipeline_mode = #tpu.pipeline_mode<synchronous>, transform_indices = @transform_2, window_bounds = array<i64: 1, 128>}, {pipeline_mode = #tpu.pipeline_mode<synchronous>, transform_indices = @transform_3, window_bounds = array<i64: 1, 128>}, {pipeline_mode = #tpu.pipeline_mode<synchronous>, transform_indices = @transform_4, window_bounds = array<i64: 1, 128>}, {pipeline_mode = #tpu.pipeline_mode<synchronous>, transform_indices = @transform_5, window_bounds = array<i64: 1, 128>}, {transform_indices = @transform_6, window_bounds = array<i64: 128, 128>}]} {
    %c0 = arith.constant 0 : index
    %c0_0 = arith.constant 0 : index
    %0 = vector.load %arg1[%c0, %c0_0] : memref<128x128xbf16, #tpu.memory_space<vmem>>, vector<128x128xbf16>
    %1 = arith.extf %0 : vector<128x128xbf16> to vector<128x128xf32>
    %c0_1 = arith.constant 0 : index
    %c0_2 = arith.constant 0 : index
    %2 = vector.load %arg3[%c0_1, %c0_2] : memref<1x128xf32, #tpu.memory_space<vmem>>, vector<1x128xf32>
    %3 = vector.broadcast %2 : vector<1x128xf32> to vector<128x128xf32>
    %4 = arith.mulf %1, %3 : vector<128x128xf32>
    %c0_3 = arith.constant 0 : index
    %c0_4 = arith.constant 0 : index
    %5 = vector.load %arg4[%c0_3, %c0_4] : memref<1x128xf32, #tpu.memory_space<vmem>>, vector<1x128xf32>
    %6 = vector.broadcast %5 : vector<1x128xf32> to vector<128x128xf32>
    %7 = arith.addf %4, %6 : vector<128x128xf32>
    %c0_5 = arith.constant 0 : index
    %c0_6 = arith.constant 0 : index
    %8 = vector.load %arg2[%c0_5, %c0_6] : memref<128x128xbf16, #tpu.memory_space<vmem>>, vector<128x128xbf16>
    %9 = arith.extf %8 : vector<128x128xbf16> to vector<128x128xf32>
    %c0_7 = arith.constant 0 : index
    %c0_8 = arith.constant 0 : index
    %10 = vector.load %arg5[%c0_7, %c0_8] : memref<1x128xf32, #tpu.memory_space<vmem>>, vector<1x128xf32>
    %11 = vector.broadcast %10 : vector<1x128xf32> to vector<128x128xf32>
    %12 = arith.mulf %9, %11 : vector<128x128xf32>
    %c0_9 = arith.constant 0 : index
    %c0_10 = arith.constant 0 : index
    %13 = vector.load %arg6[%c0_9, %c0_10] : memref<1x128xf32, #tpu.memory_space<vmem>>, vector<1x128xf32>
    %14 = vector.broadcast %13 : vector<1x128xf32> to vector<128x128xf32>
    %15 = arith.addf %12, %14 : vector<128x128xf32>
    %16 = arith.addf %7, %15 : vector<128x128xf32>
    %cst = arith.constant 0.000000e+00 : f32
    %17 = vector.broadcast %cst : f32 to vector<128x128xf32>
    %18 = arith.maximumf %16, %17 : vector<128x128xf32>
    %19 = arith.truncf %18 : vector<128x128xf32> to vector<128x128xbf16>
    %c0_11 = arith.constant 0 : index
    %c0_12 = arith.constant 0 : index
    %20 = vector.load %arg7[%c0_11, %c0_12] : memref<128x128xbf16, #tpu.memory_space<vmem>>, vector<128x128xbf16>
    tpu.vector_store %arg7[%c0_11, %c0_12], %19 {strides = array<i32>} : memref<128x128xbf16, #tpu.memory_space<vmem>>, vector<128x128xbf16>,
    return
  }
  func.func @transform_0(%arg0: i32) -> (i32, i32) {
    %c0_i32 = arith.constant 0 : i32
    %c0_i32_0 = arith.constant 0 : i32
    return %arg0, %c0_i32 : i32, i32
  }
  func.func @transform_1(%arg0: i32) -> (i32, i32) {
    %c0_i32 = arith.constant 0 : i32
    %c0_i32_0 = arith.constant 0 : i32
    return %arg0, %c0_i32 : i32, i32
  }
  func.func @transform_2(%arg0: i32) -> (i32, i32) {
    %c0_i32 = arith.constant 0 : i32
    %c0_i32_0 = arith.constant 0 : i32
    %c0_i32_1 = arith.constant 0 : i32
    return %c0_i32, %c0_i32_0 : i32, i32
  }
  func.func @transform_3(%arg0: i32) -> (i32, i32) {
    %c0_i32 = arith.constant 0 : i32
    %c0_i32_0 = arith.constant 0 : i32
    %c0_i32_1 = arith.constant 0 : i32
    return %c0_i32, %c0_i32_0 : i32, i32
  }
  func.func @transform_4(%arg0: i32) -> (i32, i32) {
    %c0_i32 = arith.constant 0 : i32
    %c0_i32_0 = arith.constant 0 : i32
    %c0_i32_1 = arith.constant 0 : i32
    return %c0_i32, %c0_i32_0 : i32, i32
  }
  func.func @transform_5(%arg0: i32) -> (i32, i32) {
    %c0_i32 = arith.constant 0 : i32
    %c0_i32_0 = arith.constant 0 : i32
    %c0_i32_1 = arith.constant 0 : i32
    return %c0_i32, %c0_i32_0 : i32, i32
  }
  func.func @transform_6(%arg0: i32) -> (i32, i32) {
    %c0_i32 = arith.constant 0 : i32
    %c0_i32_0 = arith.constant 0 : i32
    return %arg0, %c0_i32 : i32, i32
  }
}

</mosaic_0001>

<llo_original>
// kernel: basic_block_forward.4
$region0: #{basic_block_forward.4}
  #allocation0 [shape = 'u32[]', space=smem, size = 0x4, offset = 0x4, fixed_abs, tag = 'smem constant byte address 0x4 - core index']
  #allocation1 [shape = 'u32[144,128]{1,0:T(1,128)}', space=vmem, size = 0x12000, scoped, tag = 'internal scratch']
  %s0 = inlined_call_operand.vmem [shape: bf16[9,2,9,256], index: 0, kind: input, shape index: {}]
  %s1 = inlined_call_operand.vmem [shape: bf16[9,2,9,256], index: 1, kind: input, shape index: {}]
  %s2 = inlined_call_operand.vmem [shape: bf16[1152,128], index: 2, kind: input, shape index: {}]
  %s3 = inlined_call_operand.vmem [shape: bf16[8,2,8,128], index: 3, kind: output, shape index: {0}]
  %s4 = inlined_call_operand.vmem [shape: f32[2,2,128], index: 4, kind: output, shape index: {1}]
  %5 = xla_tuple %s3, %s4
  %s6 = sld [smem:[#allocation0]]
  $region53: #{basic_block_forward.4} parent=0
    _
  %s8 = ssub.s32 1, %s6
  %s9 = scalar_select 0, %s8, %s6
  loop: start=0, step=1, limit=4
  $region2: #{basic_block_forward.4} parent=0 // loop_pre_header
    _
  $region3: #{basic_block_forward.4} parent=0 // loop_header
    %s11 = sphi 0, %s15
    %p12 = scmp.ge.s32.totalorder %s11, 4
    %s19 = sphi 0, %s19
    %s21 = sphi 0, %s19
    %s22 = sphi 0, %s21
    %s36 = sphi 0, %s22
    %s40 = sphi 0, %s40
    %s42 = sphi 0, %s40
    %s43 = sphi 0, %s42
    %s57 = sphi 0, %s43
    %s61 = sphi 0, %s61
    %s63 = sphi 0, %s61
    %s64 = sphi 0, %s63
    %s78 = sphi 0, %s64
    %s84 = sphi 0, %s86
    %s87 = sphi 0, %s84
    %s88 = sphi 0, %s87
    %s104 = sphi 0, %s88
    %s110 = sphi 0, %s112
    %s113 = sphi 0, %s110
    %s114 = sphi 0, %s113
    %s130 = sphi 0, %s114
  $region4: #{basic_block_forward.4} parent=0 // loop_header_branch
    %14 = sbr.rel (%p12) target = $region8
  $region5: #{basic_block_forward.4} parent=0 // loop_body
    %s16 = ssub.s32 %s11, 1
    %s17 = ssub.s32 %s11, 2
    %s18 = sadd.s32 %s11, 1
    %s20 = sadd.s32 %s19, 1
    %p23 = scmp.eq.s32.totalorder %s11, 1
    %p24 = scmp.ne.s32.totalorder %s19, %s21
    %p25 = scmp.eq.s32.totalorder %s11, 0
    %p26 = por %p24, %p25
    %p27 = scmp.ne.s32.totalorder %s19, %s21
    %p28 = scmp.eq.s32.totalorder %s16, 1
    %p29 = por %p27, %p28
    %p30 = scmp.ne.s32.totalorder %s21, %s22
    %p31 = scmp.eq.s32.totalorder %s16, 0
    %p32 = por %p30, %p31
    %p33 = scmp.ne.s32.totalorder %s21, %s22
    %p34 = scmp.eq.s32.totalorder %s17, 1
    %p35 = por %p33, %p34
    %p37 = scmp.ne.s32.totalorder %s22, %s36
    %p38 = scmp.eq.s32.totalorder %s17, 0
    %p39 = por %p37, %p38
    %s41 = sadd.s32 %s40, 1
    %p44 = scmp.eq.s32.totalorder %s11, 1
    %p45 = scmp.ne.s32.totalorder %s40, %s42
    %p46 = scmp.eq.s32.totalorder %s11, 0
    %p47 = por %p45, %p46
    %p48 = scmp.ne.s32.totalorder %s40, %s42
    %p49 = scmp.eq.s32.totalorder %s16, 1
    %p50 = por %p48, %p49
    %p51 = scmp.ne.s32.totalorder %s42, %s43
    %p52 = scmp.eq.s32.totalorder %s16, 0
    %p53 = por %p51, %p52
    %p54 = scmp.ne.s32.totalorder %s42, %s43
    %p55 = scmp.eq.s32.totalorder %s17, 1
    %p56 = por %p54, %p55
    %p58 = scmp.ne.s32.totalorder %s43, %s57
    %p59 = scmp.eq.s32.totalorder %s17, 0
    %p60 = por %p58, %p59
    %s62 = sadd.s32 %s61, 1
    %p65 = scmp.eq.s32.totalorder %s11, 1
    %p66 = scmp.ne.s32.totalorder %s61, %s63
    %p67 = scmp.eq.s32.totalorder %s11, 0
    %p68 = por %p66, %p67
    %p69 = scmp.ne.s32.totalorder %s61, %s63
    %p70 = scmp.eq.s32.totalorder %s16, 1
    %p71 = por %p69, %p70
    %p72 = scmp.ne.s32.totalorder %s63, %s64
    %p73 = scmp.eq.s32.totalorder %s16, 0
    %p74 = por %p72, %p73
    %p75 = scmp.ne.s32.totalorder %s63, %s64
    %p76 = scmp.eq.s32.totalorder %s17, 1
    %p77 = por %p75, %p76
    %p79 = scmp.ne.s32.totalorder %s64, %s78
    %p80 = scmp.eq.s32.totalorder %s17, 0
    %p81 = por %p79, %p80
    %s82 = ssub.s32 %s11, %s18
    %p83 = scmp.eq.s32.totalorder %s82, 0
    %s85 = sadd.s32 %s84, 1
    %s86 = scalar_select %p83, %s84, %s85
    %p89 = pneg %p83
    %p90 = scmp.eq.s32.totalorder %s11, 1
    %p91 = por %p89, %p90
    %p92 = scmp.ne.s32.totalorder %s84, %s87
    %p93 = scmp.eq.s32.totalorder %s11, 0
    %p94 = por %p92, %p93
    %p95 = scmp.ne.s32.totalorder %s84, %s87
    %p96 = scmp.eq.s32.totalorder %s16, 1
    %p97 = por %p95, %p96
    %p98 = scmp.ne.s32.totalorder %s87, %s88
    %p99 = scmp.eq.s32.totalorder %s16, 0
    %p100 = por %p98, %p99
    %p101 = scmp.ne.s32.totalorder %s87, %s88
    %p102 = scmp.eq.s32.totalorder %s17, 1
    %p103 = por %p101, %p102
    %p105 = scmp.ne.s32.totalorder %s88, %s104
    %p106 = scmp.eq.s32.totalorder %s17, 0
    %p107 = por %p105, %p106
    %s108 = ssub.s32 %s11, %s18
    %p109 = scmp.eq.s32.totalorder %s108, 0
    %s111 = sadd.s32 %s110, 1
    %s112 = scalar_select %p109, %s110, %s111
    %p115 = pneg %p109
    %p116 = scmp.eq.s32.totalorder %s11, 1
    %p117 = por %p115, %p116
    %p118 = scmp.ne.s32.totalorder %s110, %s113
    %p119 = scmp.eq.s32.totalorder %s11, 0
    %p120 = por %p118, %p119
    %p121 = scmp.ne.s32.totalorder %s110, %s113
    %p122 = scmp.eq.s32.totalorder %s16, 1
    %p123 = por %p121, %p122
    %p124 = scmp.ne.s32.totalorder %s113, %s114
    %p125 = scmp.eq.s32.totalorder %s16, 0
    %p126 = por %p124, %p125
    %p127 = scmp.ne.s32.totalorder %s113, %s114
    %p128 = scmp.eq.s32.totalorder %s17, 1
    %p129 = por %p127, %p128
    %p131 = scmp.ne.s32.totalorder %s114, %s130
    %p132 = scmp.eq.s32.totalorder %s17, 0
    %p133 = por %p131, %p132
    %p134 = scmp.le.s32.totalorder 1, %s11
    %p135 = scmp.lt.s32.totalorder %s11, 3
    %p136 = pnand %p134, %p135
    %p137 = pneg %p136
    // Predicated region
    $region9: #{basic_block_forward.4} parent=5 // pred_check
      _
    $region10: #{basic_block_forward.4} parent=5 // pred_check_branch
      %139 = sbr.rel (%p136) target = $region12
    $region11: #{basic_block_forward.4} parent=5 // pred_region
      %s140 = ssub.s32 %s11, 1
      // Predicated region
      $region13: #{basic_block_forward.4} parent=11 // pred_check
        %p141 = pneg %p32
      $region14: #{basic_block_forward.4} parent=11 // pred_check_branch
        %143 = sbr.rel (%p141) target = $region16
      $region15: #{basic_block_forward.4} parent=11 // pred_region
        _
      $region16: #{basic_block_forward.4} parent=11 // pred_fallthru
        _
      // Predicated region
      $region17: #{basic_block_forward.4} parent=11 // pred_check
        %p144 = pneg %p53
      $region18: #{basic_block_forward.4} parent=11 // pred_check_branch
        %146 = sbr.rel (%p144) target = $region20
      $region19: #{basic_block_forward.4} parent=11 // pred_region
        _
      $region20: #{basic_block_forward.4} parent=11 // pred_fallthru
        _
      // Predicated region
      $region21: #{basic_block_forward.4} parent=11 // pred_check
        %p147 = pneg %p74
      $region22: #{basic_block_forward.4} parent=11 // pred_check_branch
        %149 = sbr.rel (%p147) target = $region24
      $region23: #{basic_block_forward.4} parent=11 // pred_region
        _
      $region24: #{basic_block_forward.4} parent=11 // pred_fallthru
        _
    $region12: #{basic_block_forward.4} parent=5 // pred_fallthru
      _
    %p150 = scmp.lt.s32.totalorder %s11, 2
    // Predicated region
    $region25: #{basic_block_forward.4} parent=5 // pred_check
      %p151 = pneg %p150
    $region26: #{basic_block_forward.4} parent=5 // pred_check_branch
      %153 = sbr.rel (%p151) target = $region28
    $region27: #{basic_block_forward.4} parent=5 // pred_region
      _
    $region28: #{basic_block_forward.4} parent=5 // pred_fallthru
      _
    %p154 = scmp.le.s32.totalorder 1, %s11
    %p155 = scmp.lt.s32.totalorder %s11, 3
    %p156 = pnand %p154, %p155
    %p157 = pneg %p156
    // Predicated region
    $region29: #{basic_block_forward.4} parent=5 // pred_check
      _
    $region30: #{basic_block_forward.4} parent=5 // pred_check_branch
      %159 = sbr.rel (%p156) target = $region32
    $region31: #{basic_block_forward.4} parent=5 // pred_region
      %s160 = ssub.s32 %s11, 1
      %p161 = pneg %p32
      %p162 = pneg %p29
      %p163 = pneg %p53
      %p164 = pneg %p50
      %p165 = pneg %p74
      %p166 = pneg %p71
      %p167 = pneg %p100
      %p168 = pneg %p97
      %s169 = smul.u32 4, %s16
      %p170 = scmp.lt.s32.totalorder %s169, 7
      %s171 = scalar_select %p170, %s169, 7
      %s172 = smul.addr %s171, 2
      %s173 = smul.addr %s172, 4
      %s174 = scalar_lea.vmem %s3, %s173
      %p175 = pneg %p126
      %p176 = pneg %p123
      %p177 = scmp.lt.s32.totalorder %s16, 1
      %s178 = scalar_select %p177, %s16, 1
      %s179 = smul.addr %s178, 2
      %s180 = scalar_lea.vmem %s4, %s179
      %s181 = smul.u32 4, %s16
      %p182 = scmp.lt.s32.totalorder %s181, 7
      %s183 = scalar_select %p182, %s181, 7
      %s184 = smul.addr %s183, 2
      %s185 = smul.addr %s184, 4
      %s186 = scalar_lea.vmem %s3, %s185
      %s187 = smul.u32 4, %s16
      %p188 = scmp.lt.s32.totalorder %s16, 1
      %s189 = scalar_select %p188, %s16, 1
      %s190 = smul.addr %s189, 2
      %s191 = scalar_lea.vmem %s4, %s190
      %s193 = smul.u32 %s16, 4
      %s194 = smul.u32 %s193, 8
      %s195 = smul.addr %s194, 4
      %s196 = scalar_lea.vmem %s0, %s195
      %v197 = vld [vmem:[%s196] sm:$0xff]
      %v198 = vld [vmem:[%s196 + $0x8] sm:$0x11]
      %v199 = vld [vmem:[%s196 + $0x10] sm:$0xff]
      %v200 = vld [vmem:[%s196 + $0x18] sm:$0x11]
      %v201 = vld [vmem:[%s196 + $0x20] sm:$0xff]
      %v202 = vld [vmem:[%s196 + $0x28] sm:$0x11]
      %v203 = vld [vmem:[%s196 + $0x30] sm:$0xff]
      %v204 = vld [vmem:[%s196 + $0x38] sm:$0x11]
      %v205 = vld [vmem:[%s196 + $0x40] sm:$0xff]
      %v206 = vld [vmem:[%s196 + $0x48] sm:$0x11]
      %v207 = vld [vmem:[%s196 + $0x50] sm:$0xff]
      %v208 = vld [vmem:[%s196 + $0x58] sm:$0x11]
      %v209 = vld [vmem:[%s196 + $0x60] sm:$0xff]
      %v210 = vld [vmem:[%s196 + $0x68] sm:$0x11]
      %v211 = vld [vmem:[%s196 + $0x70] sm:$0xff]
      %v212 = vld [vmem:[%s196 + $0x78] sm:$0x11]
      %v213 = vld [vmem:[%s196 + $0x80] sm:$0xff]
      %v214 = vld [vmem:[%s196 + $0x88] sm:$0x11]
      %v215 = vld [vmem:[%s196 + $0x90] sm:$0xff]
      %v216 = vld [vmem:[%s196 + $0x98] sm:$0x11]
      %s217 = smul.addr %s194, 4
      %s218 = scalar_lea.vmem %s1, %s217
      %v219 = vld [vmem:[%s218] sm:$0xff]
      %v220 = vld [vmem:[%s218 + $0x8] sm:$0x11]
      %v221 = vld [vmem:[%s218 + $0x10] sm:$0xff]
      %v222 = vld [vmem:[%s218 + $0x18] sm:$0x11]
      %v223 = vld [vmem:[%s218 + $0x20] sm:$0xff]
      %v224 = vld [vmem:[%s218 + $0x28] sm:$0x11]
      %v225 = vld [vmem:[%s218 + $0x30] sm:$0xff]
      %v226 = vld [vmem:[%s218 + $0x38] sm:$0x11]
      %v227 = vld [vmem:[%s218 + $0x40] sm:$0xff]
      %v228 = vld [vmem:[%s218 + $0x48] sm:$0x11]
      %v229 = vld [vmem:[%s218 + $0x50] sm:$0xff]
      %v230 = vld [vmem:[%s218 + $0x58] sm:$0x11]
      %v231 = vld [vmem:[%s218 + $0x60] sm:$0xff]
      %v232 = vld [vmem:[%s218 + $0x68] sm:$0x11]
      %v233 = vld [vmem:[%s218 + $0x70] sm:$0xff]
      %v234 = vld [vmem:[%s218 + $0x78] sm:$0x11]
      %v243 = vunpack.c.h.b16 %v197
      %v244 = vunpack.c.h.b16 %v199
      %v245 = vunpack.c.h.b16 %v201
      %v246 = vunpack.c.h.b16 %v203
      %v247 = vunpack.c.h.b16 %v205
      %v248 = vunpack.c.h.b16 %v207
      %v249 = vunpack.c.h.b16 %v209
      %v250 = vunpack.c.h.b16 %v211
      %v259 = vunpack.c.l.b16 %v197
      %v260 = vunpack.c.l.b16 %v198
      %v261 = vunpack.c.l.b16 %v199
      %v262 = vunpack.c.l.b16 %v200
      %v263 = vunpack.c.l.b16 %v201
      %v264 = vunpack.c.l.b16 %v202
      %v265 = vunpack.c.l.b16 %v203
      %v266 = vunpack.c.l.b16 %v204
      %v267 = vunpack.c.l.b16 %v205
      %v268 = vunpack.c.l.b16 %v206
      %v269 = vunpack.c.l.b16 %v207
      %v270 = vunpack.c.l.b16 %v208
      %v271 = vunpack.c.l.b16 %v209
      %v272 = vunpack.c.l.b16 %v210
      %v273 = vunpack.c.l.b16 %v211
      %v274 = vunpack.c.l.b16 %v212
      %v275 = vpack.c.b16 %v260, %v259
      %v276 = vpack.c.b16 %v262, %v261
      %v277 = vpack.c.b16 %v264, %v263
      %v278 = vpack.c.b16 %v266, %v265
      %v279 = vpack.c.b16 %v268, %v267
      %v280 = vpack.c.b16 %v270, %v269
      %v281 = vpack.c.b16 %v272, %v271
      %v282 = vpack.c.b16 %v274, %v273
      %v284 = vshrl.u32 %v275, 16
      %v286 = vshll.u32 %v275, 16
      %v288 = vrot.slane %v286, 1
      %v289 = vor.u32 %v284, %v288
      %v291 = vshrl.u32 %v276, 16
      %v293 = vshll.u32 %v276, 16
      %v295 = vrot.slane %v293, 1
      %v296 = vor.u32 %v291, %v295
      %v298 = vshrl.u32 %v277, 16
      %v300 = vshll.u32 %v277, 16
      %v302 = vrot.slane %v300, 1
      %v303 = vor.u32 %v298, %v302
      %v305 = vshrl.u32 %v278, 16
      %v307 = vshll.u32 %v278, 16
      %v309 = vrot.slane %v307, 1
      %v310 = vor.u32 %v305, %v309
      %v312 = vshrl.u32 %v279, 16
      %v314 = vshll.u32 %v279, 16
      %v316 = vrot.slane %v314, 1
      %v317 = vor.u32 %v312, %v316
      %v319 = vshrl.u32 %v280, 16
      %v321 = vshll.u32 %v280, 16
      %v323 = vrot.slane %v321, 1
      %v324 = vor.u32 %v319, %v323
      %v326 = vshrl.u32 %v281, 16
      %v328 = vshll.u32 %v281, 16
      %v330 = vrot.slane %v328, 1
      %v331 = vor.u32 %v326, %v330
      %v333 = vshrl.u32 %v282, 16
      %v335 = vshll.u32 %v282, 16
      %v337 = vrot.slane %v335, 1
      %v338 = vor.u32 %v333, %v337
      %v347 = vunpack.c.h.b16 %v219
      %v348 = vunpack.c.h.b16 %v221
      %v349 = vunpack.c.h.b16 %v223
      %v350 = vunpack.c.h.b16 %v225
      %v351 = vunpack.c.h.b16 %v227
      %v352 = vunpack.c.h.b16 %v229
      %v353 = vunpack.c.h.b16 %v231
      %v354 = vunpack.c.h.b16 %v233
      %v363 = vunpack.c.l.b16 %v219
      %v364 = vunpack.c.l.b16 %v220
      %v365 = vunpack.c.l.b16 %v221
      %v366 = vunpack.c.l.b16 %v222
      %v367 = vunpack.c.l.b16 %v223
      %v368 = vunpack.c.l.b16 %v224
      %v369 = vunpack.c.l.b16 %v225
      %v370 = vunpack.c.l.b16 %v226
      %v371 = vunpack.c.l.b16 %v227
      %v372 = vunpack.c.l.b16 %v228
      %v373 = vunpack.c.l.b16 %v229
      %v374 = vunpack.c.l.b16 %v230
      %v375 = vunpack.c.l.b16 %v231
      %v376 = vunpack.c.l.b16 %v232
      %v377 = vunpack.c.l.b16 %v233
      %v378 = vunpack.c.l.b16 %v234
      %v379 = vpack.c.b16 %v364, %v363
      %v380 = vpack.c.b16 %v366, %v365
      %v381 = vpack.c.b16 %v368, %v367
      %v382 = vpack.c.b16 %v370, %v369
      %v383 = vpack.c.b16 %v372, %v371
      %v384 = vpack.c.b16 %v374, %v373
      %v385 = vpack.c.b16 %v376, %v375
      %v386 = vpack.c.b16 %v378, %v377
      %v388 = vshrl.u32 %v379, 16
      %v390 = vshll.u32 %v379, 16
      %v392 = vrot.slane %v390, 1
      %v393 = vor.u32 %v388, %v392
      %v395 = vshrl.u32 %v380, 16
      %v397 = vshll.u32 %v380, 16
      %v399 = vrot.slane %v397, 1
      %v400 = vor.u32 %v395, %v399
      %v402 = vshrl.u32 %v381, 16
      %v404 = vshll.u32 %v381, 16
      %v406 = vrot.slane %v404, 1
      %v407 = vor.u32 %v402, %v406
      %v409 = vshrl.u32 %v382, 16
      %v411 = vshll.u32 %v382, 16
      %v413 = vrot.slane %v411, 1
      %v414 = vor.u32 %v409, %v413
      %v416 = vshrl.u32 %v383, 16
      %v418 = vshll.u32 %v383, 16
      %v420 = vrot.slane %v418, 1
      %v421 = vor.u32 %v416, %v420
      %v423 = vshrl.u32 %v384, 16
      %v425 = vshll.u32 %v384, 16
      %v427 = vrot.slane %v425, 1
      %v428 = vor.u32 %v423, %v427
      %v430 = vshrl.u32 %v385, 16
      %v432 = vshll.u32 %v385, 16
      %v434 = vrot.slane %v432, 1
      %v435 = vor.u32 %v430, %v434
      %v437 = vshrl.u32 %v386, 16
      %v439 = vshll.u32 %v386, 16
      %v441 = vrot.slane %v439, 1
      %v442 = vor.u32 %v437, %v441
      %v445 = vunpack.c.h.b16 %v213
      %v446 = vunpack.c.h.b16 %v215
      %v449 = vunpack.c.l.b16 %v213
      %v450 = vunpack.c.l.b16 %v214
      %v451 = vunpack.c.l.b16 %v215
      %v452 = vunpack.c.l.b16 %v216
      %v453 = vpack.c.b16 %v450, %v449
      %v454 = vpack.c.b16 %v452, %v451
      %v456 = vshrl.u32 %v453, 16
      %v458 = vshll.u32 %v453, 16
      %v460 = vrot.slane %v458, 1
      %v461 = vor.u32 %v456, %v460
      %v463 = vshrl.u32 %v454, 16
      %v465 = vshll.u32 %v454, 16
      %v467 = vrot.slane %v465, 1
      %v468 = vor.u32 %v463, %v467
      %v469 = vunpack.c.l.b16 %v289
      %v470 = vunpack.c.l.b16 %v393
      %v471 = vunpack.c.l.b16 %v303
      %v472 = vunpack.c.l.b16 %v296
      %v473 = vunpack.c.l.b16 %v400
      %v474 = vunpack.c.l.b16 %v310
      %v475 = vunpack.c.l.b16 %v407
      %v476 = vunpack.c.l.b16 %v317
      %v477 = vunpack.c.l.b16 %v414
      %v478 = vunpack.c.l.b16 %v324
      %v479 = vunpack.c.l.b16 %v421
      %v480 = vunpack.c.l.b16 %v331
      %v481 = vunpack.c.l.b16 %v428
      %v482 = vunpack.c.l.b16 %v338
      %v483 = vunpack.c.l.b16 %v435
      %v484 = vunpack.c.l.b16 %v461
      %v485 = vunpack.c.l.b16 %v442
      %v486 = vunpack.c.l.b16 %v468
      %v487 = vld [vmem:[%s2] sm:$0xf]
      %v488 = vld [vmem:[%s2 + $0x4] sm:$0xf]
      %v489 = vld [vmem:[%s2 + $0x8] sm:$0xf]
      %v490 = vld [vmem:[%s2 + $0xc] sm:$0xf]
      %v491 = vld [vmem:[%s2 + $0x10] sm:$0xf]
      %v492 = vld [vmem:[%s2 + $0x14] sm:$0xf]
      %v493 = vld [vmem:[%s2 + $0x18] sm:$0xf]
      %v494 = vld [vmem:[%s2 + $0x1c] sm:$0xf]
      %v495 = vld [vmem:[%s2 + $0x20] sm:$0xf]
      %v496 = vld [vmem:[%s2 + $0x24] sm:$0xf]
      %v497 = vld [vmem:[%s2 + $0x28] sm:$0xf]
      %v498 = vld [vmem:[%s2 + $0x2c] sm:$0xf]
      %v499 = vld [vmem:[%s2 + $0x30] sm:$0xf]
      %v500 = vld [vmem:[%s2 + $0x34] sm:$0xf]
      %v501 = vld [vmem:[%s2 + $0x38] sm:$0xf]
      %v502 = vld [vmem:[%s2 + $0x3c] sm:$0xf]
      %v503 = vld [vmem:[%s2 + $0x40] sm:$0xf]
      %v504 = vld [vmem:[%s2 + $0x44] sm:$0xf]
      %v505 = vld [vmem:[%s2 + $0x48] sm:$0xf]
      %v506 = vld [vmem:[%s2 + $0x4c] sm:$0xf]
      %v507 = vld [vmem:[%s2 + $0x50] sm:$0xf]
      %v508 = vld [vmem:[%s2 + $0x54] sm:$0xf]
      %v509 = vld [vmem:[%s2 + $0x58] sm:$0xf]
      %v510 = vld [vmem:[%s2 + $0x5c] sm:$0xf]
      %v511 = vld [vmem:[%s2 + $0x60] sm:$0xf]
      %v512 = vld [vmem:[%s2 + $0x64] sm:$0xf]
      %v513 = vld [vmem:[%s2 + $0x68] sm:$0xf]
      %v514 = vld [vmem:[%s2 + $0x6c] sm:$0xf]
      %v515 = vld [vmem:[%s2 + $0x70] sm:$0xf]
      %v516 = vld [vmem:[%s2 + $0x74] sm:$0xf]
      %v517 = vld [vmem:[%s2 + $0x78] sm:$0xf]
      %v518 = vld [vmem:[%s2 + $0x7c] sm:$0xf]
      %v519 = vld [vmem:[%s2 + $0x80] sm:$0xf]
      %v520 = vld [vmem:[%s2 + $0x84] sm:$0xf]
      %v521 = vld [vmem:[%s2 + $0x88] sm:$0xf]
      %v522 = vld [vmem:[%s2 + $0x8c] sm:$0xf]
      %v523 = vld [vmem:[%s2 + $0x90] sm:$0xf]
      %v524 = vld [vmem:[%s2 + $0x94] sm:$0xf]
      %v525 = vld [vmem:[%s2 + $0x98] sm:$0xf]
      %v526 = vld [vmem:[%s2 + $0x9c] sm:$0xf]
      %v527 = vld [vmem:[%s2 + $0xa0] sm:$0xf]
      %v528 = vld [vmem:[%s2 + $0xa4] sm:$0xf]
      %v529 = vld [vmem:[%s2 + $0xa8] sm:$0xf]
      %v530 = vld [vmem:[%s2 + $0xac] sm:$0xf]
      %v531 = vld [vmem:[%s2 + $0xb0] sm:$0xf]
      %v532 = vld [vmem:[%s2 + $0xb4] sm:$0xf]
      %v533 = vld [vmem:[%s2 + $0xb8] sm:$0xf]
      %v534 = vld [vmem:[%s2 + $0xbc] sm:$0xf]
      %v535 = vld [vmem:[%s2 + $0xc0] sm:$0xf]
      %v536 = vld [vmem:[%s2 + $0xc4] sm:$0xf]
      %v537 = vld [vmem:[%s2 + $0xc8] sm:$0xf]
      %v538 = vld [vmem:[%s2 + $0xcc] sm:$0xf]
      %v539 = vld [vmem:[%s2 + $0xd0] sm:$0xf]
      %v540 = vld [vmem:[%s2 + $0xd4] sm:$0xf]
      %v541 = vld [vmem:[%s2 + $0xd8] sm:$0xf]
      %v542 = vld [vmem:[%s2 + $0xdc] sm:$0xf]
      %v543 = vld [vmem:[%s2 + $0xe0] sm:$0xf]
      %v544 = vld [vmem:[%s2 + $0xe4] sm:$0xf]
      %v545 = vld [vmem:[%s2 + $0xe8] sm:$0xf]
      %v546 = vld [vmem:[%s2 + $0xec] sm:$0xf]
      %v547 = vld [vmem:[%s2 + $0xf0] sm:$0xf]
      %v548 = vld [vmem:[%s2 + $0xf4] sm:$0xf]
      %v549 = vld [vmem:[%s2 + $0xf8] sm:$0xf]
      %v550 = vld [vmem:[%s2 + $0xfc] sm:$0xf]
      %v551 = vld [vmem:[%s2 + $0x100] sm:$0xf]
      %v552 = vld [vmem:[%s2 + $0x104] sm:$0xf]
      %v553 = vld [vmem:[%s2 + $0x108] sm:$0xf]
      %v554 = vld [vmem:[%s2 + $0x10c] sm:$0xf]
      %v555 = vld [vmem:[%s2 + $0x110] sm:$0xf]
      %v556 = vld [vmem:[%s2 + $0x114] sm:$0xf]
      %v557 = vld [vmem:[%s2 + $0x118] sm:$0xf]
      %v558 = vld [vmem:[%s2 + $0x11c] sm:$0xf]
      %v559 = vld [vmem:[%s2 + $0x120] sm:$0xf]
      %v560 = vld [vmem:[%s2 + $0x124] sm:$0xf]
      %v561 = vld [vmem:[%s2 + $0x128] sm:$0xf]
      %v562 = vld [vmem:[%s2 + $0x12c] sm:$0xf]
      %v563 = vld [vmem:[%s2 + $0x130] sm:$0xf]
      %v564 = vld [vmem:[%s2 + $0x134] sm:$0xf]
      %v565 = vld [vmem:[%s2 + $0x138] sm:$0xf]
      %v566 = vld [vmem:[%s2 + $0x13c] sm:$0xf]
      %v567 = vld [vmem:[%s2 + $0x140] sm:$0xf]
      %v568 = vld [vmem:[%s2 + $0x144] sm:$0xf]
      %v569 = vld [vmem:[%s2 + $0x148] sm:$0xf]
      %v570 = vld [vmem:[%s2 + $0x14c] sm:$0xf]
      %v571 = vld [vmem:[%s2 + $0x150] sm:$0xf]
      %v572 = vld [vmem:[%s2 + $0x154] sm:$0xf]
      %v573 = vld [vmem:[%s2 + $0x158] sm:$0xf]
      %v574 = vld [vmem:[%s2 + $0x15c] sm:$0xf]
      %v575 = vld [vmem:[%s2 + $0x160] sm:$0xf]
      %v576 = vld [vmem:[%s2 + $0x164] sm:$0xf]
      %v577 = vld [vmem:[%s2 + $0x168] sm:$0xf]
      %v578 = vld [vmem:[%s2 + $0x16c] sm:$0xf]
      %v579 = vld [vmem:[%s2 + $0x170] sm:$0xf]
      %v580 = vld [vmem:[%s2 + $0x174] sm:$0xf]
      %v581 = vld [vmem:[%s2 + $0x178] sm:$0xf]
      %v582 = vld [vmem:[%s2 + $0x17c] sm:$0xf]
      %v583 = vld [vmem:[%s2 + $0x180] sm:$0xf]
      %v584 = vld [vmem:[%s2 + $0x184] sm:$0xf]
      %v585 = vld [vmem:[%s2 + $0x188] sm:$0xf]
      %v586 = vld [vmem:[%s2 + $0x18c] sm:$0xf]
      %v587 = vld [vmem:[%s2 + $0x190] sm:$0xf]
      %v588 = vld [vmem:[%s2 + $0x194] sm:$0xf]
      %v589 = vld [vmem:[%s2 + $0x198] sm:$0xf]
      %v590 = vld [vmem:[%s2 + $0x19c] sm:$0xf]
      %v591 = vld [vmem:[%s2 + $0x1a0] sm:$0xf]
      %v592 = vld [vmem:[%s2 + $0x1a4] sm:$0xf]
      %v593 = vld [vmem:[%s2 + $0x1a8] sm:$0xf]
      %v594 = vld [vmem:[%s2 + $0x1ac] sm:$0xf]
      %v595 = vld [vmem:[%s2 + $0x1b0] sm:$0xf]
      %v596 = vld [vmem:[%s2 + $0x1b4] sm:$0xf]
      %v597 = vld [vmem:[%s2 + $0x1b8] sm:$0xf]
      %v598 = vld [vmem:[%s2 + $0x1bc] sm:$0xf]
      %v599 = vld [vmem:[%s2 + $0x1c0] sm:$0xf]
      %v600 = vld [vmem:[%s2 + $0x1c4] sm:$0xf]
      %v601 = vld [vmem:[%s2 + $0x1c8] sm:$0xf]
      %v602 = vld [vmem:[%s2 + $0x1cc] sm:$0xf]
      %v603 = vld [vmem:[%s2 + $0x1d0] sm:$0xf]
      %v604 = vld [vmem:[%s2 + $0x1d4] sm:$0xf]
      %v605 = vld [vmem:[%s2 + $0x1d8] sm:$0xf]
      %v606 = vld [vmem:[%s2 + $0x1dc] sm:$0xf]
      %v607 = vld [vmem:[%s2 + $0x1e0] sm:$0xf]
      %v608 = vld [vmem:[%s2 + $0x1e4] sm:$0xf]
      %v609 = vld [vmem:[%s2 + $0x1e8] sm:$0xf]
      %v610 = vld [vmem:[%s2 + $0x1ec] sm:$0xf]
      %v611 = vld [vmem:[%s2 + $0x1f0] sm:$0xf]
      %v612 = vld [vmem:[%s2 + $0x1f4] sm:$0xf]
      %v613 = vld [vmem:[%s2 + $0x1f8] sm:$0xf]
      %v614 = vld [vmem:[%s2 + $0x1fc] sm:$0xf]
      %v615 = vld [vmem:[%s2 + $0x200] sm:$0xf]
      %v616 = vld [vmem:[%s2 + $0x204] sm:$0xf]
      %v617 = vld [vmem:[%s2 + $0x208] sm:$0xf]
      %v618 = vld [vmem:[%s2 + $0x20c] sm:$0xf]
      %v619 = vld [vmem:[%s2 + $0x210] sm:$0xf]
      %v620 = vld [vmem:[%s2 + $0x214] sm:$0xf]
      %v621 = vld [vmem:[%s2 + $0x218] sm:$0xf]
      %v622 = vld [vmem:[%s2 + $0x21c] sm:$0xf]
      %v623 = vld [vmem:[%s2 + $0x220] sm:$0xf]
      %v624 = vld [vmem:[%s2 + $0x224] sm:$0xf]
      %v625 = vld [vmem:[%s2 + $0x228] sm:$0xf]
      %v626 = vld [vmem:[%s2 + $0x22c] sm:$0xf]
      %v627 = vld [vmem:[%s2 + $0x230] sm:$0xf]
      %v628 = vld [vmem:[%s2 + $0x234] sm:$0xf]
      %v629 = vld [vmem:[%s2 + $0x238] sm:$0xf]
      %v630 = vld [vmem:[%s2 + $0x23c] sm:$0xf]
      %v631 = vpack.c.b16 %v261, %v259
      %v632 = vpack.c.b16 %v244, %v243
      %v633 = vpack.c.b16 %v472, %v469
      %v634 = vpack.c.b16 %v365, %v363
      %v635 = vpack.c.b16 %v348, %v347
      %v636 = vpack.c.b16 %v473, %v470
      %v637 = vpack.c.b16 %v265, %v263
      %v638 = vpack.c.b16 %v246, %v245
      %v639 = vpack.c.b16 %v474, %v471
      %v640 = vpack.c.b16 %v369, %v367
      %v641 = vpack.c.b16 %v350, %v349
      %v642 = vpack.c.b16 %v477, %v475
      %v643 = vpack.c.b16 %v269, %v267
      %v644 = vpack.c.b16 %v248, %v247
      %v645 = vpack.c.b16 %v478, %v476
      %v646 = vpack.c.b16 %v373, %v371
      %v647 = vpack.c.b16 %v352, %v351
      %v648 = vpack.c.b16 %v481, %v479
      %v649 = vpack.c.b16 %v273, %v271
      %v650 = vpack.c.b16 %v250, %v249
      %v651 = vpack.c.b16 %v482, %v480
      %v652 = vpack.c.b16 %v377, %v375
      %v653 = vpack.c.b16 %v354, %v353
      %v654 = vpack.c.b16 %v485, %v483
      %v655 = vpack.c.b16 %v451, %v449
      %v656 = vpack.c.b16 %v446, %v445
      %v657 = vpack.c.b16 %v486, %v484
      %v829 = vunpack.c.l.b16 %v487
      %v830 = vunpack.c.l.b16 %v488
      %v831 = vunpack.c.l.b16 %v489
      %v832 = vunpack.c.l.b16 %v490
      %v833 = vunpack.c.l.b16 %v491
      %v834 = vunpack.c.l.b16 %v492
      %v835 = vunpack.c.l.b16 %v493
      %v836 = vunpack.c.l.b16 %v494
      %v837 = vunpack.c.l.b16 %v495
      %v838 = vunpack.c.l.b16 %v496
      %v839 = vunpack.c.l.b16 %v497
      %v840 = vunpack.c.l.b16 %v498
      %v841 = vunpack.c.l.b16 %v499
      %v842 = vunpack.c.l.b16 %v500
      %v843 = vunpack.c.l.b16 %v501
      %v844 = vunpack.c.l.b16 %v502
      %v845 = vunpack.c.l.b16 %v503
      %v846 = vunpack.c.l.b16 %v504
      %v847 = vunpack.c.l.b16 %v505
      %v848 = vunpack.c.l.b16 %v506
      %v849 = vunpack.c.l.b16 %v507
      %v850 = vunpack.c.l.b16 %v508
      %v851 = vunpack.c.l.b16 %v509
      %v852 = vunpack.c.l.b16 %v510
      %v853 = vunpack.c.l.b16 %v511
      %v854 = vunpack.c.l.b16 %v512
      %v855 = vunpack.c.l.b16 %v513
      %v856 = vunpack.c.l.b16 %v514
      %v857 = vunpack.c.l.b16 %v515
      %v858 = vunpack.c.l.b16 %v516
      %v859 = vunpack.c.l.b16 %v517
      %v860 = vunpack.c.l.b16 %v518
      %v861 = vunpack.c.l.b16 %v519
      %v862 = vunpack.c.l.b16 %v520
      %v863 = vunpack.c.l.b16 %v521
      %v864 = vunpack.c.l.b16 %v522
      %v865 = vunpack.c.l.b16 %v523
      %v866 = vunpack.c.l.b16 %v524
      %v867 = vunpack.c.l.b16 %v525
      %v868 = vunpack.c.l.b16 %v526
      %v869 = vunpack.c.l.b16 %v527
      %v870 = vunpack.c.l.b16 %v528
      %v871 = vunpack.c.l.b16 %v529
      %v872 = vunpack.c.l.b16 %v530
      %v873 = vunpack.c.l.b16 %v531
      %v874 = vunpack.c.l.b16 %v532
      %v875 = vunpack.c.l.b16 %v533
      %v876 = vunpack.c.l.b16 %v534
      %v877 = vunpack.c.l.b16 %v535
      %v878 = vunpack.c.l.b16 %v536
      %v879 = vunpack.c.l.b16 %v537
      %v880 = vunpack.c.l.b16 %v538
      %v881 = vunpack.c.l.b16 %v539
      %v882 = vunpack.c.l.b16 %v540
      %v883 = vunpack.c.l.b16 %v541
      %v884 = vunpack.c.l.b16 %v542
      %v885 = vunpack.c.l.b16 %v543
      %v886 = vunpack.c.l.b16 %v544
      %v887 = vunpack.c.l.b16 %v545
      %v888 = vunpack.c.l.b16 %v546
      %v889 = vunpack.c.l.b16 %v547
      %v890 = vunpack.c.l.b16 %v548
      %v891 = vunpack.c.l.b16 %v549
      %v892 = vunpack.c.l.b16 %v550
      %v893 = vunpack.c.l.b16 %v551
      %v894 = vunpack.c.l.b16 %v552
      %v895 = vunpack.c.l.b16 %v553
      %v896 = vunpack.c.l.b16 %v554
      %v897 = vunpack.c.l.b16 %v555
      %v898 = vunpack.c.l.b16 %v556
      %v899 = vunpack.c.l.b16 %v557
      %v900 = vunpack.c.l.b16 %v558
      %v901 = vunpack.c.l.b16 %v559
      %v902 = vunpack.c.l.b16 %v560
      %v903 = vunpack.c.l.b16 %v561
      %v904 = vunpack.c.l.b16 %v562
      %v905 = vunpack.c.l.b16 %v563
      %v906 = vunpack.c.l.b16 %v564
      %v907 = vunpack.c.l.b16 %v565
      %v908 = vunpack.c.l.b16 %v566
      %v909 = vunpack.c.l.b16 %v567
      %v910 = vunpack.c.l.b16 %v568
      %v911 = vunpack.c.l.b16 %v569
      %v912 = vunpack.c.l.b16 %v570
      %v913 = vunpack.c.l.b16 %v571
      %v914 = vunpack.c.l.b16 %v572
      %v915 = vunpack.c.l.b16 %v573
      %v916 = vunpack.c.l.b16 %v574
      %v917 = vunpack.c.l.b16 %v575
      %v918 = vunpack.c.l.b16 %v576
      %v919 = vunpack.c.l.b16 %v577
      %v920 = vunpack.c.l.b16 %v578
      %v921 = vunpack.c.l.b16 %v579
      %v922 = vunpack.c.l.b16 %v580
      %v923 = vunpack.c.l.b16 %v581
      %v924 = vunpack.c.l.b16 %v582
      %v925 = vunpack.c.l.b16 %v583
      %v926 = vunpack.c.l.b16 %v584
      %v927 = vunpack.c.l.b16 %v585
      %v928 = vunpack.c.l.b16 %v586
      %v929 = vunpack.c.l.b16 %v587
      %v930 = vunpack.c.l.b16 %v588
      %v931 = vunpack.c.l.b16 %v589
      %v932 = vunpack.c.l.b16 %v590
      %v933 = vunpack.c.l.b16 %v591
      %v934 = vunpack.c.l.b16 %v592
      %v935 = vunpack.c.l.b16 %v593
      %v936 = vunpack.c.l.b16 %v594
      %v937 = vunpack.c.l.b16 %v595
      %v938 = vunpack.c.l.b16 %v596
      %v939 = vunpack.c.l.b16 %v597
      %v940 = vunpack.c.l.b16 %v598
      %v941 = vunpack.c.l.b16 %v599
      %v942 = vunpack.c.l.b16 %v600
      %v943 = vunpack.c.l.b16 %v601
      %v944 = vunpack.c.l.b16 %v602
      %v945 = vunpack.c.l.b16 %v603
      %v946 = vunpack.c.l.b16 %v604
      %v947 = vunpack.c.l.b16 %v605
      %v948 = vunpack.c.l.b16 %v606
      %v949 = vunpack.c.l.b16 %v607
      %v950 = vunpack.c.l.b16 %v608
      %v951 = vunpack.c.l.b16 %v609
      %v952 = vunpack.c.l.b16 %v610
      %v953 = vunpack.c.l.b16 %v611
      %v954 = vunpack.c.l.b16 %v612
      %v955 = vunpack.c.l.b16 %v613
      %v956 = vunpack.c.l.b16 %v614
      %v957 = vunpack.c.l.b16 %v615
      %v958 = vunpack.c.l.b16 %v616
      %v959 = vunpack.c.l.b16 %v617
      %v960 = vunpack.c.l.b16 %v618
      %v961 = vunpack.c.l.b16 %v619
      %v962 = vunpack.c.l.b16 %v620
      %v963 = vunpack.c.l.b16 %v621
      %v964 = vunpack.c.l.b16 %v622
      %v965 = vunpack.c.l.b16 %v623
      %v966 = vunpack.c.l.b16 %v624
      %v967 = vunpack.c.l.b16 %v625
      %v968 = vunpack.c.l.b16 %v626
      %v969 = vunpack.c.l.b16 %v627
      %v970 = vunpack.c.l.b16 %v628
      %v971 = vunpack.c.l.b16 %v629
      %v972 = vunpack.c.l.b16 %v630
      %v973 = vpack.c.b16 %v830, %v829
      %v974 = vpack.c.b16 %v832, %v831
      %v975 = vpack.c.b16 %v834, %v833
      %v976 = vpack.c.b16 %v836, %v835
      %v977 = vpack.c.b16 %v838, %v837
      %v978 = vpack.c.b16 %v840, %v839
      %v979 = vpack.c.b16 %v842, %v841
      %v980 = vpack.c.b16 %v844, %v843
      %v981 = vpack.c.b16 %v846, %v845
      %v982 = vpack.c.b16 %v848, %v847
      %v983 = vpack.c.b16 %v850, %v849
      %v984 = vpack.c.b16 %v852, %v851
      %v985 = vpack.c.b16 %v854, %v853
      %v986 = vpack.c.b16 %v856, %v855
      %v987 = vpack.c.b16 %v858, %v857
      %v988 = vpack.c.b16 %v860, %v859
      %v989 = vpack.c.b16 %v862, %v861
      %v990 = vpack.c.b16 %v864, %v863
      %v991 = vpack.c.b16 %v866, %v865
      %v992 = vpack.c.b16 %v868, %v867
      %v993 = vpack.c.b16 %v870, %v869
      %v994 = vpack.c.b16 %v872, %v871
      %v995 = vpack.c.b16 %v874, %v873
      %v996 = vpack.c.b16 %v876, %v875
      %v997 = vpack.c.b16 %v878, %v877
      %v998 = vpack.c.b16 %v880, %v879
      %v999 = vpack.c.b16 %v882, %v881
      %v1000 = vpack.c.b16 %v884, %v883
      %v1001 = vpack.c.b16 %v886, %v885
      %v1002 = vpack.c.b16 %v888, %v887
      %v1003 = vpack.c.b16 %v890, %v889
      %v1004 = vpack.c.b16 %v892, %v891
      %v1005 = vpack.c.b16 %v894, %v893
      %v1006 = vpack.c.b16 %v896, %v895
      %v1007 = vpack.c.b16 %v898, %v897
      %v1008 = vpack.c.b16 %v900, %v899
      %v1009 = vpack.c.b16 %v902, %v901
      %v1010 = vpack.c.b16 %v904, %v903
      %v1011 = vpack.c.b16 %v906, %v905
      %v1012 = vpack.c.b16 %v908, %v907
      %v1013 = vpack.c.b16 %v910, %v909
      %v1014 = vpack.c.b16 %v912, %v911
      %v1015 = vpack.c.b16 %v914, %v913
      %v1016 = vpack.c.b16 %v916, %v915
      %v1017 = vpack.c.b16 %v918, %v917
      %v1018 = vpack.c.b16 %v920, %v919
      %v1019 = vpack.c.b16 %v922, %v921
      %v1020 = vpack.c.b16 %v924, %v923
      %v1021 = vpack.c.b16 %v926, %v925
      %v1022 = vpack.c.b16 %v928, %v927
      %v1023 = vpack.c.b16 %v930, %v929
      %v1024 = vpack.c.b16 %v932, %v931
      %v1025 = vpack.c.b16 %v934, %v933
      %v1026 = vpack.c.b16 %v936, %v935
      %v1027 = vpack.c.b16 %v938, %v937
      %v1028 = vpack.c.b16 %v940, %v939
      %v1029 = vpack.c.b16 %v942, %v941
      %v1030 = vpack.c.b16 %v944, %v943
      %v1031 = vpack.c.b16 %v946, %v945
      %v1032 = vpack.c.b16 %v948, %v947
      %v1033 = vpack.c.b16 %v950, %v949
      %v1034 = vpack.c.b16 %v952, %v951
      %v1035 = vpack.c.b16 %v954, %v953
      %v1036 = vpack.c.b16 %v956, %v955
      %v1037 = vpack.c.b16 %v958, %v957
      %v1038 = vpack.c.b16 %v960, %v959
      %v1039 = vpack.c.b16 %v962, %v961
      %v1040 = vpack.c.b16 %v964, %v963
      %v1041 = vpack.c.b16 %v966, %v965
      %v1042 = vpack.c.b16 %v968, %v967
      %v1043 = vpack.c.b16 %v970, %v969
      %v1044 = vpack.c.b16 %v972, %v971
      %1117 = vmatprep.subr.bf16.mxu0 0
      %1118 = vmatpush1.bf16.msra.mxu0 %v980
      %1119 = vmatprep.subr.bf16.mxu0 0
      %1120 = vmatpush1.bf16.msra.mxu0 %v979
      %1121 = vmatprep.subr.bf16.mxu0 0
      %1122 = vmatpush1.bf16.msra.mxu0 %v978
      %1123 = vmatprep.subr.bf16.mxu0 0
      %1124 = vmatpush1.bf16.msra.mxu0 %v977
      %1125 = vmatprep.subr.bf16.mxu0 0
      %1126 = vmatpush1.bf16.msra.mxu0 %v976
      %1127 = vmatprep.subr.bf16.mxu0 0
      %1128 = vmatpush1.bf16.msra.mxu0 %v975
      %1129 = vmatprep.subr.bf16.mxu0 0
      %1130 = vmatpush1.bf16.msra.mxu0 %v974
      %1131 = vmatprep.subr.bf16.mxu0 0
      %1132 = vmatpush1.bf16.msra.mxu0 %v973
      %1133 = vmatprep.subr.bf16.mxu0 0
      %1134 = vmatpush2.bf16.msra.mxu0 %v988
      %1135 = vmatprep.subr.bf16.mxu0 0
      %1136 = vmatpush2.bf16.msra.mxu0 %v987
      %1137 = vmatprep.subr.bf16.mxu0 0
      %1138 = vmatpush2.bf16.msra.mxu0 %v986
      %1139 = vmatprep.subr.bf16.mxu0 0
      %1140 = vmatpush2.bf16.msra.mxu0 %v985
      %1141 = vmatprep.subr.bf16.mxu0 0
      %1142 = vmatpush2.bf16.msra.mxu0 %v984
      %1143 = vmatprep.subr.bf16.mxu0 0
      %1144 = vmatpush2.bf16.msra.mxu0 %v983
      %1145 = vmatprep.subr.bf16.mxu0 0
      %1146 = vmatpush2.bf16.msra.mxu0 %v982
      %1147 = vmatprep.subr.bf16.mxu0 0
      %1148 = vmatpush2.bf16.msra.mxu0 %v981
      %1149 = vmatprep.mubr.bf16.mxu0 %v632
      %1150 = vmatmul.mubr.bf16.gmra.mxu0 %v631
      %v1151 = vpop.f32.mrf.mxu0
      %v1152 = vadd.f32 0.0, %v1151
      %v1153 = vpop.f32.mrf.mxu0
      %v1154 = vpop.f32.mrf.mxu0
      %v1155 = vadd.f32 0.0, %v1154
      %v1156 = vpop.f32.mrf.mxu0
      %1157 = vmatprep.mubr.bf16.mxu0 %v638
      %1158 = vmatmul.mubr.bf16.gmra.mxu0 %v637
      %v1159 = vpop.f32.mrf.mxu0
      %v1160 = vadd.f32 0.0, %v1159
      %v1161 = vpop.f32.mrf.mxu0
      %v1162 = vpop.f32.mrf.mxu0
      %v1163 = vadd.f32 0.0, %v1162
      %v1164 = vpop.f32.mrf.mxu0
      %1165 = vmatprep.mubr.bf16.mxu0 %v644
      %1166 = vmatmul.mubr.bf16.gmra.mxu0 %v643
      %v1167 = vpop.f32.mrf.mxu0
      %v1168 = vadd.f32 0.0, %v1167
      %v1169 = vpop.f32.mrf.mxu0
      %v1170 = vpop.f32.mrf.mxu0
      %v1171 = vadd.f32 0.0, %v1170
      %v1172 = vpop.f32.mrf.mxu0
      %1173 = vmatprep.mubr.bf16.mxu0 %v650
      %1174 = vmatmul.mubr.bf16.gmra.mxu0 %v649
      %v1175 = vpop.f32.mrf.mxu0
      %v1176 = vadd.f32 0.0, %v1175
      %v1177 = vpop.f32.mrf.mxu0
      %v1178 = vpop.f32.mrf.mxu0
      %v1179 = vadd.f32 0.0, %v1178
      %v1180 = vpop.f32.mrf.mxu0
      %1181 = vdwg.mxu0
      %1182 = vmatprep.subr.bf16.mxu0 0
      %1183 = vmatpush1.bf16.msra.mxu0 %v996
      %1184 = vmatprep.subr.bf16.mxu0 0
      %1185 = vmatpush1.bf16.msra.mxu0 %v995
      %1186 = vmatprep.subr.bf16.mxu0 0
      %1187 = vmatpush1.bf16.msra.mxu0 %v994
      %1188 = vmatprep.subr.bf16.mxu0 0
      %1189 = vmatpush1.bf16.msra.mxu0 %v993
      %1190 = vmatprep.subr.bf16.mxu0 0
      %1191 = vmatpush1.bf16.msra.mxu0 %v992
      %1192 = vmatprep.subr.bf16.mxu0 0
      %1193 = vmatpush1.bf16.msra.mxu0 %v991
      %1194 = vmatprep.subr.bf16.mxu0 0
      %1195 = vmatpush1.bf16.msra.mxu0 %v990
      %1196 = vmatprep.subr.bf16.mxu0 0
      %1197 = vmatpush1.bf16.msra.mxu0 %v989
      %1198 = vmatprep.subr.bf16.mxu0 0
      %1199 = vmatpush2.bf16.msra.mxu0 %v1004
      %1200 = vmatprep.subr.bf16.mxu0 0
      %1201 = vmatpush2.bf16.msra.mxu0 %v1003
      %1202 = vmatprep.subr.bf16.mxu0 0
      %1203 = vmatpush2.bf16.msra.mxu0 %v1002
      %1204 = vmatprep.subr.bf16.mxu0 0
      %1205 = vmatpush2.bf16.msra.mxu0 %v1001
      %1206 = vmatprep.subr.bf16.mxu0 0
      %1207 = vmatpush2.bf16.msra.mxu0 %v1000
      %1208 = vmatprep.subr.bf16.mxu0 0
      %1209 = vmatpush2.bf16.msra.mxu0 %v999
      %1210 = vmatprep.subr.bf16.mxu0 0
      %1211 = vmatpush2.bf16.msra.mxu0 %v998
      %1212 = vmatprep.subr.bf16.mxu0 0
      %1213 = vmatpush2.bf16.msra.mxu0 %v997
      %1214 = vmatprep.mubr.bf16.mxu0 %v634
      %1215 = vmatmul.mubr.bf16.gmra.mxu0 %v633
      %v1216 = vpop.f32.mrf.mxu0
      %v1217 = vadd.f32 %v1152, %v1216
      %v1218 = vpop.f32.mrf.mxu0
      %v1219 = vpop.f32.mrf.mxu0
      %v1220 = vadd.f32 %v1155, %v1219
      %v1221 = vpop.f32.mrf.mxu0
      %1222 = vmatprep.mubr.bf16.mxu0 %v640
      %1223 = vmatmul.mubr.bf16.gmra.mxu0 %v639
      %v1224 = vpop.f32.mrf.mxu0
      %v1225 = vadd.f32 %v1160, %v1224
      %v1226 = vpop.f32.mrf.mxu0
      %v1227 = vpop.f32.mrf.mxu0
      %v1228 = vadd.f32 %v1163, %v1227
      %v1229 = vpop.f32.mrf.mxu0
      %1230 = vmatprep.mubr.bf16.mxu0 %v646
      %1231 = vmatmul.mubr.bf16.gmra.mxu0 %v645
      %v1232 = vpop.f32.mrf.mxu0
      %v1233 = vadd.f32 %v1168, %v1232
      %v1234 = vpop.f32.mrf.mxu0
      %v1235 = vpop.f32.mrf.mxu0
      %v1236 = vadd.f32 %v1171, %v1235
      %v1237 = vpop.f32.mrf.mxu0
      %1238 = vmatprep.mubr.bf16.mxu0 %v652
      %1239 = vmatmul.mubr.bf16.gmra.mxu0 %v651
      %v1240 = vpop.f32.mrf.mxu0
      %v1241 = vadd.f32 %v1176, %v1240
      %v1242 = vpop.f32.mrf.mxu0
      %v1243 = vpop.f32.mrf.mxu0
      %v1244 = vadd.f32 %v1179, %v1243
      %v1245 = vpop.f32.mrf.mxu0
      %1246 = vdwg.mxu0
      %1247 = vmatprep.subr.bf16.mxu0 0
      %1248 = vmatpush1.bf16.msra.mxu0 %v1012
      %1249 = vmatprep.subr.bf16.mxu0 0
      %1250 = vmatpush1.bf16.msra.mxu0 %v1011
      %1251 = vmatprep.subr.bf16.mxu0 0
      %1252 = vmatpush1.bf16.msra.mxu0 %v1010
      %1253 = vmatprep.subr.bf16.mxu0 0
      %1254 = vmatpush1.bf16.msra.mxu0 %v1009
      %1255 = vmatprep.subr.bf16.mxu0 0
      %1256 = vmatpush1.bf16.msra.mxu0 %v1008
      %1257 = vmatprep.subr.bf16.mxu0 0
      %1258 = vmatpush1.bf16.msra.mxu0 %v1007
      %1259 = vmatprep.subr.bf16.mxu0 0
      %1260 = vmatpush1.bf16.msra.mxu0 %v1006
      %1261 = vmatprep.subr.bf16.mxu0 0
      %1262 = vmatpush1.bf16.msra.mxu0 %v1005
      %1263 = vmatprep.subr.bf16.mxu0 0
      %1264 = vmatpush2.bf16.msra.mxu0 %v1020
      %1265 = vmatprep.subr.bf16.mxu0 0
      %1266 = vmatpush2.bf16.msra.mxu0 %v1019
      %1267 = vmatprep.subr.bf16.mxu0 0
      %1268 = vmatpush2.bf16.msra.mxu0 %v1018
      %1269 = vmatprep.subr.bf16.mxu0 0
      %1270 = vmatpush2.bf16.msra.mxu0 %v1017
      %1271 = vmatprep.subr.bf16.mxu0 0
      %1272 = vmatpush2.bf16.msra.mxu0 %v1016
      %1273 = vmatprep.subr.bf16.mxu0 0
      %1274 = vmatpush2.bf16.msra.mxu0 %v1015
      %1275 = vmatprep.subr.bf16.mxu0 0
      %1276 = vmatpush2.bf16.msra.mxu0 %v1014
      %1277 = vmatprep.subr.bf16.mxu0 0
      %1278 = vmatpush2.bf16.msra.mxu0 %v1013
      %1279 = vmatprep.mubr.bf16.mxu0 %v636
      %1280 = vmatmul.mubr.bf16.gmra.mxu0 %v635
      %v1281 = vpop.f32.mrf.mxu0
      %v1282 = vadd.f32 %v1217, %v1281
      %v1283 = vpop.f32.mrf.mxu0
      %v1284 = vpop.f32.mrf.mxu0
      %v1285 = vadd.f32 %v1220, %v1284
      %v1286 = vpop.f32.mrf.mxu0
      %1287 = vmatprep.mubr.bf16.mxu0 %v642
      %1288 = vmatmul.mubr.bf16.gmra.mxu0 %v641
      %v1289 = vpop.f32.mrf.mxu0
      %v1290 = vadd.f32 %v1225, %v1289
      %v1291 = vpop.f32.mrf.mxu0
      %v1292 = vpop.f32.mrf.mxu0
      %v1293 = vadd.f32 %v1228, %v1292
      %v1294 = vpop.f32.mrf.mxu0
      %1295 = vmatprep.mubr.bf16.mxu0 %v648
      %1296 = vmatmul.mubr.bf16.gmra.mxu0 %v647
      %v1297 = vpop.f32.mrf.mxu0
      %v1298 = vadd.f32 %v1233, %v1297
      %v1299 = vpop.f32.mrf.mxu0
      %v1300 = vpop.f32.mrf.mxu0
      %v1301 = vadd.f32 %v1236, %v1300
      %v1302 = vpop.f32.mrf.mxu0
      %1303 = vmatprep.mubr.bf16.mxu0 %v654
      %1304 = vmatmul.mubr.bf16.gmra.mxu0 %v653
      %v1305 = vpop.f32.mrf.mxu0
      %v1306 = vadd.f32 %v1241, %v1305
      %v1307 = vpop.f32.mrf.mxu0
      %v1308 = vpop.f32.mrf.mxu0
      %v1309 = vadd.f32 %v1244, %v1308
      %v1310 = vpop.f32.mrf.mxu0
      %1311 = vdwg.mxu0
      %1312 = vmatprep.subr.bf16.mxu0 0
      %1313 = vmatpush1.bf16.msra.mxu0 %v1028
      %1314 = vmatprep.subr.bf16.mxu0 0
      %1315 = vmatpush1.bf16.msra.mxu0 %v1027
      %1316 = vmatprep.subr.bf16.mxu0 0
      %1317 = vmatpush1.bf16.msra.mxu0 %v1026
      %1318 = vmatprep.subr.bf16.mxu0 0
      %1319 = vmatpush1.bf16.msra.mxu0 %v1025
      %1320 = vmatprep.subr.bf16.mxu0 0
      %1321 = vmatpush1.bf16.msra.mxu0 %v1024
      %1322 = vmatprep.subr.bf16.mxu0 0
      %1323 = vmatpush1.bf16.msra.mxu0 %v1023
      %1324 = vmatprep.subr.bf16.mxu0 0
      %1325 = vmatpush1.bf16.msra.mxu0 %v1022
      %1326 = vmatprep.subr.bf16.mxu0 0
      %1327 = vmatpush1.bf16.msra.mxu0 %v1021
      %1328 = vmatprep.subr.bf16.mxu0 0
      %1329 = vmatpush2.bf16.msra.mxu0 %v1036
      %1330 = vmatprep.subr.bf16.mxu0 0
      %1331 = vmatpush2.bf16.msra.mxu0 %v1035
      %1332 = vmatprep.subr.bf16.mxu0 0
      %1333 = vmatpush2.bf16.msra.mxu0 %v1034
      %1334 = vmatprep.subr.bf16.mxu0 0
      %1335 = vmatpush2.bf16.msra.mxu0 %v1033
      %1336 = vmatprep.subr.bf16.mxu0 0
      %1337 = vmatpush2.bf16.msra.mxu0 %v1032
      %1338 = vmatprep.subr.bf16.mxu0 0
      %1339 = vmatpush2.bf16.msra.mxu0 %v1031
      %1340 = vmatprep.subr.bf16.mxu0 0
      %1341 = vmatpush2.bf16.msra.mxu0 %v1030
      %1342 = vmatprep.subr.bf16.mxu0 0
      %1343 = vmatpush2.bf16.msra.mxu0 %v1029
      %1344 = vmatprep.mubr.bf16.mxu0 %v638
      %1345 = vmatmul.mubr.bf16.gmra.mxu0 %v637
      %v1346 = vpop.f32.mrf.mxu0
      %v1347 = vadd.f32 %v1282, %v1346
      %v1348 = vpop.f32.mrf.mxu0
      %v1349 = vpop.f32.mrf.mxu0
      %v1350 = vadd.f32 %v1285, %v1349
      %v1351 = vpop.f32.mrf.mxu0
      %1352 = vmatprep.mubr.bf16.mxu0 %v644
      %1353 = vmatmul.mubr.bf16.gmra.mxu0 %v643
      %v1354 = vpop.f32.mrf.mxu0
      %v1355 = vadd.f32 %v1290, %v1354
      %v1356 = vpop.f32.mrf.mxu0
      %v1357 = vpop.f32.mrf.mxu0
      %v1358 = vadd.f32 %v1293, %v1357
      %v1359 = vpop.f32.mrf.mxu0
      %1360 = vmatprep.mubr.bf16.mxu0 %v650
      %1361 = vmatmul.mubr.bf16.gmra.mxu0 %v649
      %v1362 = vpop.f32.mrf.mxu0
      %v1363 = vadd.f32 %v1298, %v1362
      %v1364 = vpop.f32.mrf.mxu0
      %v1365 = vpop.f32.mrf.mxu0
      %v1366 = vadd.f32 %v1301, %v1365
      %v1367 = vpop.f32.mrf.mxu0
      %1368 = vmatprep.mubr.bf16.mxu0 %v656
      %1369 = vmatmul.mubr.bf16.gmra.mxu0 %v655
      %v1370 = vpop.f32.mrf.mxu0
      %v1371 = vadd.f32 %v1306, %v1370
      %v1372 = vpop.f32.mrf.mxu0
      %v1373 = vpop.f32.mrf.mxu0
      %v1374 = vadd.f32 %v1309, %v1373
      %v1375 = vpop.f32.mrf.mxu0
      %1376 = vdwg.mxu0
      %1377 = vmatprep.subr.bf16.mxu0 0
      %1378 = vmatpush1.bf16.msra.mxu0 %v1044
      %1379 = vmatprep.subr.bf16.mxu0 0
      %1380 = vmatpush1.bf16.msra.mxu0 %v1043
      %1381 = vmatprep.subr.bf16.mxu0 0
      %1382 = vmatpush1.bf16.msra.mxu0 %v1042
      %1383 = vmatprep.subr.bf16.mxu0 0
      %1384 = vmatpush1.bf16.msra.mxu0 %v1041
      %1385 = vmatprep.subr.bf16.mxu0 0
      %1386 = vmatpush1.bf16.msra.mxu0 %v1040
      %1387 = vmatprep.subr.bf16.mxu0 0
      %1388 = vmatpush1.bf16.msra.mxu0 %v1039
      %1389 = vmatprep.subr.bf16.mxu0 0
      %1390 = vmatpush1.bf16.msra.mxu0 %v1038
      %1391 = vmatprep.subr.bf16.mxu0 0
      %1392 = vmatpush1.bf16.msra.mxu0 %v1037
      %1393 = vmatprep.subr.bf16.mxu0 0
      %1394 = vmatpush2.bf16.msra.mxu0 0
      %1395 = vmatprep.subr.bf16.mxu0 0
      %1396 = vmatpush2.bf16.msra.mxu0 0
      %1397 = vmatprep.subr.bf16.mxu0 0
      %1398 = vmatpush2.bf16.msra.mxu0 0
      %1399 = vmatprep.subr.bf16.mxu0 0
      %1400 = vmatpush2.bf16.msra.mxu0 0
      %1401 = vmatprep.subr.bf16.mxu0 0
      %1402 = vmatpush2.bf16.msra.mxu0 0
      %1403 = vmatprep.subr.bf16.mxu0 0
      %1404 = vmatpush2.bf16.msra.mxu0 0
      %1405 = vmatprep.subr.bf16.mxu0 0
      %1406 = vmatpush2.bf16.msra.mxu0 0
      %1407 = vmatprep.subr.bf16.mxu0 0
      %1408 = vmatpush2.bf16.msra.mxu0 0
      %1409 = vmatprep.mubr.bf16.mxu0 0
      %1410 = vmatmul.mubr.bf16.gmra.mxu0 %v639
      %v1411 = vpop.f32.mrf.mxu0
      %v1412 = vadd.f32 %v1347, %v1411
      %v1413 = vpop.f32.mrf.mxu0
      %v1414 = vpop.f32.mrf.mxu0
      %v1415 = vadd.f32 %v1350, %v1414
      %v1416 = vpop.f32.mrf.mxu0
      %1417 = vmatprep.mubr.bf16.mxu0 0
      %1418 = vmatmul.mubr.bf16.gmra.mxu0 %v645
      %v1419 = vpop.f32.mrf.mxu0
      %v1420 = vadd.f32 %v1355, %v1419
      %v1421 = vpop.f32.mrf.mxu0
      %v1422 = vpop.f32.mrf.mxu0
      %v1423 = vadd.f32 %v1358, %v1422
      %v1424 = vpop.f32.mrf.mxu0
      %1425 = vmatprep.mubr.bf16.mxu0 0
      %1426 = vmatmul.mubr.bf16.gmra.mxu0 %v651
      %v1427 = vpop.f32.mrf.mxu0
      %v1428 = vadd.f32 %v1363, %v1427
      %v1429 = vpop.f32.mrf.mxu0
      %v1430 = vpop.f32.mrf.mxu0
      %v1431 = vadd.f32 %v1366, %v1430
      %v1432 = vpop.f32.mrf.mxu0
      %1433 = vmatprep.mubr.bf16.mxu0 0
      %1434 = vmatmul.mubr.bf16.gmra.mxu0 %v657
      %v1435 = vpop.f32.mrf.mxu0
      %v1436 = vadd.f32 %v1371, %v1435
      %v1437 = vpop.f32.mrf.mxu0
      %v1438 = vpop.f32.mrf.mxu0
      %v1439 = vadd.f32 %v1374, %v1438
      %v1440 = vpop.f32.mrf.mxu0
      %1441 = vdwg.mxu0
      %v1442 = vpack.c.bf16 %v1412, %v1412
      %v1443 = vpack.c.bf16 %v1415, %v1415
      %v1444 = vpack.c.bf16 %v1420, %v1420
      %v1445 = vpack.c.bf16 %v1423, %v1423
      %v1446 = vpack.c.bf16 %v1428, %v1428
      %v1447 = vpack.c.bf16 %v1431, %v1431
      %v1448 = vpack.c.bf16 %v1436, %v1436
      %v1449 = vpack.c.bf16 %v1439, %v1439
      %1450 = vst [vmem:[%s186] sm:$0xf] %v1442
      %1451 = vst [vmem:[%s186 + $0x4] sm:$0xf] %v1443
      %1452 = vst [vmem:[%s186 + $0x8] sm:$0xf] %v1444
      %1453 = vst [vmem:[%s186 + $0xc] sm:$0xf] %v1445
      %1454 = vst [vmem:[%s186 + $0x10] sm:$0xf] %v1446
      %1455 = vst [vmem:[%s186 + $0x14] sm:$0xf] %v1447
      %1456 = vst [vmem:[%s186 + $0x18] sm:$0xf] %v1448
      %1457 = vst [vmem:[%s186 + $0x1c] sm:$0xf] %v1449
      %v1458 = vadd.f32 %v1412, %v1415
      %v1459 = vadd.f32 %v1458, %v1420
      %v1460 = vadd.f32 %v1459, %v1423
      %v1461 = vadd.f32 %v1460, %v1428
      %v1462 = vadd.f32 %v1461, %v1431
      %v1463 = vadd.f32 %v1462, %v1436
      %v1464 = vadd.f32 %v1463, %v1439
      %v1465 = vrot.slane %v1464, 4
      %v1466 = vadd.f32 %v1464, %v1465
      %v1467 = vrot.slane %v1466, 2
      %v1468 = vadd.f32 %v1466, %v1467
      %v1469 = vrot.slane %v1468, 1
      %v1470 = vadd.f32 %v1468, %v1469
      %v1471 = vmul.f32 %v1412, %v1412
      %v1472 = vmul.f32 %v1415, %v1415
      %v1473 = vmul.f32 %v1420, %v1420
      %v1474 = vmul.f32 %v1423, %v1423
      %v1475 = vmul.f32 %v1428, %v1428
      %v1476 = vmul.f32 %v1431, %v1431
      %v1477 = vmul.f32 %v1436, %v1436
      %v1478 = vmul.f32 %v1439, %v1439
      %v1479 = vadd.f32 %v1471, %v1472
      %v1480 = vadd.f32 %v1479, %v1473
      %v1481 = vadd.f32 %v1480, %v1474
      %v1482 = vadd.f32 %v1481, %v1475
      %v1483 = vadd.f32 %v1482, %v1476
      %v1484 = vadd.f32 %v1483, %v1477
      %v1485 = vadd.f32 %v1484, %v1478
      %v1486 = vrot.slane %v1485, 4
      %v1487 = vadd.f32 %v1485, %v1486
      %v1488 = vrot.slane %v1487, 2
      %v1489 = vadd.f32 %v1487, %v1488
      %v1490 = vrot.slane %v1489, 1
      %v1491 = vadd.f32 %v1489, %v1490
      %vm1492 = vcmask 1040384
      %v1493 = vsel %vm1492, %v1470, %v1491
      %1494 = vst [vmem:[%s191] sm:$0x3] %v1493
      %s1495 = smul.u32 4, %s16
      %p1496 = scmp.lt.s32.totalorder %s1495, 7
      %s1497 = scalar_select %p1496, %s1495, 7
      %s1498 = smul.addr %s1497, 2
      %s1499 = smul.addr %s1498, 4
      %s1500 = scalar_lea.vmem %s3, %s1499
      %p1501 = scmp.lt.s32.totalorder %s16, 1
      %s1502 = scalar_select %p1501, %s16, 1
      %s1503 = smul.addr %s1502, 2
      %s1504 = scalar_lea.vmem %s4, %s1503
      // Predicated region
      $region33: #{basic_block_forward.4} parent=31 // pred_check
        %p1505 = pneg %p97
      $region34: #{basic_block_forward.4} parent=31 // pred_check_branch
        %1507 = sbr.rel (%p1505) target = $region36
      $region35: #{basic_block_forward.4} parent=31 // pred_region
        %s1508 = smul.u32 4, %s16
      $region36: #{basic_block_forward.4} parent=31 // pred_fallthru
        _
      // Predicated region
      $region37: #{basic_block_forward.4} parent=31 // pred_check
        %p1509 = pneg %p123
      $region38: #{basic_block_forward.4} parent=31 // pred_check_branch
        %1511 = sbr.rel (%p1509) target = $region40
      $region39: #{basic_block_forward.4} parent=31 // pred_region
        _
      $region40: #{basic_block_forward.4} parent=31 // pred_fallthru
        _
    $region32: #{basic_block_forward.4} parent=5 // pred_fallthru
      _
    %p1512 = scmp.le.s32.totalorder 2, %s11
    // Predicated region
    $region41: #{basic_block_forward.4} parent=5 // pred_check
      %p1513 = pneg %p1512
    $region42: #{basic_block_forward.4} parent=5 // pred_check_branch
      %1515 = sbr.rel (%p1513) target = $region44
    $region43: #{basic_block_forward.4} parent=5 // pred_region
      %s1516 = ssub.s32 %s11, 2
      // Predicated region
      $region45: #{basic_block_forward.4} parent=43 // pred_check
        %p1517 = pneg %p103
      $region46: #{basic_block_forward.4} parent=43 // pred_check_branch
        %1519 = sbr.rel (%p1517) target = $region48
      $region47: #{basic_block_forward.4} parent=43 // pred_region
        %s1520 = smul.u32 4, %s17
        %p1521 = scmp.lt.s32.totalorder %s1520, 7
        %s1522 = scalar_select %p1521, %s1520, 7
        %s1523 = smul.addr %s1522, 2
        %s1524 = smul.addr %s1523, 4
        %s1525 = scalar_lea.vmem %s3, %s1524
      $region48: #{basic_block_forward.4} parent=43 // pred_fallthru
        _
      // Predicated region
      $region49: #{basic_block_forward.4} parent=43 // pred_check
        %p1526 = pneg %p129
      $region50: #{basic_block_forward.4} parent=43 // pred_check_branch
        %1528 = sbr.rel (%p1526) target = $region52
      $region51: #{basic_block_forward.4} parent=43 // pred_region
        %p1529 = scmp.lt.s32.totalorder %s17, 1
        %s1530 = scalar_select %p1529, %s17, 1
        %s1531 = smul.addr %s1530, 2
        %s1532 = scalar_lea.vmem %s4, %s1531
      $region52: #{basic_block_forward.4} parent=43 // pred_fallthru
        _
    $region44: #{basic_block_forward.4} parent=5 // pred_fallthru
      _
  $region6: #{basic_block_forward.4} parent=0 // loop_footer
    %s15 = sadd.s32 1, %s11
  $region7: #{basic_block_forward.4} parent=0 // loop_footer_branch
    %10 = sbr.rel target = $region3
  $region8: #{basic_block_forward.4} parent=0 // loop_exit
    _

// kernel: basic_block_forward.6
$region0: #{basic_block_forward.6}
  #allocation0 [shape = 'u32[]', space=smem, size = 0x4, offset = 0x4, fixed_abs, tag = 'smem constant byte address 0x4 - core index']
  #allocation1 [shape = 'u32[144,128]{1,0:T(1,128)}', space=vmem, size = 0x12000, scoped, tag = 'internal scratch']
  %s0 = inlined_call_operand.vmem [shape: bf16[128,128], index: 0, kind: input, shape index: {}]
  %s1 = inlined_call_operand.vmem [shape: bf16[128,128], index: 1, kind: input, shape index: {}]
  %s2 = inlined_call_operand.vmem [shape: bf16[128,128], index: 2, kind: output, shape index: {0}]
  %s3 = inlined_call_operand.vmem [shape: f32[1,2,128], index: 3, kind: output, shape index: {1}]
  %4 = xla_tuple %s2, %s3
  %s5 = sld [smem:[#allocation0]]
  $region26: #{basic_block_forward.6} parent=0
    _
  %s7 = ssub.s32 1, %s5
  %s8 = scalar_select 0, %s7, %s5
  // Predicated region
  $region2: #{basic_block_forward.6} parent=0 // pred_check
    _
  $region3: #{basic_block_forward.6} parent=0 // pred_check_branch
    %10 = sbr.rel (0) target = $region5
  $region4: #{basic_block_forward.6} parent=0 // pred_region
    _
  $region5: #{basic_block_forward.6} parent=0 // pred_fallthru
    _
  // Predicated region
  $region6: #{basic_block_forward.6} parent=0 // pred_check
    _
  $region7: #{basic_block_forward.6} parent=0 // pred_check_branch
    %12 = sbr.rel (0) target = $region9
  $region8: #{basic_block_forward.6} parent=0 // pred_region
    _
  $region9: #{basic_block_forward.6} parent=0 // pred_fallthru
    _
  %v14 = vld [vmem:[%s0] sm:$0xf]
  %v15 = vld [vmem:[%s0 + $0x4] sm:$0xf]
  %v16 = vld [vmem:[%s0 + $0x8] sm:$0xf]
  %v17 = vld [vmem:[%s0 + $0xc] sm:$0xf]
  %v18 = vld [vmem:[%s0 + $0x10] sm:$0xf]
  %v19 = vld [vmem:[%s0 + $0x14] sm:$0xf]
  %v20 = vld [vmem:[%s0 + $0x18] sm:$0xf]
  %v21 = vld [vmem:[%s0 + $0x1c] sm:$0xf]
  %v22 = vld [vmem:[%s0 + $0x20] sm:$0xf]
  %v23 = vld [vmem:[%s0 + $0x24] sm:$0xf]
  %v24 = vld [vmem:[%s0 + $0x28] sm:$0xf]
  %v25 = vld [vmem:[%s0 + $0x2c] sm:$0xf]
  %v26 = vld [vmem:[%s0 + $0x30] sm:$0xf]
  %v27 = vld [vmem:[%s0 + $0x34] sm:$0xf]
  %v28 = vld [vmem:[%s0 + $0x38] sm:$0xf]
  %v29 = vld [vmem:[%s0 + $0x3c] sm:$0xf]
  %v30 = vld [vmem:[%s1] sm:$0xf]
  %v31 = vld [vmem:[%s1 + $0x4] sm:$0xf]
  %v32 = vld [vmem:[%s1 + $0x8] sm:$0xf]
  %v33 = vld [vmem:[%s1 + $0xc] sm:$0xf]
  %v34 = vld [vmem:[%s1 + $0x10] sm:$0xf]
  %v35 = vld [vmem:[%s1 + $0x14] sm:$0xf]
  %v36 = vld [vmem:[%s1 + $0x18] sm:$0xf]
  %v37 = vld [vmem:[%s1 + $0x1c] sm:$0xf]
  %v38 = vld [vmem:[%s1 + $0x20] sm:$0xf]
  %v39 = vld [vmem:[%s1 + $0x24] sm:$0xf]
  %v40 = vld [vmem:[%s1 + $0x28] sm:$0xf]
  %v41 = vld [vmem:[%s1 + $0x2c] sm:$0xf]
  %v42 = vld [vmem:[%s1 + $0x30] sm:$0xf]
  %v43 = vld [vmem:[%s1 + $0x34] sm:$0xf]
  %v44 = vld [vmem:[%s1 + $0x38] sm:$0xf]
  %v45 = vld [vmem:[%s1 + $0x3c] sm:$0xf]
  %v62 = vunpack.c.l.b16 %v14
  %v63 = vunpack.c.l.b16 %v15
  %v64 = vunpack.c.l.b16 %v16
  %v65 = vunpack.c.l.b16 %v17
  %v66 = vunpack.c.l.b16 %v18
  %v67 = vunpack.c.l.b16 %v19
  %v68 = vunpack.c.l.b16 %v20
  %v69 = vunpack.c.l.b16 %v21
  %v70 = vunpack.c.l.b16 %v22
  %v71 = vunpack.c.l.b16 %v23
  %v72 = vunpack.c.l.b16 %v24
  %v73 = vunpack.c.l.b16 %v25
  %v74 = vunpack.c.l.b16 %v26
  %v75 = vunpack.c.l.b16 %v27
  %v76 = vunpack.c.l.b16 %v28
  %v77 = vunpack.c.l.b16 %v29
  %v78 = vpack.c.b16 %v63, %v62
  %v79 = vpack.c.b16 %v65, %v64
  %v80 = vpack.c.b16 %v67, %v66
  %v81 = vpack.c.b16 %v69, %v68
  %v82 = vpack.c.b16 %v71, %v70
  %v83 = vpack.c.b16 %v73, %v72
  %v84 = vpack.c.b16 %v75, %v74
  %v85 = vpack.c.b16 %v77, %v76
  %v110 = vunpack.c.l.b16 %v30
  %v111 = vunpack.c.l.b16 %v31
  %v112 = vunpack.c.l.b16 %v32
  %v113 = vunpack.c.l.b16 %v33
  %v114 = vunpack.c.l.b16 %v34
  %v115 = vunpack.c.l.b16 %v35
  %v116 = vunpack.c.l.b16 %v36
  %v117 = vunpack.c.l.b16 %v37
  %v118 = vunpack.c.l.b16 %v38
  %v119 = vunpack.c.l.b16 %v39
  %v120 = vunpack.c.l.b16 %v40
  %v121 = vunpack.c.l.b16 %v41
  %v122 = vunpack.c.l.b16 %v42
  %v123 = vunpack.c.l.b16 %v43
  %v124 = vunpack.c.l.b16 %v44
  %v125 = vunpack.c.l.b16 %v45
  %v126 = vpack.c.b16 %v111, %v110
  %v127 = vpack.c.b16 %v113, %v112
  %v128 = vpack.c.b16 %v115, %v114
  %v129 = vpack.c.b16 %v117, %v116
  %v130 = vpack.c.b16 %v119, %v118
  %v131 = vpack.c.b16 %v121, %v120
  %v132 = vpack.c.b16 %v123, %v122
  %v133 = vpack.c.b16 %v125, %v124
  %142 = vmatprep.subr.bf16.mxu0 0
  %143 = vmatpush1.bf16.msra.mxu0 %v133
  %144 = vmatprep.subr.bf16.mxu0 0
  %145 = vmatpush1.bf16.msra.mxu0 %v132
  %146 = vmatprep.subr.bf16.mxu0 0
  %147 = vmatpush1.bf16.msra.mxu0 %v131
  %148 = vmatprep.subr.bf16.mxu0 0
  %149 = vmatpush1.bf16.msra.mxu0 %v130
  %150 = vmatprep.subr.bf16.mxu0 0
  %151 = vmatpush1.bf16.msra.mxu0 %v129
  %152 = vmatprep.subr.bf16.mxu0 0
  %153 = vmatpush1.bf16.msra.mxu0 %v128
  %154 = vmatprep.subr.bf16.mxu0 0
  %155 = vmatpush1.bf16.msra.mxu0 %v127
  %156 = vmatprep.subr.bf16.mxu0 0
  %157 = vmatpush1.bf16.msra.mxu0 %v126
  %158 = vmatprep.subr.bf16.mxu0 0
  %159 = vmatpush2.bf16.msra.mxu0 0
  %160 = vmatprep.subr.bf16.mxu0 0
  %161 = vmatpush2.bf16.msra.mxu0 0
  %162 = vmatprep.subr.bf16.mxu0 0
  %163 = vmatpush2.bf16.msra.mxu0 0
  %164 = vmatprep.subr.bf16.mxu0 0
  %165 = vmatpush2.bf16.msra.mxu0 0
  %166 = vmatprep.subr.bf16.mxu0 0
  %167 = vmatpush2.bf16.msra.mxu0 0
  %168 = vmatprep.subr.bf16.mxu0 0
  %169 = vmatpush2.bf16.msra.mxu0 0
  %170 = vmatprep.subr.bf16.mxu0 0
  %171 = vmatpush2.bf16.msra.mxu0 0
  %172 = vmatprep.subr.bf16.mxu0 0
  %173 = vmatpush2.bf16.msra.mxu0 0
  %174 = vmatprep.mubr.bf16.mxu0 0
  %175 = vmatmul.mubr.bf16.gmra.mxu0 %v78
  %v176 = vpop.f32.mrf.mxu0
  %v177 = vadd.f32 0.0, %v176
  %v178 = vpop.f32.mrf.mxu0
  %v179 = vpop.f32.mrf.mxu0
  %v180 = vadd.f32 0.0, %v179
  %v181 = vpop.f32.mrf.mxu0
  %182 = vmatprep.mubr.bf16.mxu0 0
  %183 = vmatmul.mubr.bf16.gmra.mxu0 %v79
  %v184 = vpop.f32.mrf.mxu0
  %v185 = vadd.f32 0.0, %v184
  %v186 = vpop.f32.mrf.mxu0
  %v187 = vpop.f32.mrf.mxu0
  %v188 = vadd.f32 0.0, %v187
  %v189 = vpop.f32.mrf.mxu0
  %190 = vmatprep.mubr.bf16.mxu0 0
  %191 = vmatmul.mubr.bf16.gmra.mxu0 %v80
  %v192 = vpop.f32.mrf.mxu0
  %v193 = vadd.f32 0.0, %v192
  %v194 = vpop.f32.mrf.mxu0
  %v195 = vpop.f32.mrf.mxu0
  %v196 = vadd.f32 0.0, %v195
  %v197 = vpop.f32.mrf.mxu0
  %198 = vmatprep.mubr.bf16.mxu0 0
  %199 = vmatmul.mubr.bf16.gmra.mxu0 %v81
  %v200 = vpop.f32.mrf.mxu0
  %v201 = vadd.f32 0.0, %v200
  %v202 = vpop.f32.mrf.mxu0
  %v203 = vpop.f32.mrf.mxu0
  %v204 = vadd.f32 0.0, %v203
  %v205 = vpop.f32.mrf.mxu0
  %206 = vmatprep.mubr.bf16.mxu0 0
  %207 = vmatmul.mubr.bf16.gmra.mxu0 %v82
  %v208 = vpop.f32.mrf.mxu0
  %v209 = vadd.f32 0.0, %v208
  %v210 = vpop.f32.mrf.mxu0
  %v211 = vpop.f32.mrf.mxu0
  %v212 = vadd.f32 0.0, %v211
  %v213 = vpop.f32.mrf.mxu0
  %214 = vmatprep.mubr.bf16.mxu0 0
  %215 = vmatmul.mubr.bf16.gmra.mxu0 %v83
  %v216 = vpop.f32.mrf.mxu0
  %v217 = vadd.f32 0.0, %v216
  %v218 = vpop.f32.mrf.mxu0
  %v219 = vpop.f32.mrf.mxu0
  %v220 = vadd.f32 0.0, %v219
  %v221 = vpop.f32.mrf.mxu0
  %222 = vmatprep.mubr.bf16.mxu0 0
  %223 = vmatmul.mubr.bf16.gmra.mxu0 %v84
  %v224 = vpop.f32.mrf.mxu0
  %v225 = vadd.f32 0.0, %v224
  %v226 = vpop.f32.mrf.mxu0
  %v227 = vpop.f32.mrf.mxu0
  %v228 = vadd.f32 0.0, %v227
  %v229 = vpop.f32.mrf.mxu0
  %230 = vmatprep.mubr.bf16.mxu0 0
  %231 = vmatmul.mubr.bf16.gmra.mxu0 %v85
  %v232 = vpop.f32.mrf.mxu0
  %v233 = vadd.f32 0.0, %v232
  %v234 = vpop.f32.mrf.mxu0
  %v235 = vpop.f32.mrf.mxu0
  %v236 = vadd.f32 0.0, %v235
  %v237 = vpop.f32.mrf.mxu0
  %238 = vdwg.mxu0
  %v239 = vpack.c.bf16 %v180, %v177
  %v240 = vpack.c.bf16 %v188, %v185
  %v241 = vpack.c.bf16 %v196, %v193
  %v242 = vpack.c.bf16 %v204, %v201
  %v243 = vpack.c.bf16 %v212, %v209
  %v244 = vpack.c.bf16 %v220, %v217
  %v245 = vpack.c.bf16 %v228, %v225
  %v246 = vpack.c.bf16 %v236, %v233
  %v255 = vunpack.c.l.b16 %v239
  %v256 = vunpack.c.h.b16 %v239
  %v257 = vunpack.c.l.b16 %v240
  %v258 = vunpack.c.h.b16 %v240
  %v259 = vunpack.c.l.b16 %v241
  %v260 = vunpack.c.h.b16 %v241
  %v261 = vunpack.c.l.b16 %v242
  %v262 = vunpack.c.h.b16 %v242
  %v263 = vunpack.c.l.b16 %v243
  %v264 = vunpack.c.h.b16 %v243
  %v265 = vunpack.c.l.b16 %v244
  %v266 = vunpack.c.h.b16 %v244
  %v267 = vunpack.c.l.b16 %v245
  %v268 = vunpack.c.h.b16 %v245
  %v269 = vunpack.c.l.b16 %v246
  %v270 = vunpack.c.h.b16 %v246
  %v271 = vpack.c.b16 %v255, %v255
  %v272 = vpack.c.b16 %v256, %v256
  %v273 = vpack.c.b16 %v257, %v257
  %v274 = vpack.c.b16 %v258, %v258
  %v275 = vpack.c.b16 %v259, %v259
  %v276 = vpack.c.b16 %v260, %v260
  %v277 = vpack.c.b16 %v261, %v261
  %v278 = vpack.c.b16 %v262, %v262
  %v279 = vpack.c.b16 %v263, %v263
  %v280 = vpack.c.b16 %v264, %v264
  %v281 = vpack.c.b16 %v265, %v265
  %v282 = vpack.c.b16 %v266, %v266
  %v283 = vpack.c.b16 %v267, %v267
  %v284 = vpack.c.b16 %v268, %v268
  %v285 = vpack.c.b16 %v269, %v269
  %v286 = vpack.c.b16 %v270, %v270
  %303 = vst [vmem:[%s2] sm:$0xf] %v271
  %304 = vst [vmem:[%s2 + $0x4] sm:$0xf] %v272
  %305 = vst [vmem:[%s2 + $0x8] sm:$0xf] %v273
  %306 = vst [vmem:[%s2 + $0xc] sm:$0xf] %v274
  %307 = vst [vmem:[%s2 + $0x10] sm:$0xf] %v275
  %308 = vst [vmem:[%s2 + $0x14] sm:$0xf] %v276
  %309 = vst [vmem:[%s2 + $0x18] sm:$0xf] %v277
  %310 = vst [vmem:[%s2 + $0x1c] sm:$0xf] %v278
  %311 = vst [vmem:[%s2 + $0x20] sm:$0xf] %v279
  %312 = vst [vmem:[%s2 + $0x24] sm:$0xf] %v280
  %313 = vst [vmem:[%s2 + $0x28] sm:$0xf] %v281
  %314 = vst [vmem:[%s2 + $0x2c] sm:$0xf] %v282
  %315 = vst [vmem:[%s2 + $0x30] sm:$0xf] %v283
  %316 = vst [vmem:[%s2 + $0x34] sm:$0xf] %v284
  %317 = vst [vmem:[%s2 + $0x38] sm:$0xf] %v285
  %318 = vst [vmem:[%s2 + $0x3c] sm:$0xf] %v286
  %v319 = vadd.f32 %v177, %v180
  %v320 = vadd.f32 %v319, %v185
  %v321 = vadd.f32 %v320, %v188
  %v322 = vadd.f32 %v321, %v193
  %v323 = vadd.f32 %v322, %v196
  %v324 = vadd.f32 %v323, %v201
  %v325 = vadd.f32 %v324, %v204
  %v326 = vadd.f32 %v325, %v209
  %v327 = vadd.f32 %v326, %v212
  %v328 = vadd.f32 %v327, %v217
  %v329 = vadd.f32 %v328, %v220
  %v330 = vadd.f32 %v329, %v225
  %v331 = vadd.f32 %v330, %v228
  %v332 = vadd.f32 %v331, %v233
  %v333 = vadd.f32 %v332, %v236
  %v334 = vrot.slane %v333, 4
  %v335 = vadd.f32 %v333, %v334
  %v336 = vrot.slane %v335, 2
  %v337 = vadd.f32 %v335, %v336
  %v338 = vrot.slane %v337, 1
  %v339 = vadd.f32 %v337, %v338
  %v340 = vmul.f32 %v177, %v177
  %v341 = vmul.f32 %v180, %v180
  %v342 = vmul.f32 %v185, %v185
  %v343 = vmul.f32 %v188, %v188
  %v344 = vmul.f32 %v193, %v193
  %v345 = vmul.f32 %v196, %v196
  %v346 = vmul.f32 %v201, %v201
  %v347 = vmul.f32 %v204, %v204
  %v348 = vmul.f32 %v209, %v209
  %v349 = vmul.f32 %v212, %v212
  %v350 = vmul.f32 %v217, %v217
  %v351 = vmul.f32 %v220, %v220
  %v352 = vmul.f32 %v225, %v225
  %v353 = vmul.f32 %v228, %v228
  %v354 = vmul.f32 %v233, %v233
  %v355 = vmul.f32 %v236, %v236
  %v356 = vadd.f32 %v340, %v341
  %v357 = vadd.f32 %v356, %v342
  %v358 = vadd.f32 %v357, %v343
  %v359 = vadd.f32 %v358, %v344
  %v360 = vadd.f32 %v359, %v345
  %v361 = vadd.f32 %v360, %v346
  %v362 = vadd.f32 %v361, %v347
  %v363 = vadd.f32 %v362, %v348
  %v364 = vadd.f32 %v363, %v349
  %v365 = vadd.f32 %v364, %v350
  %v366 = vadd.f32 %v365, %v351
  %v367 = vadd.f32 %v366, %v352
  %v368 = vadd.f32 %v367, %v353
  %v369 = vadd.f32 %v368, %v354
  %v370 = vadd.f32 %v369, %v355
  %v371 = vrot.slane %v370, 4
  %v372 = vadd.f32 %v370, %v371
  %v373 = vrot.slane %v372, 2
  %v374 = vadd.f32 %v372, %v373
  %v375 = vrot.slane %v374, 1
  %v376 = vadd.f32 %v374, %v375
  %vm377 = vcmask 1040384
  %v378 = vsel %vm377, %v339, %v376
  %379 = vst [vmem:[%s3] sm:$0x3] %v378
  // Predicated region
  $region10: #{basic_block_forward.6} parent=0 // pred_check
    _
  $region11: #{basic_block_forward.6} parent=0 // pred_check_branch
    %381 = sbr.rel (0) target = $region13
  $region12: #{basic_block_forward.6} parent=0 // pred_region
    _
  $region13: #{basic_block_forward.6} parent=0 // pred_fallthru
    _
  // Predicated region
  $region14: #{basic_block_forward.6} parent=0 // pred_check
    _
  $region15: #{basic_block_forward.6} parent=0 // pred_check_branch
    %383 = sbr.rel (0) target = $region17
  $region16: #{basic_block_forward.6} parent=0 // pred_region
    _
  $region17: #{basic_block_forward.6} parent=0 // pred_fallthru
    _
  // Predicated region
  $region18: #{basic_block_forward.6} parent=0 // pred_check
    _
  $region19: #{basic_block_forward.6} parent=0 // pred_check_branch
    %385 = sbr.rel (0) target = $region21
  $region20: #{basic_block_forward.6} parent=0 // pred_region
    _
  $region21: #{basic_block_forward.6} parent=0 // pred_fallthru
    _
  // Predicated region
  $region22: #{basic_block_forward.6} parent=0 // pred_check
    _
  $region23: #{basic_block_forward.6} parent=0 // pred_check_branch
    %387 = sbr.rel (0) target = $region25
  $region24: #{basic_block_forward.6} parent=0 // pred_region
    _
  $region25: #{basic_block_forward.6} parent=0 // pred_fallthru
    _

// kernel: basic_block_forward.7
$region0: #{basic_block_forward.7}
  #allocation0 [shape = 'u32[]', space=smem, size = 0x4, offset = 0x4, fixed_abs, tag = 'smem constant byte address 0x4 - core index']
  #allocation1 [shape = 'u32[144,128]{1,0:T(1,128)}', space=vmem, size = 0x12000, scoped, tag = 'internal scratch']
  %s0 = inlined_call_operand.vmem [shape: bf16[128,128], index: 0, kind: input, shape index: {}]
  %s1 = inlined_call_operand.vmem [shape: bf16[128,128], index: 1, kind: input, shape index: {}]
  %s2 = inlined_call_operand.vmem [shape: f32[1,128], index: 2, kind: input, shape index: {}]
  %s3 = inlined_call_operand.vmem [shape: f32[1,128], index: 3, kind: input, shape index: {}]
  %s4 = inlined_call_operand.vmem [shape: f32[1,128], index: 4, kind: input, shape index: {}]
  %s5 = inlined_call_operand.vmem [shape: f32[1,128], index: 5, kind: input, shape index: {}]
  %s6 = inlined_call_operand.vmem [shape: bf16[128,128], index: 6, kind: output, shape index: {}]
  %s7 = sld [smem:[#allocation0]]
  $region34: #{basic_block_forward.7} parent=0
    _
  %s9 = ssub.s32 1, %s7
  %s10 = scalar_select 0, %s9, %s7
  // Predicated region
  $region2: #{basic_block_forward.7} parent=0 // pred_check
    _
  $region3: #{basic_block_forward.7} parent=0 // pred_check_branch
    %12 = sbr.rel (0) target = $region5
  $region4: #{basic_block_forward.7} parent=0 // pred_region
    _
  $region5: #{basic_block_forward.7} parent=0 // pred_fallthru
    _
  // Predicated region
  $region6: #{basic_block_forward.7} parent=0 // pred_check
    _
  $region7: #{basic_block_forward.7} parent=0 // pred_check_branch
    %14 = sbr.rel (0) target = $region9
  $region8: #{basic_block_forward.7} parent=0 // pred_region
    _
  $region9: #{basic_block_forward.7} parent=0 // pred_fallthru
    _
  // Predicated region
  $region10: #{basic_block_forward.7} parent=0 // pred_check
    _
  $region11: #{basic_block_forward.7} parent=0 // pred_check_branch
    %16 = sbr.rel (0) target = $region13
  $region12: #{basic_block_forward.7} parent=0 // pred_region
    _
  $region13: #{basic_block_forward.7} parent=0 // pred_fallthru
    _
  // Predicated region
  $region14: #{basic_block_forward.7} parent=0 // pred_check
    _
  $region15: #{basic_block_forward.7} parent=0 // pred_check_branch
    %18 = sbr.rel (0) target = $region17
  $region16: #{basic_block_forward.7} parent=0 // pred_region
    _
  $region17: #{basic_block_forward.7} parent=0 // pred_fallthru
    _
  // Predicated region
  $region18: #{basic_block_forward.7} parent=0 // pred_check
    _
  $region19: #{basic_block_forward.7} parent=0 // pred_check_branch
    %20 = sbr.rel (0) target = $region21
  $region20: #{basic_block_forward.7} parent=0 // pred_region
    _
  $region21: #{basic_block_forward.7} parent=0 // pred_fallthru
    _
  // Predicated region
  $region22: #{basic_block_forward.7} parent=0 // pred_check
    _
  $region23: #{basic_block_forward.7} parent=0 // pred_check_branch
    %22 = sbr.rel (0) target = $region25
  $region24: #{basic_block_forward.7} parent=0 // pred_region
    _
  $region25: #{basic_block_forward.7} parent=0 // pred_fallthru
    _
  %v23 = vld [vmem:[%s0] sm:$0xf]
  %v24 = vld [vmem:[%s0 + $0x4] sm:$0xf]
  %v25 = vld [vmem:[%s0 + $0x8] sm:$0xf]
  %v26 = vld [vmem:[%s0 + $0xc] sm:$0xf]
  %v27 = vld [vmem:[%s0 + $0x10] sm:$0xf]
  %v28 = vld [vmem:[%s0 + $0x14] sm:$0xf]
  %v29 = vld [vmem:[%s0 + $0x18] sm:$0xf]
  %v30 = vld [vmem:[%s0 + $0x1c] sm:$0xf]
  %v31 = vld [vmem:[%s0 + $0x20] sm:$0xf]
  %v32 = vld [vmem:[%s0 + $0x24] sm:$0xf]
  %v33 = vld [vmem:[%s0 + $0x28] sm:$0xf]
  %v34 = vld [vmem:[%s0 + $0x2c] sm:$0xf]
  %v35 = vld [vmem:[%s0 + $0x30] sm:$0xf]
  %v36 = vld [vmem:[%s0 + $0x34] sm:$0xf]
  %v37 = vld [vmem:[%s0 + $0x38] sm:$0xf]
  %v38 = vld [vmem:[%s0 + $0x3c] sm:$0xf]
  %v39 = vunpack.c.l.bf16 %v23
  %v40 = vunpack.c.l.bf16 %v24
  %v41 = vunpack.c.l.bf16 %v25
  %v42 = vunpack.c.l.bf16 %v26
  %v43 = vunpack.c.l.bf16 %v27
  %v44 = vunpack.c.l.bf16 %v28
  %v45 = vunpack.c.l.bf16 %v29
  %v46 = vunpack.c.l.bf16 %v30
  %v47 = vunpack.c.l.bf16 %v31
  %v48 = vunpack.c.l.bf16 %v32
  %v49 = vunpack.c.l.bf16 %v33
  %v50 = vunpack.c.l.bf16 %v34
  %v51 = vunpack.c.l.bf16 %v35
  %v52 = vunpack.c.l.bf16 %v36
  %v53 = vunpack.c.l.bf16 %v37
  %v54 = vunpack.c.l.bf16 %v38
  %v55 = vld [vmem:[%s2] sm:$0x1]
  %v57 = vlaneseq
  %v58 = vshrl.u32 %v57, 7
  %v59 = vsub.s32 0, %v58
  %v60 = vrot.slane %v55, %v59
  %v62 = vmul.f32 %v39, %v60
  %v63 = vmul.f32 %v40, %v60
  %v64 = vmul.f32 %v41, %v60
  %v65 = vmul.f32 %v42, %v60
  %v66 = vmul.f32 %v43, %v60
  %v67 = vmul.f32 %v44, %v60
  %v68 = vmul.f32 %v45, %v60
  %v69 = vmul.f32 %v46, %v60
  %v70 = vmul.f32 %v47, %v60
  %v71 = vmul.f32 %v48, %v60
  %v72 = vmul.f32 %v49, %v60
  %v73 = vmul.f32 %v50, %v60
  %v74 = vmul.f32 %v51, %v60
  %v75 = vmul.f32 %v52, %v60
  %v76 = vmul.f32 %v53, %v60
  %v77 = vmul.f32 %v54, %v60
  %v78 = vld [vmem:[%s3] sm:$0x1]
  %v80 = vlaneseq
  %v81 = vshrl.u32 %v80, 7
  %v82 = vsub.s32 0, %v81
  %v83 = vrot.slane %v78, %v82
  %v85 = vadd.f32 %v62, %v83
  %v86 = vadd.f32 %v63, %v83
  %v87 = vadd.f32 %v64, %v83
  %v88 = vadd.f32 %v65, %v83
  %v89 = vadd.f32 %v66, %v83
  %v90 = vadd.f32 %v67, %v83
  %v91 = vadd.f32 %v68, %v83
  %v92 = vadd.f32 %v69, %v83
  %v93 = vadd.f32 %v70, %v83
  %v94 = vadd.f32 %v71, %v83
  %v95 = vadd.f32 %v72, %v83
  %v96 = vadd.f32 %v73, %v83
  %v97 = vadd.f32 %v74, %v83
  %v98 = vadd.f32 %v75, %v83
  %v99 = vadd.f32 %v76, %v83
  %v100 = vadd.f32 %v77, %v83
  %v101 = vld [vmem:[%s1] sm:$0xf]
  %v102 = vld [vmem:[%s1 + $0x4] sm:$0xf]
  %v103 = vld [vmem:[%s1 + $0x8] sm:$0xf]
  %v104 = vld [vmem:[%s1 + $0xc] sm:$0xf]
  %v105 = vld [vmem:[%s1 + $0x10] sm:$0xf]
  %v106 = vld [vmem:[%s1 + $0x14] sm:$0xf]
  %v107 = vld [vmem:[%s1 + $0x18] sm:$0xf]
  %v108 = vld [vmem:[%s1 + $0x1c] sm:$0xf]
  %v109 = vld [vmem:[%s1 + $0x20] sm:$0xf]
  %v110 = vld [vmem:[%s1 + $0x24] sm:$0xf]
  %v111 = vld [vmem:[%s1 + $0x28] sm:$0xf]
  %v112 = vld [vmem:[%s1 + $0x2c] sm:$0xf]
  %v113 = vld [vmem:[%s1 + $0x30] sm:$0xf]
  %v114 = vld [vmem:[%s1 + $0x34] sm:$0xf]
  %v115 = vld [vmem:[%s1 + $0x38] sm:$0xf]
  %v116 = vld [vmem:[%s1 + $0x3c] sm:$0xf]
  %v117 = vunpack.c.l.bf16 %v101
  %v118 = vunpack.c.l.bf16 %v102
  %v119 = vunpack.c.l.bf16 %v103
  %v120 = vunpack.c.l.bf16 %v104
  %v121 = vunpack.c.l.bf16 %v105
  %v122 = vunpack.c.l.bf16 %v106
  %v123 = vunpack.c.l.bf16 %v107
  %v124 = vunpack.c.l.bf16 %v108
  %v125 = vunpack.c.l.bf16 %v109
  %v126 = vunpack.c.l.bf16 %v110
  %v127 = vunpack.c.l.bf16 %v111
  %v128 = vunpack.c.l.bf16 %v112
  %v129 = vunpack.c.l.bf16 %v113
  %v130 = vunpack.c.l.bf16 %v114
  %v131 = vunpack.c.l.bf16 %v115
  %v132 = vunpack.c.l.bf16 %v116
  %v133 = vld [vmem:[%s4] sm:$0x1]
  %v135 = vlaneseq
  %v136 = vshrl.u32 %v135, 7
  %v137 = vsub.s32 0, %v136
  %v138 = vrot.slane %v133, %v137
  %v140 = vmul.f32 %v117, %v138
  %v141 = vmul.f32 %v118, %v138
  %v142 = vmul.f32 %v119, %v138
  %v143 = vmul.f32 %v120, %v138
  %v144 = vmul.f32 %v121, %v138
  %v145 = vmul.f32 %v122, %v138
  %v146 = vmul.f32 %v123, %v138
  %v147 = vmul.f32 %v124, %v138
  %v148 = vmul.f32 %v125, %v138
  %v149 = vmul.f32 %v126, %v138
  %v150 = vmul.f32 %v127, %v138
  %v151 = vmul.f32 %v128, %v138
  %v152 = vmul.f32 %v129, %v138
  %v153 = vmul.f32 %v130, %v138
  %v154 = vmul.f32 %v131, %v138
  %v155 = vmul.f32 %v132, %v138
  %v156 = vld [vmem:[%s5] sm:$0x1]
  %v158 = vlaneseq
  %v159 = vshrl.u32 %v158, 7
  %v160 = vsub.s32 0, %v159
  %v161 = vrot.slane %v156, %v160
  %v163 = vadd.f32 %v140, %v161
  %v164 = vadd.f32 %v141, %v161
  %v165 = vadd.f32 %v142, %v161
  %v166 = vadd.f32 %v143, %v161
  %v167 = vadd.f32 %v144, %v161
  %v168 = vadd.f32 %v145, %v161
  %v169 = vadd.f32 %v146, %v161
  %v170 = vadd.f32 %v147, %v161
  %v171 = vadd.f32 %v148, %v161
  %v172 = vadd.f32 %v149, %v161
  %v173 = vadd.f32 %v150, %v161
  %v174 = vadd.f32 %v151, %v161
  %v175 = vadd.f32 %v152, %v161
  %v176 = vadd.f32 %v153, %v161
  %v177 = vadd.f32 %v154, %v161
  %v178 = vadd.f32 %v155, %v161
  %v179 = vadd.f32 %v85, %v163
  %v180 = vadd.f32 %v86, %v164
  %v181 = vadd.f32 %v87, %v165
  %v182 = vadd.f32 %v88, %v166
  %v183 = vadd.f32 %v89, %v167
  %v184 = vadd.f32 %v90, %v168
  %v185 = vadd.f32 %v91, %v169
  %v186 = vadd.f32 %v92, %v170
  %v187 = vadd.f32 %v93, %v171
  %v188 = vadd.f32 %v94, %v172
  %v189 = vadd.f32 %v95, %v173
  %v190 = vadd.f32 %v96, %v174
  %v191 = vadd.f32 %v97, %v175
  %v192 = vadd.f32 %v98, %v176
  %v193 = vadd.f32 %v99, %v177
  %v194 = vadd.f32 %v100, %v178
  %v195 = vmax.f32 %v179, 0.0
  %v196 = vmax.f32 %v180, 0.0
  %v197 = vmax.f32 %v181, 0.0
  %v198 = vmax.f32 %v182, 0.0
  %v199 = vmax.f32 %v183, 0.0
  %v200 = vmax.f32 %v184, 0.0
  %v201 = vmax.f32 %v185, 0.0
  %v202 = vmax.f32 %v186, 0.0
  %v203 = vmax.f32 %v187, 0.0
  %v204 = vmax.f32 %v188, 0.0
  %v205 = vmax.f32 %v189, 0.0
  %v206 = vmax.f32 %v190, 0.0
  %v207 = vmax.f32 %v191, 0.0
  %v208 = vmax.f32 %v192, 0.0
  %v209 = vmax.f32 %v193, 0.0
  %v210 = vmax.f32 %v194, 0.0
  %v211 = vpack.c.bf16 %v196, %v195
  %v212 = vpack.c.bf16 %v198, %v197
  %v213 = vpack.c.bf16 %v200, %v199
  %v214 = vpack.c.bf16 %v202, %v201
  %v215 = vpack.c.bf16 %v204, %v203
  %v216 = vpack.c.bf16 %v206, %v205
  %v217 = vpack.c.bf16 %v208, %v207
  %v218 = vpack.c.bf16 %v210, %v209
  %v227 = vunpack.c.l.b16 %v211
  %v228 = vunpack.c.h.b16 %v211
  %v229 = vunpack.c.l.b16 %v212
  %v230 = vunpack.c.h.b16 %v212
  %v231 = vunpack.c.l.b16 %v213
  %v232 = vunpack.c.h.b16 %v213
  %v233 = vunpack.c.l.b16 %v214
  %v234 = vunpack.c.h.b16 %v214
  %v235 = vunpack.c.l.b16 %v215
  %v236 = vunpack.c.h.b16 %v215
  %v237 = vunpack.c.l.b16 %v216
  %v238 = vunpack.c.h.b16 %v216
  %v239 = vunpack.c.l.b16 %v217
  %v240 = vunpack.c.h.b16 %v217
  %v241 = vunpack.c.l.b16 %v218
  %v242 = vunpack.c.h.b16 %v218
  %v243 = vpack.c.b16 %v227, %v227
  %v244 = vpack.c.b16 %v228, %v228
  %v245 = vpack.c.b16 %v229, %v229
  %v246 = vpack.c.b16 %v230, %v230
  %v247 = vpack.c.b16 %v231, %v231
  %v248 = vpack.c.b16 %v232, %v232
  %v249 = vpack.c.b16 %v233, %v233
  %v250 = vpack.c.b16 %v234, %v234
  %v251 = vpack.c.b16 %v235, %v235
  %v252 = vpack.c.b16 %v236, %v236
  %v253 = vpack.c.b16 %v237, %v237
  %v254 = vpack.c.b16 %v238, %v238
  %v255 = vpack.c.b16 %v239, %v239
  %v256 = vpack.c.b16 %v240, %v240
  %v257 = vpack.c.b16 %v241, %v241
  %v258 = vpack.c.b16 %v242, %v242
  %275 = vst [vmem:[%s6] sm:$0xf] %v243
  %276 = vst [vmem:[%s6 + $0x4] sm:$0xf] %v244
  %277 = vst [vmem:[%s6 + $0x8] sm:$0xf] %v245
  %278 = vst [vmem:[%s6 + $0xc] sm:$0xf] %v246
  %279 = vst [vmem:[%s6 + $0x10] sm:$0xf] %v247
  %280 = vst [vmem:[%s6 + $0x14] sm:$0xf] %v248
  %281 = vst [vmem:[%s6 + $0x18] sm:$0xf] %v249
  %282 = vst [vmem:[%s6 + $0x1c] sm:$0xf] %v250
  %283 = vst [vmem:[%s6 + $0x20] sm:$0xf] %v251
  %284 = vst [vmem:[%s6 + $0x24] sm:$0xf] %v252
  %285 = vst [vmem:[%s6 + $0x28] sm:$0xf] %v253
  %286 = vst [vmem:[%s6 + $0x2c] sm:$0xf] %v254
  %287 = vst [vmem:[%s6 + $0x30] sm:$0xf] %v255
  %288 = vst [vmem:[%s6 + $0x34] sm:$0xf] %v256
  %289 = vst [vmem:[%s6 + $0x38] sm:$0xf] %v257
  %290 = vst [vmem:[%s6 + $0x3c] sm:$0xf] %v258
  // Predicated region
  $region26: #{basic_block_forward.7} parent=0 // pred_check
    _
  $region27: #{basic_block_forward.7} parent=0 // pred_check_branch
    %292 = sbr.rel (0) target = $region29
  $region28: #{basic_block_forward.7} parent=0 // pred_region
    _
  $region29: #{basic_block_forward.7} parent=0 // pred_fallthru
    _
  // Predicated region
  $region30: #{basic_block_forward.7} parent=0 // pred_check
    _
  $region31: #{basic_block_forward.7} parent=0 // pred_check_branch
    %294 = sbr.rel (0) target = $region33
  $region32: #{basic_block_forward.7} parent=0 // pred_region
    _
  $region33: #{basic_block_forward.7} parent=0 // pred_fallthru
    _

// kernel: basic_block_forward.5
$region0: #{basic_block_forward.5}
  #allocation0 [shape = 'u32[]', space=smem, size = 0x4, offset = 0x4, fixed_abs, tag = 'smem constant byte address 0x4 - core index']
  #allocation1 [shape = 'u32[144,128]{1,0:T(1,128)}', space=vmem, size = 0x12000, scoped, tag = 'internal scratch']
  %s0 = inlined_call_operand.vmem [shape: bf16[10,2,10,128], index: 0, kind: input, shape index: {}]
  %s1 = inlined_call_operand.vmem [shape: bf16[1152,128], index: 1, kind: input, shape index: {}]
  %s2 = inlined_call_operand.vmem [shape: f32[1,128], index: 2, kind: input, shape index: {}]
  %s3 = inlined_call_operand.vmem [shape: f32[1,128], index: 3, kind: input, shape index: {}]
  %s4 = inlined_call_operand.vmem [shape: bf16[8,2,8,128], index: 4, kind: output, shape index: {0}]
  %s5 = inlined_call_operand.vmem [shape: f32[2,2,128], index: 5, kind: output, shape index: {1}]
  %6 = xla_tuple %s4, %s5
  %s7 = sld [smem:[#allocation0]]
  $region57: #{basic_block_forward.5} parent=0
    _
  %s9 = ssub.s32 1, %s7
  %s10 = scalar_select 0, %s9, %s7
  loop: start=0, step=1, limit=4
  $region2: #{basic_block_forward.5} parent=0 // loop_pre_header
    _
  $region3: #{basic_block_forward.5} parent=0 // loop_header
    %s12 = sphi 0, %s16
    %p13 = scmp.ge.s32.totalorder %s12, 4
    %s20 = sphi 0, %s20
    %s22 = sphi 0, %s20
    %s23 = sphi 0, %s22
    %s37 = sphi 0, %s23
    %s41 = sphi 0, %s41
    %s43 = sphi 0, %s41
    %s44 = sphi 0, %s43
    %s58 = sphi 0, %s44
    %s62 = sphi 0, %s62
    %s64 = sphi 0, %s62
    %s65 = sphi 0, %s64
    %s79 = sphi 0, %s65
    %s83 = sphi 0, %s83
    %s85 = sphi 0, %s83
    %s86 = sphi 0, %s85
    %s100 = sphi 0, %s86
    %s106 = sphi 0, %s108
    %s109 = sphi 0, %s106
    %s110 = sphi 0, %s109
    %s126 = sphi 0, %s110
    %s132 = sphi 0, %s134
    %s135 = sphi 0, %s132
    %s136 = sphi 0, %s135
    %s152 = sphi 0, %s136
  $region4: #{basic_block_forward.5} parent=0 // loop_header_branch
    %15 = sbr.rel (%p13) target = $region8
  $region5: #{basic_block_forward.5} parent=0 // loop_body
    %s17 = ssub.s32 %s12, 1
    %s18 = ssub.s32 %s12, 2
    %s19 = sadd.s32 %s12, 1
    %s21 = sadd.s32 %s20, 1
    %p24 = scmp.eq.s32.totalorder %s12, 1
    %p25 = scmp.ne.s32.totalorder %s20, %s22
    %p26 = scmp.eq.s32.totalorder %s12, 0
    %p27 = por %p25, %p26
    %p28 = scmp.ne.s32.totalorder %s20, %s22
    %p29 = scmp.eq.s32.totalorder %s17, 1
    %p30 = por %p28, %p29
    %p31 = scmp.ne.s32.totalorder %s22, %s23
    %p32 = scmp.eq.s32.totalorder %s17, 0
    %p33 = por %p31, %p32
    %p34 = scmp.ne.s32.totalorder %s22, %s23
    %p35 = scmp.eq.s32.totalorder %s18, 1
    %p36 = por %p34, %p35
    %p38 = scmp.ne.s32.totalorder %s23, %s37
    %p39 = scmp.eq.s32.totalorder %s18, 0
    %p40 = por %p38, %p39
    %s42 = sadd.s32 %s41, 1
    %p45 = scmp.eq.s32.totalorder %s12, 1
    %p46 = scmp.ne.s32.totalorder %s41, %s43
    %p47 = scmp.eq.s32.totalorder %s12, 0
    %p48 = por %p46, %p47
    %p49 = scmp.ne.s32.totalorder %s41, %s43
    %p50 = scmp.eq.s32.totalorder %s17, 1
    %p51 = por %p49, %p50
    %p52 = scmp.ne.s32.totalorder %s43, %s44
    %p53 = scmp.eq.s32.totalorder %s17, 0
    %p54 = por %p52, %p53
    %p55 = scmp.ne.s32.totalorder %s43, %s44
    %p56 = scmp.eq.s32.totalorder %s18, 1
    %p57 = por %p55, %p56
    %p59 = scmp.ne.s32.totalorder %s44, %s58
    %p60 = scmp.eq.s32.totalorder %s18, 0
    %p61 = por %p59, %p60
    %s63 = sadd.s32 %s62, 1
    %p66 = scmp.eq.s32.totalorder %s12, 1
    %p67 = scmp.ne.s32.totalorder %s62, %s64
    %p68 = scmp.eq.s32.totalorder %s12, 0
    %p69 = por %p67, %p68
    %p70 = scmp.ne.s32.totalorder %s62, %s64
    %p71 = scmp.eq.s32.totalorder %s17, 1
    %p72 = por %p70, %p71
    %p73 = scmp.ne.s32.totalorder %s64, %s65
    %p74 = scmp.eq.s32.totalorder %s17, 0
    %p75 = por %p73, %p74
    %p76 = scmp.ne.s32.totalorder %s64, %s65
    %p77 = scmp.eq.s32.totalorder %s18, 1
    %p78 = por %p76, %p77
    %p80 = scmp.ne.s32.totalorder %s65, %s79
    %p81 = scmp.eq.s32.totalorder %s18, 0
    %p82 = por %p80, %p81
    %s84 = sadd.s32 %s83, 1
    %p87 = scmp.eq.s32.totalorder %s12, 1
    %p88 = scmp.ne.s32.totalorder %s83, %s85
    %p89 = scmp.eq.s32.totalorder %s12, 0
    %p90 = por %p88, %p89
    %p91 = scmp.ne.s32.totalorder %s83, %s85
    %p92 = scmp.eq.s32.totalorder %s17, 1
    %p93 = por %p91, %p92
    %p94 = scmp.ne.s32.totalorder %s85, %s86
    %p95 = scmp.eq.s32.totalorder %s17, 0
    %p96 = por %p94, %p95
    %p97 = scmp.ne.s32.totalorder %s85, %s86
    %p98 = scmp.eq.s32.totalorder %s18, 1
    %p99 = por %p97, %p98
    %p101 = scmp.ne.s32.totalorder %s86, %s100
    %p102 = scmp.eq.s32.totalorder %s18, 0
    %p103 = por %p101, %p102
    %s104 = ssub.s32 %s12, %s19
    %p105 = scmp.eq.s32.totalorder %s104, 0
    %s107 = sadd.s32 %s106, 1
    %s108 = scalar_select %p105, %s106, %s107
    %p111 = pneg %p105
    %p112 = scmp.eq.s32.totalorder %s12, 1
    %p113 = por %p111, %p112
    %p114 = scmp.ne.s32.totalorder %s106, %s109
    %p115 = scmp.eq.s32.totalorder %s12, 0
    %p116 = por %p114, %p115
    %p117 = scmp.ne.s32.totalorder %s106, %s109
    %p118 = scmp.eq.s32.totalorder %s17, 1
    %p119 = por %p117, %p118
    %p120 = scmp.ne.s32.totalorder %s109, %s110
    %p121 = scmp.eq.s32.totalorder %s17, 0
    %p122 = por %p120, %p121
    %p123 = scmp.ne.s32.totalorder %s109, %s110
    %p124 = scmp.eq.s32.totalorder %s18, 1
    %p125 = por %p123, %p124
    %p127 = scmp.ne.s32.totalorder %s110, %s126
    %p128 = scmp.eq.s32.totalorder %s18, 0
    %p129 = por %p127, %p128
    %s130 = ssub.s32 %s12, %s19
    %p131 = scmp.eq.s32.totalorder %s130, 0
    %s133 = sadd.s32 %s132, 1
    %s134 = scalar_select %p131, %s132, %s133
    %p137 = pneg %p131
    %p138 = scmp.eq.s32.totalorder %s12, 1
    %p139 = por %p137, %p138
    %p140 = scmp.ne.s32.totalorder %s132, %s135
    %p141 = scmp.eq.s32.totalorder %s12, 0
    %p142 = por %p140, %p141
    %p143 = scmp.ne.s32.totalorder %s132, %s135
    %p144 = scmp.eq.s32.totalorder %s17, 1
    %p145 = por %p143, %p144
    %p146 = scmp.ne.s32.totalorder %s135, %s136
    %p147 = scmp.eq.s32.totalorder %s17, 0
    %p148 = por %p146, %p147
    %p149 = scmp.ne.s32.totalorder %s135, %s136
    %p150 = scmp.eq.s32.totalorder %s18, 1
    %p151 = por %p149, %p150
    %p153 = scmp.ne.s32.totalorder %s136, %s152
    %p154 = scmp.eq.s32.totalorder %s18, 0
    %p155 = por %p153, %p154
    %p156 = scmp.le.s32.totalorder 1, %s12
    %p157 = scmp.lt.s32.totalorder %s12, 3
    %p158 = pnand %p156, %p157
    %p159 = pneg %p158
    // Predicated region
    $region9: #{basic_block_forward.5} parent=5 // pred_check
      _
    $region10: #{basic_block_forward.5} parent=5 // pred_check_branch
      %161 = sbr.rel (%p158) target = $region12
    $region11: #{basic_block_forward.5} parent=5 // pred_region
      %s162 = ssub.s32 %s12, 1
      // Predicated region
      $region13: #{basic_block_forward.5} parent=11 // pred_check
        %p163 = pneg %p33
      $region14: #{basic_block_forward.5} parent=11 // pred_check_branch
        %165 = sbr.rel (%p163) target = $region16
      $region15: #{basic_block_forward.5} parent=11 // pred_region
        _
      $region16: #{basic_block_forward.5} parent=11 // pred_fallthru
        _
      // Predicated region
      $region17: #{basic_block_forward.5} parent=11 // pred_check
        %p166 = pneg %p54
      $region18: #{basic_block_forward.5} parent=11 // pred_check_branch
        %168 = sbr.rel (%p166) target = $region20
      $region19: #{basic_block_forward.5} parent=11 // pred_region
        _
      $region20: #{basic_block_forward.5} parent=11 // pred_fallthru
        _
      // Predicated region
      $region21: #{basic_block_forward.5} parent=11 // pred_check
        %p169 = pneg %p75
      $region22: #{basic_block_forward.5} parent=11 // pred_check_branch
        %171 = sbr.rel (%p169) target = $region24
      $region23: #{basic_block_forward.5} parent=11 // pred_region
        _
      $region24: #{basic_block_forward.5} parent=11 // pred_fallthru
        _
      // Predicated region
      $region25: #{basic_block_forward.5} parent=11 // pred_check
        %p172 = pneg %p96
      $region26: #{basic_block_forward.5} parent=11 // pred_check_branch
        %174 = sbr.rel (%p172) target = $region28
      $region27: #{basic_block_forward.5} parent=11 // pred_region
        _
      $region28: #{basic_block_forward.5} parent=11 // pred_fallthru
        _
    $region12: #{basic_block_forward.5} parent=5 // pred_fallthru
      _
    %p175 = scmp.lt.s32.totalorder %s12, 2
    // Predicated region
    $region29: #{basic_block_forward.5} parent=5 // pred_check
      %p176 = pneg %p175
    $region30: #{basic_block_forward.5} parent=5 // pred_check_branch
      %178 = sbr.rel (%p176) target = $region32
    $region31: #{basic_block_forward.5} parent=5 // pred_region
      _
    $region32: #{basic_block_forward.5} parent=5 // pred_fallthru
      _
    %p179 = scmp.le.s32.totalorder 1, %s12
    %p180 = scmp.lt.s32.totalorder %s12, 3
    %p181 = pnand %p179, %p180
    %p182 = pneg %p181
    // Predicated region
    $region33: #{basic_block_forward.5} parent=5 // pred_check
      _
    $region34: #{basic_block_forward.5} parent=5 // pred_check_branch
      %184 = sbr.rel (%p181) target = $region36
    $region35: #{basic_block_forward.5} parent=5 // pred_region
      %s185 = ssub.s32 %s12, 1
      %p186 = pneg %p33
      %p187 = pneg %p30
      %p188 = pneg %p54
      %p189 = pneg %p51
      %p190 = pneg %p75
      %p191 = pneg %p72
      %p192 = pneg %p96
      %p193 = pneg %p93
      %p194 = pneg %p122
      %p195 = pneg %p119
      %s196 = smul.u32 4, %s17
      %p197 = scmp.lt.s32.totalorder %s196, 7
      %s198 = scalar_select %p197, %s196, 7
      %s199 = smul.addr %s198, 2
      %s200 = smul.addr %s199, 4
      %s201 = scalar_lea.vmem %s4, %s200
      %p202 = pneg %p148
      %p203 = pneg %p145
      %p204 = scmp.lt.s32.totalorder %s17, 1
      %s205 = scalar_select %p204, %s17, 1
      %s206 = smul.addr %s205, 2
      %s207 = scalar_lea.vmem %s5, %s206
      %s208 = smul.u32 4, %s17
      %p209 = scmp.lt.s32.totalorder %s208, 7
      %s210 = scalar_select %p209, %s208, 7
      %s211 = smul.addr %s210, 2
      %s212 = smul.addr %s211, 4
      %s213 = scalar_lea.vmem %s4, %s212
      %s214 = smul.u32 4, %s17
      %p215 = scmp.lt.s32.totalorder %s17, 1
      %s216 = scalar_select %p215, %s17, 1
      %s217 = smul.addr %s216, 2
      %s218 = scalar_lea.vmem %s5, %s217
      %s220 = smul.u32 %s17, 4
      %s221 = smul.u32 %s220, 4
      %s222 = smul.addr %s221, 4
      %s223 = scalar_lea.vmem %s0, %s222
      %v224 = vld [vmem:[%s223] sm:$0xf]
      %v225 = vld [vmem:[%s223 + $0x4] sm:$0x1]
      %v226 = vld [vmem:[%s223 + $0x8] sm:$0xf]
      %v227 = vld [vmem:[%s223 + $0xc] sm:$0x1]
      %v228 = vld [vmem:[%s223 + $0x10] sm:$0xf]
      %v229 = vld [vmem:[%s223 + $0x14] sm:$0x1]
      %v230 = vld [vmem:[%s223 + $0x18] sm:$0xf]
      %v231 = vld [vmem:[%s223 + $0x1c] sm:$0x1]
      %v232 = vld [vmem:[%s223 + $0x20] sm:$0xf]
      %v233 = vld [vmem:[%s223 + $0x24] sm:$0x1]
      %v234 = vld [vmem:[%s223 + $0x28] sm:$0xf]
      %v235 = vld [vmem:[%s223 + $0x2c] sm:$0x1]
      %v236 = vld [vmem:[%s223 + $0x30] sm:$0xf]
      %v237 = vld [vmem:[%s223 + $0x34] sm:$0x1]
      %v238 = vld [vmem:[%s223 + $0x38] sm:$0xf]
      %v239 = vld [vmem:[%s223 + $0x3c] sm:$0x1]
      %v240 = vld [vmem:[%s223 + $0x40] sm:$0xf]
      %v241 = vld [vmem:[%s223 + $0x44] sm:$0x1]
      %v242 = vld [vmem:[%s223 + $0x48] sm:$0xf]
      %v243 = vld [vmem:[%s223 + $0x4c] sm:$0x1]
      %v244 = vld [vmem:[%s223 + $0x50] sm:$0xf]
      %v245 = vld [vmem:[%s223 + $0x54] sm:$0x1]
      %v246 = vld [vmem:[%s223 + $0x58] sm:$0xf]
      %v247 = vld [vmem:[%s223 + $0x5c] sm:$0x1]
      %v248 = vunpack.c.l.bf16 %v224
      %v249 = vunpack.c.l.bf16 %v225
      %v250 = vunpack.c.l.bf16 %v226
      %v251 = vunpack.c.l.bf16 %v227
      %v252 = vunpack.c.l.bf16 %v228
      %v253 = vunpack.c.l.bf16 %v229
      %v254 = vunpack.c.l.bf16 %v230
      %v255 = vunpack.c.l.bf16 %v231
      %v256 = vunpack.c.l.bf16 %v232
      %v257 = vunpack.c.l.bf16 %v233
      %v258 = vunpack.c.l.bf16 %v234
      %v259 = vunpack.c.l.bf16 %v235
      %v260 = vunpack.c.l.bf16 %v236
      %v261 = vunpack.c.l.bf16 %v237
      %v262 = vunpack.c.l.bf16 %v238
      %v263 = vunpack.c.l.bf16 %v239
      %v264 = vunpack.c.l.bf16 %v240
      %v265 = vunpack.c.l.bf16 %v241
      %v266 = vunpack.c.l.bf16 %v242
      %v267 = vunpack.c.l.bf16 %v243
      %v268 = vunpack.c.l.bf16 %v244
      %v269 = vunpack.c.l.bf16 %v245
      %v270 = vunpack.c.l.bf16 %v246
      %v271 = vunpack.c.l.bf16 %v247
      %v272 = vld [vmem:[%s2] sm:$0x1]
      %v274 = vlaneseq
      %v275 = vshrl.u32 %v274, 7
      %v276 = vsub.s32 0, %v275
      %v277 = vrot.slane %v272, %v276
      %v279 = vmul.f32 %v248, %v277
      %v280 = vmul.f32 %v249, %v277
      %v281 = vmul.f32 %v250, %v277
      %v282 = vmul.f32 %v251, %v277
      %v283 = vmul.f32 %v252, %v277
      %v284 = vmul.f32 %v253, %v277
      %v285 = vmul.f32 %v254, %v277
      %v286 = vmul.f32 %v255, %v277
      %v287 = vmul.f32 %v256, %v277
      %v288 = vmul.f32 %v257, %v277
      %v289 = vmul.f32 %v258, %v277
      %v290 = vmul.f32 %v259, %v277
      %v291 = vmul.f32 %v260, %v277
      %v292 = vmul.f32 %v261, %v277
      %v293 = vmul.f32 %v262, %v277
      %v294 = vmul.f32 %v263, %v277
      %v295 = vmul.f32 %v264, %v277
      %v296 = vmul.f32 %v265, %v277
      %v297 = vmul.f32 %v266, %v277
      %v298 = vmul.f32 %v267, %v277
      %v299 = vmul.f32 %v268, %v277
      %v300 = vmul.f32 %v269, %v277
      %v301 = vmul.f32 %v270, %v277
      %v302 = vmul.f32 %v271, %v277
      %v303 = vld [vmem:[%s3] sm:$0x1]
      %v305 = vlaneseq
      %v306 = vshrl.u32 %v305, 7
      %v307 = vsub.s32 0, %v306
      %v308 = vrot.slane %v303, %v307
      %v310 = vadd.f32 %v279, %v308
      %v311 = vadd.f32 %v280, %v308
      %v312 = vadd.f32 %v281, %v308
      %v313 = vadd.f32 %v282, %v308
      %v314 = vadd.f32 %v283, %v308
      %v315 = vadd.f32 %v284, %v308
      %v316 = vadd.f32 %v285, %v308
      %v317 = vadd.f32 %v286, %v308
      %v318 = vadd.f32 %v287, %v308
      %v319 = vadd.f32 %v288, %v308
      %v320 = vadd.f32 %v289, %v308
      %v321 = vadd.f32 %v290, %v308
      %v322 = vadd.f32 %v291, %v308
      %v323 = vadd.f32 %v292, %v308
      %v324 = vadd.f32 %v293, %v308
      %v325 = vadd.f32 %v294, %v308
      %v326 = vadd.f32 %v295, %v308
      %v327 = vadd.f32 %v296, %v308
      %v328 = vadd.f32 %v297, %v308
      %v329 = vadd.f32 %v298, %v308
      %v330 = vadd.f32 %v299, %v308
      %v331 = vadd.f32 %v300, %v308
      %v332 = vadd.f32 %v301, %v308
      %v333 = vadd.f32 %v302, %v308
      %v334 = vmax.f32 %v310, 0.0
      %v335 = vmax.f32 %v311, 0.0
      %v336 = vmax.f32 %v312, 0.0
      %v337 = vmax.f32 %v313, 0.0
      %v338 = vmax.f32 %v314, 0.0
      %v339 = vmax.f32 %v315, 0.0
      %v340 = vmax.f32 %v316, 0.0
      %v341 = vmax.f32 %v317, 0.0
      %v342 = vmax.f32 %v318, 0.0
      %v343 = vmax.f32 %v319, 0.0
      %v344 = vmax.f32 %v320, 0.0
      %v345 = vmax.f32 %v321, 0.0
      %v346 = vmax.f32 %v322, 0.0
      %v347 = vmax.f32 %v323, 0.0
      %v348 = vmax.f32 %v324, 0.0
      %v349 = vmax.f32 %v325, 0.0
      %v350 = vmax.f32 %v326, 0.0
      %v351 = vmax.f32 %v327, 0.0
      %v352 = vmax.f32 %v328, 0.0
      %v353 = vmax.f32 %v329, 0.0
      %v354 = vmax.f32 %v330, 0.0
      %v355 = vmax.f32 %v331, 0.0
      %v356 = vmax.f32 %v332, 0.0
      %v357 = vmax.f32 %v333, 0.0
      %v358 = vstv %s220
      %v359 = vadd.s32 %v358, 1
      %v360 = vadd.s32 %v358, 2
      %v361 = vadd.s32 %v358, 3
      %v362 = vadd.s32 %v358, 4
      %v363 = vadd.s32 %v358, 5
      %v364 = vlaneseq
      %v365 = vshrl.u32 %v364, 7
      %v366 = vadd.s32 %v365, 8
      %vm367 = vcmp.ge.s32.totalorder %v358, 1
      %vm368 = vcmp.ge.s32.totalorder %v359, 1
      %vm369 = vcmp.ge.s32.totalorder %v360, 1
      %vm370 = vcmp.ge.s32.totalorder %v361, 1
      %vm371 = vcmp.ge.s32.totalorder %v362, 1
      %vm372 = vcmp.ge.s32.totalorder %v363, 1
      %vm373 = vcmp.le.s32.totalorder %v358, 8
      %vm374 = vcmp.le.s32.totalorder %v359, 8
      %vm375 = vcmp.le.s32.totalorder %v360, 8
      %vm376 = vcmp.le.s32.totalorder %v361, 8
      %vm377 = vcmp.le.s32.totalorder %v362, 8
      %vm378 = vcmp.le.s32.totalorder %v363, 8
      %vm379 = vmand %vm367, %vm373
      %vm380 = vmand %vm368, %vm374
      %vm381 = vmand %vm369, %vm375
      %vm382 = vmand %vm370, %vm376
      %vm383 = vmand %vm371, %vm377
      %vm384 = vmand %vm372, %vm378
      %vm385 = vcmp.ge.s32.totalorder %v365, 1
      %vm386 = vcmp.ge.s32.totalorder %v366, 1
      %vm387 = vmand %vm379, %vm385
      %vm388 = vmand %vm379, %vm386
      %vm389 = vmand %vm380, %vm385
      %vm390 = vmand %vm380, %vm386
      %vm391 = vmand %vm381, %vm385
      %vm392 = vmand %vm381, %vm386
      %vm393 = vmand %vm382, %vm385
      %vm394 = vmand %vm382, %vm386
      %vm395 = vmand %vm383, %vm385
      %vm396 = vmand %vm383, %vm386
      %vm397 = vmand %vm384, %vm385
      %vm398 = vmand %vm384, %vm386
      %vm399 = vcmp.le.s32.totalorder %v365, 8
      %vm400 = vcmp.le.s32.totalorder %v366, 8
      %vm401 = vmand %vm387, %vm399
      %vm402 = vmand %vm388, %vm400
      %vm403 = vmand %vm389, %vm399
      %vm404 = vmand %vm390, %vm400
      %vm405 = vmand %vm391, %vm399
      %vm406 = vmand %vm392, %vm400
      %vm407 = vmand %vm393, %vm399
      %vm408 = vmand %vm394, %vm400
      %vm409 = vmand %vm395, %vm399
      %vm410 = vmand %vm396, %vm400
      %vm411 = vmand %vm397, %vm399
      %vm412 = vmand %vm398, %vm400
      %v413 = vsel %vm401, %v334, 0.0
      %v414 = vsel %vm402, %v335, 0.0
      %v415 = vsel %vm401, %v336, 0.0
      %v416 = vsel %vm402, %v337, 0.0
      %v417 = vsel %vm403, %v338, 0.0
      %v418 = vsel %vm404, %v339, 0.0
      %v419 = vsel %vm403, %v340, 0.0
      %v420 = vsel %vm404, %v341, 0.0
      %v421 = vsel %vm405, %v342, 0.0
      %v422 = vsel %vm406, %v343, 0.0
      %v423 = vsel %vm405, %v344, 0.0
      %v424 = vsel %vm406, %v345, 0.0
      %v425 = vsel %vm407, %v346, 0.0
      %v426 = vsel %vm408, %v347, 0.0
      %v427 = vsel %vm407, %v348, 0.0
      %v428 = vsel %vm408, %v349, 0.0
      %v429 = vsel %vm409, %v350, 0.0
      %v430 = vsel %vm410, %v351, 0.0
      %v431 = vsel %vm409, %v352, 0.0
      %v432 = vsel %vm410, %v353, 0.0
      %v433 = vsel %vm411, %v354, 0.0
      %v434 = vsel %vm412, %v355, 0.0
      %v435 = vsel %vm411, %v356, 0.0
      %v436 = vsel %vm412, %v357, 0.0
      %v437 = vpack.c.bf16 %v414, %v413
      %v438 = vpack.c.bf16 %v416, %v415
      %v439 = vpack.c.bf16 %v418, %v417
      %v440 = vpack.c.bf16 %v420, %v419
      %v441 = vpack.c.bf16 %v422, %v421
      %v442 = vpack.c.bf16 %v424, %v423
      %v443 = vpack.c.bf16 %v426, %v425
      %v444 = vpack.c.bf16 %v428, %v427
      %v445 = vpack.c.bf16 %v430, %v429
      %v446 = vpack.c.bf16 %v432, %v431
      %v447 = vpack.c.bf16 %v434, %v433
      %v448 = vpack.c.bf16 %v436, %v435
      %v450 = vshrl.u32 %v437, 16
      %v452 = vshll.u32 %v437, 16
      %v454 = vrot.slane %v452, 1
      %v455 = vor.u32 %v450, %v454
      %v457 = vshrl.u32 %v438, 16
      %v459 = vshll.u32 %v438, 16
      %v461 = vrot.slane %v459, 1
      %v462 = vor.u32 %v457, %v461
      %v464 = vshrl.u32 %v439, 16
      %v466 = vshll.u32 %v439, 16
      %v468 = vrot.slane %v466, 1
      %v469 = vor.u32 %v464, %v468
      %v471 = vshrl.u32 %v440, 16
      %v473 = vshll.u32 %v440, 16
      %v475 = vrot.slane %v473, 1
      %v476 = vor.u32 %v471, %v475
      %v478 = vshrl.u32 %v441, 16
      %v480 = vshll.u32 %v441, 16
      %v482 = vrot.slane %v480, 1
      %v483 = vor.u32 %v478, %v482
      %v485 = vshrl.u32 %v442, 16
      %v487 = vshll.u32 %v442, 16
      %v489 = vrot.slane %v487, 1
      %v490 = vor.u32 %v485, %v489
      %v492 = vshrl.u32 %v443, 16
      %v494 = vshll.u32 %v443, 16
      %v496 = vrot.slane %v494, 1
      %v497 = vor.u32 %v492, %v496
      %v499 = vshrl.u32 %v444, 16
      %v501 = vshll.u32 %v444, 16
      %v503 = vrot.slane %v501, 1
      %v504 = vor.u32 %v499, %v503
      %v513 = vrot.slane %v437, 1
      %v514 = vrot.slane %v438, 1
      %v515 = vrot.slane %v439, 1
      %v516 = vrot.slane %v440, 1
      %v517 = vrot.slane %v441, 1
      %v518 = vrot.slane %v442, 1
      %v519 = vrot.slane %v443, 1
      %v520 = vrot.slane %v444, 1
      %v522 = vshrl.u32 %v445, 16
      %v524 = vshll.u32 %v445, 16
      %v526 = vrot.slane %v524, 1
      %v527 = vor.u32 %v522, %v526
      %v529 = vshrl.u32 %v446, 16
      %v531 = vshll.u32 %v446, 16
      %v533 = vrot.slane %v531, 1
      %v534 = vor.u32 %v529, %v533
      %v537 = vrot.slane %v445, 1
      %v538 = vrot.slane %v446, 1
      %v540 = vshrl.u32 %v447, 16
      %v542 = vshll.u32 %v447, 16
      %v544 = vrot.slane %v542, 1
      %v545 = vor.u32 %v540, %v544
      %v547 = vshrl.u32 %v448, 16
      %v549 = vshll.u32 %v448, 16
      %v551 = vrot.slane %v549, 1
      %v552 = vor.u32 %v547, %v551
      %v555 = vrot.slane %v447, 1
      %v556 = vrot.slane %v448, 1
      %v557 = vunpack.c.l.b16 %v437
      %v558 = vunpack.c.l.b16 %v455
      %v559 = vunpack.c.l.b16 %v513
      %v560 = vunpack.c.l.b16 %v439
      %v561 = vunpack.c.l.b16 %v469
      %v562 = vunpack.c.l.b16 %v515
      %v563 = vunpack.c.l.b16 %v441
      %v564 = vunpack.c.l.b16 %v483
      %v565 = vunpack.c.l.b16 %v517
      %v566 = vunpack.c.l.b16 %v438
      %v567 = vunpack.c.l.b16 %v462
      %v568 = vunpack.c.l.b16 %v514
      %v569 = vunpack.c.l.b16 %v440
      %v570 = vunpack.c.l.b16 %v476
      %v571 = vunpack.c.l.b16 %v516
      %v572 = vunpack.c.l.b16 %v442
      %v573 = vunpack.c.l.b16 %v490
      %v574 = vunpack.c.l.b16 %v518
      %v575 = vunpack.c.l.b16 %v443
      %v576 = vunpack.c.l.b16 %v497
      %v577 = vunpack.c.l.b16 %v519
      %v578 = vunpack.c.l.b16 %v444
      %v579 = vunpack.c.l.b16 %v504
      %v580 = vunpack.c.l.b16 %v520
      %v581 = vunpack.c.l.b16 %v445
      %v582 = vunpack.c.l.b16 %v527
      %v583 = vunpack.c.l.b16 %v537
      %v584 = vunpack.c.l.b16 %v446
      %v585 = vunpack.c.l.b16 %v534
      %v586 = vunpack.c.l.b16 %v538
      %v587 = vunpack.c.l.b16 %v447
      %v588 = vunpack.c.l.b16 %v545
      %v589 = vunpack.c.l.b16 %v555
      %v590 = vunpack.c.l.b16 %v448
      %v591 = vunpack.c.l.b16 %v552
      %v592 = vunpack.c.l.b16 %v556
      %v593 = vld [vmem:[%s1] sm:$0xf]
      %v594 = vld [vmem:[%s1 + $0x4] sm:$0xf]
      %v595 = vld [vmem:[%s1 + $0x8] sm:$0xf]
      %v596 = vld [vmem:[%s1 + $0xc] sm:$0xf]
      %v597 = vld [vmem:[%s1 + $0x10] sm:$0xf]
      %v598 = vld [vmem:[%s1 + $0x14] sm:$0xf]
      %v599 = vld [vmem:[%s1 + $0x18] sm:$0xf]
      %v600 = vld [vmem:[%s1 + $0x1c] sm:$0xf]
      %v601 = vld [vmem:[%s1 + $0x20] sm:$0xf]
      %v602 = vld [vmem:[%s1 + $0x24] sm:$0xf]
      %v603 = vld [vmem:[%s1 + $0x28] sm:$0xf]
      %v604 = vld [vmem:[%s1 + $0x2c] sm:$0xf]
      %v605 = vld [vmem:[%s1 + $0x30] sm:$0xf]
      %v606 = vld [vmem:[%s1 + $0x34] sm:$0xf]
      %v607 = vld [vmem:[%s1 + $0x38] sm:$0xf]
      %v608 = vld [vmem:[%s1 + $0x3c] sm:$0xf]
      %v609 = vld [vmem:[%s1 + $0x40] sm:$0xf]
      %v610 = vld [vmem:[%s1 + $0x44] sm:$0xf]
      %v611 = vld [vmem:[%s1 + $0x48] sm:$0xf]
      %v612 = vld [vmem:[%s1 + $0x4c] sm:$0xf]
      %v613 = vld [vmem:[%s1 + $0x50] sm:$0xf]
      %v614 = vld [vmem:[%s1 + $0x54] sm:$0xf]
      %v615 = vld [vmem:[%s1 + $0x58] sm:$0xf]
      %v616 = vld [vmem:[%s1 + $0x5c] sm:$0xf]
      %v617 = vld [vmem:[%s1 + $0x60] sm:$0xf]
      %v618 = vld [vmem:[%s1 + $0x64] sm:$0xf]
      %v619 = vld [vmem:[%s1 + $0x68] sm:$0xf]
      %v620 = vld [vmem:[%s1 + $0x6c] sm:$0xf]
      %v621 = vld [vmem:[%s1 + $0x70] sm:$0xf]
      %v622 = vld [vmem:[%s1 + $0x74] sm:$0xf]
      %v623 = vld [vmem:[%s1 + $0x78] sm:$0xf]
      %v624 = vld [vmem:[%s1 + $0x7c] sm:$0xf]
      %v625 = vld [vmem:[%s1 + $0x80] sm:$0xf]
      %v626 = vld [vmem:[%s1 + $0x84] sm:$0xf]
      %v627 = vld [vmem:[%s1 + $0x88] sm:$0xf]
      %v628 = vld [vmem:[%s1 + $0x8c] sm:$0xf]
      %v629 = vld [vmem:[%s1 + $0x90] sm:$0xf]
      %v630 = vld [vmem:[%s1 + $0x94] sm:$0xf]
      %v631 = vld [vmem:[%s1 + $0x98] sm:$0xf]
      %v632 = vld [vmem:[%s1 + $0x9c] sm:$0xf]
      %v633 = vld [vmem:[%s1 + $0xa0] sm:$0xf]
      %v634 = vld [vmem:[%s1 + $0xa4] sm:$0xf]
      %v635 = vld [vmem:[%s1 + $0xa8] sm:$0xf]
      %v636 = vld [vmem:[%s1 + $0xac] sm:$0xf]
      %v637 = vld [vmem:[%s1 + $0xb0] sm:$0xf]
      %v638 = vld [vmem:[%s1 + $0xb4] sm:$0xf]
      %v639 = vld [vmem:[%s1 + $0xb8] sm:$0xf]
      %v640 = vld [vmem:[%s1 + $0xbc] sm:$0xf]
      %v641 = vld [vmem:[%s1 + $0xc0] sm:$0xf]
      %v642 = vld [vmem:[%s1 + $0xc4] sm:$0xf]
      %v643 = vld [vmem:[%s1 + $0xc8] sm:$0xf]
      %v644 = vld [vmem:[%s1 + $0xcc] sm:$0xf]
      %v645 = vld [vmem:[%s1 + $0xd0] sm:$0xf]
      %v646 = vld [vmem:[%s1 + $0xd4] sm:$0xf]
      %v647 = vld [vmem:[%s1 + $0xd8] sm:$0xf]
      %v648 = vld [vmem:[%s1 + $0xdc] sm:$0xf]
      %v649 = vld [vmem:[%s1 + $0xe0] sm:$0xf]
      %v650 = vld [vmem:[%s1 + $0xe4] sm:$0xf]
      %v651 = vld [vmem:[%s1 + $0xe8] sm:$0xf]
      %v652 = vld [vmem:[%s1 + $0xec] sm:$0xf]
      %v653 = vld [vmem:[%s1 + $0xf0] sm:$0xf]
      %v654 = vld [vmem:[%s1 + $0xf4] sm:$0xf]
      %v655 = vld [vmem:[%s1 + $0xf8] sm:$0xf]
      %v656 = vld [vmem:[%s1 + $0xfc] sm:$0xf]
      %v657 = vld [vmem:[%s1 + $0x100] sm:$0xf]
      %v658 = vld [vmem:[%s1 + $0x104] sm:$0xf]
      %v659 = vld [vmem:[%s1 + $0x108] sm:$0xf]
      %v660 = vld [vmem:[%s1 + $0x10c] sm:$0xf]
      %v661 = vld [vmem:[%s1 + $0x110] sm:$0xf]
      %v662 = vld [vmem:[%s1 + $0x114] sm:$0xf]
      %v663 = vld [vmem:[%s1 + $0x118] sm:$0xf]
      %v664 = vld [vmem:[%s1 + $0x11c] sm:$0xf]
      %v665 = vld [vmem:[%s1 + $0x120] sm:$0xf]
      %v666 = vld [vmem:[%s1 + $0x124] sm:$0xf]
      %v667 = vld [vmem:[%s1 + $0x128] sm:$0xf]
      %v668 = vld [vmem:[%s1 + $0x12c] sm:$0xf]
      %v669 = vld [vmem:[%s1 + $0x130] sm:$0xf]
      %v670 = vld [vmem:[%s1 + $0x134] sm:$0xf]
      %v671 = vld [vmem:[%s1 + $0x138] sm:$0xf]
      %v672 = vld [vmem:[%s1 + $0x13c] sm:$0xf]
      %v673 = vld [vmem:[%s1 + $0x140] sm:$0xf]
      %v674 = vld [vmem:[%s1 + $0x144] sm:$0xf]
      %v675 = vld [vmem:[%s1 + $0x148] sm:$0xf]
      %v676 = vld [vmem:[%s1 + $0x14c] sm:$0xf]
      %v677 = vld [vmem:[%s1 + $0x150] sm:$0xf]
      %v678 = vld [vmem:[%s1 + $0x154] sm:$0xf]
      %v679 = vld [vmem:[%s1 + $0x158] sm:$0xf]
      %v680 = vld [vmem:[%s1 + $0x15c] sm:$0xf]
      %v681 = vld [vmem:[%s1 + $0x160] sm:$0xf]
      %v682 = vld [vmem:[%s1 + $0x164] sm:$0xf]
      %v683 = vld [vmem:[%s1 + $0x168] sm:$0xf]
      %v684 = vld [vmem:[%s1 + $0x16c] sm:$0xf]
      %v685 = vld [vmem:[%s1 + $0x170] sm:$0xf]
      %v686 = vld [vmem:[%s1 + $0x174] sm:$0xf]
      %v687 = vld [vmem:[%s1 + $0x178] sm:$0xf]
      %v688 = vld [vmem:[%s1 + $0x17c] sm:$0xf]
      %v689 = vld [vmem:[%s1 + $0x180] sm:$0xf]
      %v690 = vld [vmem:[%s1 + $0x184] sm:$0xf]
      %v691 = vld [vmem:[%s1 + $0x188] sm:$0xf]
      %v692 = vld [vmem:[%s1 + $0x18c] sm:$0xf]
      %v693 = vld [vmem:[%s1 + $0x190] sm:$0xf]
      %v694 = vld [vmem:[%s1 + $0x194] sm:$0xf]
      %v695 = vld [vmem:[%s1 + $0x198] sm:$0xf]
      %v696 = vld [vmem:[%s1 + $0x19c] sm:$0xf]
      %v697 = vld [vmem:[%s1 + $0x1a0] sm:$0xf]
      %v698 = vld [vmem:[%s1 + $0x1a4] sm:$0xf]
      %v699 = vld [vmem:[%s1 + $0x1a8] sm:$0xf]
      %v700 = vld [vmem:[%s1 + $0x1ac] sm:$0xf]
      %v701 = vld [vmem:[%s1 + $0x1b0] sm:$0xf]
      %v702 = vld [vmem:[%s1 + $0x1b4] sm:$0xf]
      %v703 = vld [vmem:[%s1 + $0x1b8] sm:$0xf]
      %v704 = vld [vmem:[%s1 + $0x1bc] sm:$0xf]
      %v705 = vld [vmem:[%s1 + $0x1c0] sm:$0xf]
      %v706 = vld [vmem:[%s1 + $0x1c4] sm:$0xf]
      %v707 = vld [vmem:[%s1 + $0x1c8] sm:$0xf]
      %v708 = vld [vmem:[%s1 + $0x1cc] sm:$0xf]
      %v709 = vld [vmem:[%s1 + $0x1d0] sm:$0xf]
      %v710 = vld [vmem:[%s1 + $0x1d4] sm:$0xf]
      %v711 = vld [vmem:[%s1 + $0x1d8] sm:$0xf]
      %v712 = vld [vmem:[%s1 + $0x1dc] sm:$0xf]
      %v713 = vld [vmem:[%s1 + $0x1e0] sm:$0xf]
      %v714 = vld [vmem:[%s1 + $0x1e4] sm:$0xf]
      %v715 = vld [vmem:[%s1 + $0x1e8] sm:$0xf]
      %v716 = vld [vmem:[%s1 + $0x1ec] sm:$0xf]
      %v717 = vld [vmem:[%s1 + $0x1f0] sm:$0xf]
      %v718 = vld [vmem:[%s1 + $0x1f4] sm:$0xf]
      %v719 = vld [vmem:[%s1 + $0x1f8] sm:$0xf]
      %v720 = vld [vmem:[%s1 + $0x1fc] sm:$0xf]
      %v721 = vld [vmem:[%s1 + $0x200] sm:$0xf]
      %v722 = vld [vmem:[%s1 + $0x204] sm:$0xf]
      %v723 = vld [vmem:[%s1 + $0x208] sm:$0xf]
      %v724 = vld [vmem:[%s1 + $0x20c] sm:$0xf]
      %v725 = vld [vmem:[%s1 + $0x210] sm:$0xf]
      %v726 = vld [vmem:[%s1 + $0x214] sm:$0xf]
      %v727 = vld [vmem:[%s1 + $0x218] sm:$0xf]
      %v728 = vld [vmem:[%s1 + $0x21c] sm:$0xf]
      %v729 = vld [vmem:[%s1 + $0x220] sm:$0xf]
      %v730 = vld [vmem:[%s1 + $0x224] sm:$0xf]
      %v731 = vld [vmem:[%s1 + $0x228] sm:$0xf]
      %v732 = vld [vmem:[%s1 + $0x22c] sm:$0xf]
      %v733 = vld [vmem:[%s1 + $0x230] sm:$0xf]
      %v734 = vld [vmem:[%s1 + $0x234] sm:$0xf]
      %v735 = vld [vmem:[%s1 + $0x238] sm:$0xf]
      %v736 = vld [vmem:[%s1 + $0x23c] sm:$0xf]
      %v737 = vpack.c.b16 %v566, %v557
      %v738 = vpack.c.b16 %v567, %v558
      %v739 = vpack.c.b16 %v568, %v559
      %v740 = vpack.c.b16 %v569, %v560
      %v741 = vpack.c.b16 %v570, %v561
      %v742 = vpack.c.b16 %v571, %v562
      %v743 = vpack.c.b16 %v572, %v563
      %v744 = vpack.c.b16 %v573, %v564
      %v745 = vpack.c.b16 %v574, %v565
      %v746 = vpack.c.b16 %v578, %v575
      %v747 = vpack.c.b16 %v579, %v576
      %v748 = vpack.c.b16 %v580, %v577
      %v749 = vpack.c.b16 %v584, %v581
      %v750 = vpack.c.b16 %v585, %v582
      %v751 = vpack.c.b16 %v586, %v583
      %v752 = vpack.c.b16 %v590, %v587
      %v753 = vpack.c.b16 %v591, %v588
      %v754 = vpack.c.b16 %v592, %v589
      %v917 = vunpack.c.l.b16 %v593
      %v918 = vunpack.c.l.b16 %v594
      %v919 = vunpack.c.l.b16 %v595
      %v920 = vunpack.c.l.b16 %v596
      %v921 = vunpack.c.l.b16 %v597
      %v922 = vunpack.c.l.b16 %v598
      %v923 = vunpack.c.l.b16 %v599
      %v924 = vunpack.c.l.b16 %v600
      %v925 = vunpack.c.l.b16 %v601
      %v926 = vunpack.c.l.b16 %v602
      %v927 = vunpack.c.l.b16 %v603
      %v928 = vunpack.c.l.b16 %v604
      %v929 = vunpack.c.l.b16 %v605
      %v930 = vunpack.c.l.b16 %v606
      %v931 = vunpack.c.l.b16 %v607
      %v932 = vunpack.c.l.b16 %v608
      %v933 = vunpack.c.l.b16 %v609
      %v934 = vunpack.c.l.b16 %v610
      %v935 = vunpack.c.l.b16 %v611
      %v936 = vunpack.c.l.b16 %v612
      %v937 = vunpack.c.l.b16 %v613
      %v938 = vunpack.c.l.b16 %v614
      %v939 = vunpack.c.l.b16 %v615
      %v940 = vunpack.c.l.b16 %v616
      %v941 = vunpack.c.l.b16 %v617
      %v942 = vunpack.c.l.b16 %v618
      %v943 = vunpack.c.l.b16 %v619
      %v944 = vunpack.c.l.b16 %v620
      %v945 = vunpack.c.l.b16 %v621
      %v946 = vunpack.c.l.b16 %v622
      %v947 = vunpack.c.l.b16 %v623
      %v948 = vunpack.c.l.b16 %v624
      %v949 = vunpack.c.l.b16 %v625
      %v950 = vunpack.c.l.b16 %v626
      %v951 = vunpack.c.l.b16 %v627
      %v952 = vunpack.c.l.b16 %v628
      %v953 = vunpack.c.l.b16 %v629
      %v954 = vunpack.c.l.b16 %v630
      %v955 = vunpack.c.l.b16 %v631
      %v956 = vunpack.c.l.b16 %v632
      %v957 = vunpack.c.l.b16 %v633
      %v958 = vunpack.c.l.b16 %v634
      %v959 = vunpack.c.l.b16 %v635
      %v960 = vunpack.c.l.b16 %v636
      %v961 = vunpack.c.l.b16 %v637
      %v962 = vunpack.c.l.b16 %v638
      %v963 = vunpack.c.l.b16 %v639
      %v964 = vunpack.c.l.b16 %v640
      %v965 = vunpack.c.l.b16 %v641
      %v966 = vunpack.c.l.b16 %v642
      %v967 = vunpack.c.l.b16 %v643
      %v968 = vunpack.c.l.b16 %v644
      %v969 = vunpack.c.l.b16 %v645
      %v970 = vunpack.c.l.b16 %v646
      %v971 = vunpack.c.l.b16 %v647
      %v972 = vunpack.c.l.b16 %v648
      %v973 = vunpack.c.l.b16 %v649
      %v974 = vunpack.c.l.b16 %v650
      %v975 = vunpack.c.l.b16 %v651
      %v976 = vunpack.c.l.b16 %v652
      %v977 = vunpack.c.l.b16 %v653
      %v978 = vunpack.c.l.b16 %v654
      %v979 = vunpack.c.l.b16 %v655
      %v980 = vunpack.c.l.b16 %v656
      %v981 = vunpack.c.l.b16 %v657
      %v982 = vunpack.c.l.b16 %v658
      %v983 = vunpack.c.l.b16 %v659
      %v984 = vunpack.c.l.b16 %v660
      %v985 = vunpack.c.l.b16 %v661
      %v986 = vunpack.c.l.b16 %v662
      %v987 = vunpack.c.l.b16 %v663
      %v988 = vunpack.c.l.b16 %v664
      %v989 = vunpack.c.l.b16 %v665
      %v990 = vunpack.c.l.b16 %v666
      %v991 = vunpack.c.l.b16 %v667
      %v992 = vunpack.c.l.b16 %v668
      %v993 = vunpack.c.l.b16 %v669
      %v994 = vunpack.c.l.b16 %v670
      %v995 = vunpack.c.l.b16 %v671
      %v996 = vunpack.c.l.b16 %v672
      %v997 = vunpack.c.l.b16 %v673
      %v998 = vunpack.c.l.b16 %v674
      %v999 = vunpack.c.l.b16 %v675
      %v1000 = vunpack.c.l.b16 %v676
      %v1001 = vunpack.c.l.b16 %v677
      %v1002 = vunpack.c.l.b16 %v678
      %v1003 = vunpack.c.l.b16 %v679
      %v1004 = vunpack.c.l.b16 %v680
      %v1005 = vunpack.c.l.b16 %v681
      %v1006 = vunpack.c.l.b16 %v682
      %v1007 = vunpack.c.l.b16 %v683
      %v1008 = vunpack.c.l.b16 %v684
      %v1009 = vunpack.c.l.b16 %v685
      %v1010 = vunpack.c.l.b16 %v686
      %v1011 = vunpack.c.l.b16 %v687
      %v1012 = vunpack.c.l.b16 %v688
      %v1013 = vunpack.c.l.b16 %v689
      %v1014 = vunpack.c.l.b16 %v690
      %v1015 = vunpack.c.l.b16 %v691
      %v1016 = vunpack.c.l.b16 %v692
      %v1017 = vunpack.c.l.b16 %v693
      %v1018 = vunpack.c.l.b16 %v694
      %v1019 = vunpack.c.l.b16 %v695
      %v1020 = vunpack.c.l.b16 %v696
      %v1021 = vunpack.c.l.b16 %v697
      %v1022 = vunpack.c.l.b16 %v698
      %v1023 = vunpack.c.l.b16 %v699
      %v1024 = vunpack.c.l.b16 %v700
      %v1025 = vunpack.c.l.b16 %v701
      %v1026 = vunpack.c.l.b16 %v702
      %v1027 = vunpack.c.l.b16 %v703
      %v1028 = vunpack.c.l.b16 %v704
      %v1029 = vunpack.c.l.b16 %v705
      %v1030 = vunpack.c.l.b16 %v706
      %v1031 = vunpack.c.l.b16 %v707
      %v1032 = vunpack.c.l.b16 %v708
      %v1033 = vunpack.c.l.b16 %v709
      %v1034 = vunpack.c.l.b16 %v710
      %v1035 = vunpack.c.l.b16 %v711
      %v1036 = vunpack.c.l.b16 %v712
      %v1037 = vunpack.c.l.b16 %v713
      %v1038 = vunpack.c.l.b16 %v714
      %v1039 = vunpack.c.l.b16 %v715
      %v1040 = vunpack.c.l.b16 %v716
      %v1041 = vunpack.c.l.b16 %v717
      %v1042 = vunpack.c.l.b16 %v718
      %v1043 = vunpack.c.l.b16 %v719
      %v1044 = vunpack.c.l.b16 %v720
      %v1045 = vunpack.c.l.b16 %v721
      %v1046 = vunpack.c.l.b16 %v722
      %v1047 = vunpack.c.l.b16 %v723
      %v1048 = vunpack.c.l.b16 %v724
      %v1049 = vunpack.c.l.b16 %v725
      %v1050 = vunpack.c.l.b16 %v726
      %v1051 = vunpack.c.l.b16 %v727
      %v1052 = vunpack.c.l.b16 %v728
      %v1053 = vunpack.c.l.b16 %v729
      %v1054 = vunpack.c.l.b16 %v730
      %v1055 = vunpack.c.l.b16 %v731
      %v1056 = vunpack.c.l.b16 %v732
      %v1057 = vunpack.c.l.b16 %v733
      %v1058 = vunpack.c.l.b16 %v734
      %v1059 = vunpack.c.l.b16 %v735
      %v1060 = vunpack.c.l.b16 %v736
      %v1061 = vpack.c.b16 %v918, %v917
      %v1062 = vpack.c.b16 %v920, %v919
      %v1063 = vpack.c.b16 %v922, %v921
      %v1064 = vpack.c.b16 %v924, %v923
      %v1065 = vpack.c.b16 %v926, %v925
      %v1066 = vpack.c.b16 %v928, %v927
      %v1067 = vpack.c.b16 %v930, %v929
      %v1068 = vpack.c.b16 %v932, %v931
      %v1069 = vpack.c.b16 %v934, %v933
      %v1070 = vpack.c.b16 %v936, %v935
      %v1071 = vpack.c.b16 %v938, %v937
      %v1072 = vpack.c.b16 %v940, %v939
      %v1073 = vpack.c.b16 %v942, %v941
      %v1074 = vpack.c.b16 %v944, %v943
      %v1075 = vpack.c.b16 %v946, %v945
      %v1076 = vpack.c.b16 %v948, %v947
      %v1077 = vpack.c.b16 %v950, %v949
      %v1078 = vpack.c.b16 %v952, %v951
      %v1079 = vpack.c.b16 %v954, %v953
      %v1080 = vpack.c.b16 %v956, %v955
      %v1081 = vpack.c.b16 %v958, %v957
      %v1082 = vpack.c.b16 %v960, %v959
      %v1083 = vpack.c.b16 %v962, %v961
      %v1084 = vpack.c.b16 %v964, %v963
      %v1085 = vpack.c.b16 %v966, %v965
      %v1086 = vpack.c.b16 %v968, %v967
      %v1087 = vpack.c.b16 %v970, %v969
      %v1088 = vpack.c.b16 %v972, %v971
      %v1089 = vpack.c.b16 %v974, %v973
      %v1090 = vpack.c.b16 %v976, %v975
      %v1091 = vpack.c.b16 %v978, %v977
      %v1092 = vpack.c.b16 %v980, %v979
      %v1093 = vpack.c.b16 %v982, %v981
      %v1094 = vpack.c.b16 %v984, %v983
      %v1095 = vpack.c.b16 %v986, %v985
      %v1096 = vpack.c.b16 %v988, %v987
      %v1097 = vpack.c.b16 %v990, %v989
      %v1098 = vpack.c.b16 %v992, %v991
      %v1099 = vpack.c.b16 %v994, %v993
      %v1100 = vpack.c.b16 %v996, %v995
      %v1101 = vpack.c.b16 %v998, %v997
      %v1102 = vpack.c.b16 %v1000, %v999
      %v1103 = vpack.c.b16 %v1002, %v1001
      %v1104 = vpack.c.b16 %v1004, %v1003
      %v1105 = vpack.c.b16 %v1006, %v1005
      %v1106 = vpack.c.b16 %v1008, %v1007
      %v1107 = vpack.c.b16 %v1010, %v1009
      %v1108 = vpack.c.b16 %v1012, %v1011
      %v1109 = vpack.c.b16 %v1014, %v1013
      %v1110 = vpack.c.b16 %v1016, %v1015
      %v1111 = vpack.c.b16 %v1018, %v1017
      %v1112 = vpack.c.b16 %v1020, %v1019
      %v1113 = vpack.c.b16 %v1022, %v1021
      %v1114 = vpack.c.b16 %v1024, %v1023
      %v1115 = vpack.c.b16 %v1026, %v1025
      %v1116 = vpack.c.b16 %v1028, %v1027
      %v1117 = vpack.c.b16 %v1030, %v1029
      %v1118 = vpack.c.b16 %v1032, %v1031
      %v1119 = vpack.c.b16 %v1034, %v1033
      %v1120 = vpack.c.b16 %v1036, %v1035
      %v1121 = vpack.c.b16 %v1038, %v1037
      %v1122 = vpack.c.b16 %v1040, %v1039
      %v1123 = vpack.c.b16 %v1042, %v1041
      %v1124 = vpack.c.b16 %v1044, %v1043
      %v1125 = vpack.c.b16 %v1046, %v1045
      %v1126 = vpack.c.b16 %v1048, %v1047
      %v1127 = vpack.c.b16 %v1050, %v1049
      %v1128 = vpack.c.b16 %v1052, %v1051
      %v1129 = vpack.c.b16 %v1054, %v1053
      %v1130 = vpack.c.b16 %v1056, %v1055
      %v1131 = vpack.c.b16 %v1058, %v1057
      %v1132 = vpack.c.b16 %v1060, %v1059
      %1205 = vmatprep.subr.bf16.mxu0 0
      %1206 = vmatpush1.bf16.msra.mxu0 %v1068
      %1207 = vmatprep.subr.bf16.mxu0 0
      %1208 = vmatpush1.bf16.msra.mxu0 %v1067
      %1209 = vmatprep.subr.bf16.mxu0 0
      %1210 = vmatpush1.bf16.msra.mxu0 %v1066
      %1211 = vmatprep.subr.bf16.mxu0 0
      %1212 = vmatpush1.bf16.msra.mxu0 %v1065
      %1213 = vmatprep.subr.bf16.mxu0 0
      %1214 = vmatpush1.bf16.msra.mxu0 %v1064
      %1215 = vmatprep.subr.bf16.mxu0 0
      %1216 = vmatpush1.bf16.msra.mxu0 %v1063
      %1217 = vmatprep.subr.bf16.mxu0 0
      %1218 = vmatpush1.bf16.msra.mxu0 %v1062
      %1219 = vmatprep.subr.bf16.mxu0 0
      %1220 = vmatpush1.bf16.msra.mxu0 %v1061
      %1221 = vmatprep.subr.bf16.mxu0 0
      %1222 = vmatpush2.bf16.msra.mxu0 %v1076
      %1223 = vmatprep.subr.bf16.mxu0 0
      %1224 = vmatpush2.bf16.msra.mxu0 %v1075
      %1225 = vmatprep.subr.bf16.mxu0 0
      %1226 = vmatpush2.bf16.msra.mxu0 %v1074
      %1227 = vmatprep.subr.bf16.mxu0 0
      %1228 = vmatpush2.bf16.msra.mxu0 %v1073
      %1229 = vmatprep.subr.bf16.mxu0 0
      %1230 = vmatpush2.bf16.msra.mxu0 %v1072
      %1231 = vmatprep.subr.bf16.mxu0 0
      %1232 = vmatpush2.bf16.msra.mxu0 %v1071
      %1233 = vmatprep.subr.bf16.mxu0 0
      %1234 = vmatpush2.bf16.msra.mxu0 %v1070
      %1235 = vmatprep.subr.bf16.mxu0 0
      %1236 = vmatpush2.bf16.msra.mxu0 %v1069
      %1237 = vmatprep.mubr.bf16.mxu0 %v738
      %1238 = vmatmul.mubr.bf16.gmra.mxu0 %v737
      %v1239 = vpop.f32.mrf.mxu0
      %v1240 = vadd.f32 0.0, %v1239
      %v1241 = vpop.f32.mrf.mxu0
      %v1242 = vpop.f32.mrf.mxu0
      %v1243 = vadd.f32 0.0, %v1242
      %v1244 = vpop.f32.mrf.mxu0
      %1245 = vmatprep.mubr.bf16.mxu0 %v741
      %1246 = vmatmul.mubr.bf16.gmra.mxu0 %v740
      %v1247 = vpop.f32.mrf.mxu0
      %v1248 = vadd.f32 0.0, %v1247
      %v1249 = vpop.f32.mrf.mxu0
      %v1250 = vpop.f32.mrf.mxu0
      %v1251 = vadd.f32 0.0, %v1250
      %v1252 = vpop.f32.mrf.mxu0
      %1253 = vmatprep.mubr.bf16.mxu0 %v744
      %1254 = vmatmul.mubr.bf16.gmra.mxu0 %v743
      %v1255 = vpop.f32.mrf.mxu0
      %v1256 = vadd.f32 0.0, %v1255
      %v1257 = vpop.f32.mrf.mxu0
      %v1258 = vpop.f32.mrf.mxu0
      %v1259 = vadd.f32 0.0, %v1258
      %v1260 = vpop.f32.mrf.mxu0
      %1261 = vmatprep.mubr.bf16.mxu0 %v747
      %1262 = vmatmul.mubr.bf16.gmra.mxu0 %v746
      %v1263 = vpop.f32.mrf.mxu0
      %v1264 = vadd.f32 0.0, %v1263
      %v1265 = vpop.f32.mrf.mxu0
      %v1266 = vpop.f32.mrf.mxu0
      %v1267 = vadd.f32 0.0, %v1266
      %v1268 = vpop.f32.mrf.mxu0
      %1269 = vdwg.mxu0
      %1270 = vmatprep.subr.bf16.mxu0 0
      %1271 = vmatpush1.bf16.msra.mxu0 %v1084
      %1272 = vmatprep.subr.bf16.mxu0 0
      %1273 = vmatpush1.bf16.msra.mxu0 %v1083
      %1274 = vmatprep.subr.bf16.mxu0 0
      %1275 = vmatpush1.bf16.msra.mxu0 %v1082
      %1276 = vmatprep.subr.bf16.mxu0 0
      %1277 = vmatpush1.bf16.msra.mxu0 %v1081
      %1278 = vmatprep.subr.bf16.mxu0 0
      %1279 = vmatpush1.bf16.msra.mxu0 %v1080
      %1280 = vmatprep.subr.bf16.mxu0 0
      %1281 = vmatpush1.bf16.msra.mxu0 %v1079
      %1282 = vmatprep.subr.bf16.mxu0 0
      %1283 = vmatpush1.bf16.msra.mxu0 %v1078
      %1284 = vmatprep.subr.bf16.mxu0 0
      %1285 = vmatpush1.bf16.msra.mxu0 %v1077
      %1286 = vmatprep.subr.bf16.mxu0 0
      %1287 = vmatpush2.bf16.msra.mxu0 %v1092
      %1288 = vmatprep.subr.bf16.mxu0 0
      %1289 = vmatpush2.bf16.msra.mxu0 %v1091
      %1290 = vmatprep.subr.bf16.mxu0 0
      %1291 = vmatpush2.bf16.msra.mxu0 %v1090
      %1292 = vmatprep.subr.bf16.mxu0 0
      %1293 = vmatpush2.bf16.msra.mxu0 %v1089
      %1294 = vmatprep.subr.bf16.mxu0 0
      %1295 = vmatpush2.bf16.msra.mxu0 %v1088
      %1296 = vmatprep.subr.bf16.mxu0 0
      %1297 = vmatpush2.bf16.msra.mxu0 %v1087
      %1298 = vmatprep.subr.bf16.mxu0 0
      %1299 = vmatpush2.bf16.msra.mxu0 %v1086
      %1300 = vmatprep.subr.bf16.mxu0 0
      %1301 = vmatpush2.bf16.msra.mxu0 %v1085
      %1302 = vmatprep.mubr.bf16.mxu0 %v740
      %1303 = vmatmul.mubr.bf16.gmra.mxu0 %v739
      %v1304 = vpop.f32.mrf.mxu0
      %v1305 = vadd.f32 %v1240, %v1304
      %v1306 = vpop.f32.mrf.mxu0
      %v1307 = vpop.f32.mrf.mxu0
      %v1308 = vadd.f32 %v1243, %v1307
      %v1309 = vpop.f32.mrf.mxu0
      %1310 = vmatprep.mubr.bf16.mxu0 %v743
      %1311 = vmatmul.mubr.bf16.gmra.mxu0 %v742
      %v1312 = vpop.f32.mrf.mxu0
      %v1313 = vadd.f32 %v1248, %v1312
      %v1314 = vpop.f32.mrf.mxu0
      %v1315 = vpop.f32.mrf.mxu0
      %v1316 = vadd.f32 %v1251, %v1315
      %v1317 = vpop.f32.mrf.mxu0
      %1318 = vmatprep.mubr.bf16.mxu0 %v746
      %1319 = vmatmul.mubr.bf16.gmra.mxu0 %v745
      %v1320 = vpop.f32.mrf.mxu0
      %v1321 = vadd.f32 %v1256, %v1320
      %v1322 = vpop.f32.mrf.mxu0
      %v1323 = vpop.f32.mrf.mxu0
      %v1324 = vadd.f32 %v1259, %v1323
      %v1325 = vpop.f32.mrf.mxu0
      %1326 = vmatprep.mubr.bf16.mxu0 %v749
      %1327 = vmatmul.mubr.bf16.gmra.mxu0 %v748
      %v1328 = vpop.f32.mrf.mxu0
      %v1329 = vadd.f32 %v1264, %v1328
      %v1330 = vpop.f32.mrf.mxu0
      %v1331 = vpop.f32.mrf.mxu0
      %v1332 = vadd.f32 %v1267, %v1331
      %v1333 = vpop.f32.mrf.mxu0
      %1334 = vdwg.mxu0
      %1335 = vmatprep.subr.bf16.mxu0 0
      %1336 = vmatpush1.bf16.msra.mxu0 %v1100
      %1337 = vmatprep.subr.bf16.mxu0 0
      %1338 = vmatpush1.bf16.msra.mxu0 %v1099
      %1339 = vmatprep.subr.bf16.mxu0 0
      %1340 = vmatpush1.bf16.msra.mxu0 %v1098
      %1341 = vmatprep.subr.bf16.mxu0 0
      %1342 = vmatpush1.bf16.msra.mxu0 %v1097
      %1343 = vmatprep.subr.bf16.mxu0 0
      %1344 = vmatpush1.bf16.msra.mxu0 %v1096
      %1345 = vmatprep.subr.bf16.mxu0 0
      %1346 = vmatpush1.bf16.msra.mxu0 %v1095
      %1347 = vmatprep.subr.bf16.mxu0 0
      %1348 = vmatpush1.bf16.msra.mxu0 %v1094
      %1349 = vmatprep.subr.bf16.mxu0 0
      %1350 = vmatpush1.bf16.msra.mxu0 %v1093
      %1351 = vmatprep.subr.bf16.mxu0 0
      %1352 = vmatpush2.bf16.msra.mxu0 %v1108
      %1353 = vmatprep.subr.bf16.mxu0 0
      %1354 = vmatpush2.bf16.msra.mxu0 %v1107
      %1355 = vmatprep.subr.bf16.mxu0 0
      %1356 = vmatpush2.bf16.msra.mxu0 %v1106
      %1357 = vmatprep.subr.bf16.mxu0 0
      %1358 = vmatpush2.bf16.msra.mxu0 %v1105
      %1359 = vmatprep.subr.bf16.mxu0 0
      %1360 = vmatpush2.bf16.msra.mxu0 %v1104
      %1361 = vmatprep.subr.bf16.mxu0 0
      %1362 = vmatpush2.bf16.msra.mxu0 %v1103
      %1363 = vmatprep.subr.bf16.mxu0 0
      %1364 = vmatpush2.bf16.msra.mxu0 %v1102
      %1365 = vmatprep.subr.bf16.mxu0 0
      %1366 = vmatpush2.bf16.msra.mxu0 %v1101
      %1367 = vmatprep.mubr.bf16.mxu0 %v742
      %1368 = vmatmul.mubr.bf16.gmra.mxu0 %v741
      %v1369 = vpop.f32.mrf.mxu0
      %v1370 = vadd.f32 %v1305, %v1369
      %v1371 = vpop.f32.mrf.mxu0
      %v1372 = vpop.f32.mrf.mxu0
      %v1373 = vadd.f32 %v1308, %v1372
      %v1374 = vpop.f32.mrf.mxu0
      %1375 = vmatprep.mubr.bf16.mxu0 %v745
      %1376 = vmatmul.mubr.bf16.gmra.mxu0 %v744
      %v1377 = vpop.f32.mrf.mxu0
      %v1378 = vadd.f32 %v1313, %v1377
      %v1379 = vpop.f32.mrf.mxu0
      %v1380 = vpop.f32.mrf.mxu0
      %v1381 = vadd.f32 %v1316, %v1380
      %v1382 = vpop.f32.mrf.mxu0
      %1383 = vmatprep.mubr.bf16.mxu0 %v748
      %1384 = vmatmul.mubr.bf16.gmra.mxu0 %v747
      %v1385 = vpop.f32.mrf.mxu0
      %v1386 = vadd.f32 %v1321, %v1385
      %v1387 = vpop.f32.mrf.mxu0
      %v1388 = vpop.f32.mrf.mxu0
      %v1389 = vadd.f32 %v1324, %v1388
      %v1390 = vpop.f32.mrf.mxu0
      %1391 = vmatprep.mubr.bf16.mxu0 %v751
      %1392 = vmatmul.mubr.bf16.gmra.mxu0 %v750
      %v1393 = vpop.f32.mrf.mxu0
      %v1394 = vadd.f32 %v1329, %v1393
      %v1395 = vpop.f32.mrf.mxu0
      %v1396 = vpop.f32.mrf.mxu0
      %v1397 = vadd.f32 %v1332, %v1396
      %v1398 = vpop.f32.mrf.mxu0
      %1399 = vdwg.mxu0
      %1400 = vmatprep.subr.bf16.mxu0 0
      %1401 = vmatpush1.bf16.msra.mxu0 %v1116
      %1402 = vmatprep.subr.bf16.mxu0 0
      %1403 = vmatpush1.bf16.msra.mxu0 %v1115
      %1404 = vmatprep.subr.bf16.mxu0 0
      %1405 = vmatpush1.bf16.msra.mxu0 %v1114
      %1406 = vmatprep.subr.bf16.mxu0 0
      %1407 = vmatpush1.bf16.msra.mxu0 %v1113
      %1408 = vmatprep.subr.bf16.mxu0 0
      %1409 = vmatpush1.bf16.msra.mxu0 %v1112
      %1410 = vmatprep.subr.bf16.mxu0 0
      %1411 = vmatpush1.bf16.msra.mxu0 %v1111
      %1412 = vmatprep.subr.bf16.mxu0 0
      %1413 = vmatpush1.bf16.msra.mxu0 %v1110
      %1414 = vmatprep.subr.bf16.mxu0 0
      %1415 = vmatpush1.bf16.msra.mxu0 %v1109
      %1416 = vmatprep.subr.bf16.mxu0 0
      %1417 = vmatpush2.bf16.msra.mxu0 %v1124
      %1418 = vmatprep.subr.bf16.mxu0 0
      %1419 = vmatpush2.bf16.msra.mxu0 %v1123
      %1420 = vmatprep.subr.bf16.mxu0 0
      %1421 = vmatpush2.bf16.msra.mxu0 %v1122
      %1422 = vmatprep.subr.bf16.mxu0 0
      %1423 = vmatpush2.bf16.msra.mxu0 %v1121
      %1424 = vmatprep.subr.bf16.mxu0 0
      %1425 = vmatpush2.bf16.msra.mxu0 %v1120
      %1426 = vmatprep.subr.bf16.mxu0 0
      %1427 = vmatpush2.bf16.msra.mxu0 %v1119
      %1428 = vmatprep.subr.bf16.mxu0 0
      %1429 = vmatpush2.bf16.msra.mxu0 %v1118
      %1430 = vmatprep.subr.bf16.mxu0 0
      %1431 = vmatpush2.bf16.msra.mxu0 %v1117
      %1432 = vmatprep.mubr.bf16.mxu0 %v744
      %1433 = vmatmul.mubr.bf16.gmra.mxu0 %v743
      %v1434 = vpop.f32.mrf.mxu0
      %v1435 = vadd.f32 %v1370, %v1434
      %v1436 = vpop.f32.mrf.mxu0
      %v1437 = vpop.f32.mrf.mxu0
      %v1438 = vadd.f32 %v1373, %v1437
      %v1439 = vpop.f32.mrf.mxu0
      %1440 = vmatprep.mubr.bf16.mxu0 %v747
      %1441 = vmatmul.mubr.bf16.gmra.mxu0 %v746
      %v1442 = vpop.f32.mrf.mxu0
      %v1443 = vadd.f32 %v1378, %v1442
      %v1444 = vpop.f32.mrf.mxu0
      %v1445 = vpop.f32.mrf.mxu0
      %v1446 = vadd.f32 %v1381, %v1445
      %v1447 = vpop.f32.mrf.mxu0
      %1448 = vmatprep.mubr.bf16.mxu0 %v750
      %1449 = vmatmul.mubr.bf16.gmra.mxu0 %v749
      %v1450 = vpop.f32.mrf.mxu0
      %v1451 = vadd.f32 %v1386, %v1450
      %v1452 = vpop.f32.mrf.mxu0
      %v1453 = vpop.f32.mrf.mxu0
      %v1454 = vadd.f32 %v1389, %v1453
      %v1455 = vpop.f32.mrf.mxu0
      %1456 = vmatprep.mubr.bf16.mxu0 %v753
      %1457 = vmatmul.mubr.bf16.gmra.mxu0 %v752
      %v1458 = vpop.f32.mrf.mxu0
      %v1459 = vadd.f32 %v1394, %v1458
      %v1460 = vpop.f32.mrf.mxu0
      %v1461 = vpop.f32.mrf.mxu0
      %v1462 = vadd.f32 %v1397, %v1461
      %v1463 = vpop.f32.mrf.mxu0
      %1464 = vdwg.mxu0
      %1465 = vmatprep.subr.bf16.mxu0 0
      %1466 = vmatpush1.bf16.msra.mxu0 %v1132
      %1467 = vmatprep.subr.bf16.mxu0 0
      %1468 = vmatpush1.bf16.msra.mxu0 %v1131
      %1469 = vmatprep.subr.bf16.mxu0 0
      %1470 = vmatpush1.bf16.msra.mxu0 %v1130
      %1471 = vmatprep.subr.bf16.mxu0 0
      %1472 = vmatpush1.bf16.msra.mxu0 %v1129
      %1473 = vmatprep.subr.bf16.mxu0 0
      %1474 = vmatpush1.bf16.msra.mxu0 %v1128
      %1475 = vmatprep.subr.bf16.mxu0 0
      %1476 = vmatpush1.bf16.msra.mxu0 %v1127
      %1477 = vmatprep.subr.bf16.mxu0 0
      %1478 = vmatpush1.bf16.msra.mxu0 %v1126
      %1479 = vmatprep.subr.bf16.mxu0 0
      %1480 = vmatpush1.bf16.msra.mxu0 %v1125
      %1481 = vmatprep.subr.bf16.mxu0 0
      %1482 = vmatpush2.bf16.msra.mxu0 0
      %1483 = vmatprep.subr.bf16.mxu0 0
      %1484 = vmatpush2.bf16.msra.mxu0 0
      %1485 = vmatprep.subr.bf16.mxu0 0
      %1486 = vmatpush2.bf16.msra.mxu0 0
      %1487 = vmatprep.subr.bf16.mxu0 0
      %1488 = vmatpush2.bf16.msra.mxu0 0
      %1489 = vmatprep.subr.bf16.mxu0 0
      %1490 = vmatpush2.bf16.msra.mxu0 0
      %1491 = vmatprep.subr.bf16.mxu0 0
      %1492 = vmatpush2.bf16.msra.mxu0 0
      %1493 = vmatprep.subr.bf16.mxu0 0
      %1494 = vmatpush2.bf16.msra.mxu0 0
      %1495 = vmatprep.subr.bf16.mxu0 0
      %1496 = vmatpush2.bf16.msra.mxu0 0
      %1497 = vmatprep.mubr.bf16.mxu0 0
      %1498 = vmatmul.mubr.bf16.gmra.mxu0 %v745
      %v1499 = vpop.f32.mrf.mxu0
      %v1500 = vadd.f32 %v1435, %v1499
      %v1501 = vpop.f32.mrf.mxu0
      %v1502 = vpop.f32.mrf.mxu0
      %v1503 = vadd.f32 %v1438, %v1502
      %v1504 = vpop.f32.mrf.mxu0
      %1505 = vmatprep.mubr.bf16.mxu0 0
      %1506 = vmatmul.mubr.bf16.gmra.mxu0 %v748
      %v1507 = vpop.f32.mrf.mxu0
      %v1508 = vadd.f32 %v1443, %v1507
      %v1509 = vpop.f32.mrf.mxu0
      %v1510 = vpop.f32.mrf.mxu0
      %v1511 = vadd.f32 %v1446, %v1510
      %v1512 = vpop.f32.mrf.mxu0
      %1513 = vmatprep.mubr.bf16.mxu0 0
      %1514 = vmatmul.mubr.bf16.gmra.mxu0 %v751
      %v1515 = vpop.f32.mrf.mxu0
      %v1516 = vadd.f32 %v1451, %v1515
      %v1517 = vpop.f32.mrf.mxu0
      %v1518 = vpop.f32.mrf.mxu0
      %v1519 = vadd.f32 %v1454, %v1518
      %v1520 = vpop.f32.mrf.mxu0
      %1521 = vmatprep.mubr.bf16.mxu0 0
      %1522 = vmatmul.mubr.bf16.gmra.mxu0 %v754
      %v1523 = vpop.f32.mrf.mxu0
      %v1524 = vadd.f32 %v1459, %v1523
      %v1525 = vpop.f32.mrf.mxu0
      %v1526 = vpop.f32.mrf.mxu0
      %v1527 = vadd.f32 %v1462, %v1526
      %v1528 = vpop.f32.mrf.mxu0
      %1529 = vdwg.mxu0
      %v1530 = vpack.c.bf16 %v1500, %v1500
      %v1531 = vpack.c.bf16 %v1503, %v1503
      %v1532 = vpack.c.bf16 %v1508, %v1508
      %v1533 = vpack.c.bf16 %v1511, %v1511
      %v1534 = vpack.c.bf16 %v1516, %v1516
      %v1535 = vpack.c.bf16 %v1519, %v1519
      %v1536 = vpack.c.bf16 %v1524, %v1524
      %v1537 = vpack.c.bf16 %v1527, %v1527
      %1538 = vst [vmem:[%s213] sm:$0xf] %v1530
      %1539 = vst [vmem:[%s213 + $0x4] sm:$0xf] %v1531
      %1540 = vst [vmem:[%s213 + $0x8] sm:$0xf] %v1532
      %1541 = vst [vmem:[%s213 + $0xc] sm:$0xf] %v1533
      %1542 = vst [vmem:[%s213 + $0x10] sm:$0xf] %v1534
      %1543 = vst [vmem:[%s213 + $0x14] sm:$0xf] %v1535
      %1544 = vst [vmem:[%s213 + $0x18] sm:$0xf] %v1536
      %1545 = vst [vmem:[%s213 + $0x1c] sm:$0xf] %v1537
      %v1546 = vadd.f32 %v1500, %v1503
      %v1547 = vadd.f32 %v1546, %v1508
      %v1548 = vadd.f32 %v1547, %v1511
      %v1549 = vadd.f32 %v1548, %v1516
      %v1550 = vadd.f32 %v1549, %v1519
      %v1551 = vadd.f32 %v1550, %v1524
      %v1552 = vadd.f32 %v1551, %v1527
      %v1553 = vrot.slane %v1552, 4
      %v1554 = vadd.f32 %v1552, %v1553
      %v1555 = vrot.slane %v1554, 2
      %v1556 = vadd.f32 %v1554, %v1555
      %v1557 = vrot.slane %v1556, 1
      %v1558 = vadd.f32 %v1556, %v1557
      %v1559 = vmul.f32 %v1500, %v1500
      %v1560 = vmul.f32 %v1503, %v1503
      %v1561 = vmul.f32 %v1508, %v1508
      %v1562 = vmul.f32 %v1511, %v1511
      %v1563 = vmul.f32 %v1516, %v1516
      %v1564 = vmul.f32 %v1519, %v1519
      %v1565 = vmul.f32 %v1524, %v1524
      %v1566 = vmul.f32 %v1527, %v1527
      %v1567 = vadd.f32 %v1559, %v1560
      %v1568 = vadd.f32 %v1567, %v1561
      %v1569 = vadd.f32 %v1568, %v1562
      %v1570 = vadd.f32 %v1569, %v1563
      %v1571 = vadd.f32 %v1570, %v1564
      %v1572 = vadd.f32 %v1571, %v1565
      %v1573 = vadd.f32 %v1572, %v1566
      %v1574 = vrot.slane %v1573, 4
      %v1575 = vadd.f32 %v1573, %v1574
      %v1576 = vrot.slane %v1575, 2
      %v1577 = vadd.f32 %v1575, %v1576
      %v1578 = vrot.slane %v1577, 1
      %v1579 = vadd.f32 %v1577, %v1578
      %vm1580 = vcmask 1040384
      %v1581 = vsel %vm1580, %v1558, %v1579
      %1582 = vst [vmem:[%s218] sm:$0x3] %v1581
      %s1583 = smul.u32 4, %s17
      %p1584 = scmp.lt.s32.totalorder %s1583, 7
      %s1585 = scalar_select %p1584, %s1583, 7
      %s1586 = smul.addr %s1585, 2
      %s1587 = smul.addr %s1586, 4
      %s1588 = scalar_lea.vmem %s4, %s1587
      %p1589 = scmp.lt.s32.totalorder %s17, 1
      %s1590 = scalar_select %p1589, %s17, 1
      %s1591 = smul.addr %s1590, 2
      %s1592 = scalar_lea.vmem %s5, %s1591
      // Predicated region
      $region37: #{basic_block_forward.5} parent=35 // pred_check
        %p1593 = pneg %p119
      $region38: #{basic_block_forward.5} parent=35 // pred_check_branch
        %1595 = sbr.rel (%p1593) target = $region40
      $region39: #{basic_block_forward.5} parent=35 // pred_region
        %s1596 = smul.u32 4, %s17
      $region40: #{basic_block_forward.5} parent=35 // pred_fallthru
        _
      // Predicated region
      $region41: #{basic_block_forward.5} parent=35 // pred_check
        %p1597 = pneg %p145
      $region42: #{basic_block_forward.5} parent=35 // pred_check_branch
        %1599 = sbr.rel (%p1597) target = $region44
      $region43: #{basic_block_forward.5} parent=35 // pred_region
        _
      $region44: #{basic_block_forward.5} parent=35 // pred_fallthru
        _
    $region36: #{basic_block_forward.5} parent=5 // pred_fallthru
      _
    %p1600 = scmp.le.s32.totalorder 2, %s12
    // Predicated region
    $region45: #{basic_block_forward.5} parent=5 // pred_check
      %p1601 = pneg %p1600
    $region46: #{basic_block_forward.5} parent=5 // pred_check_branch
      %1603 = sbr.rel (%p1601) target = $region48
    $region47: #{basic_block_forward.5} parent=5 // pred_region
      %s1604 = ssub.s32 %s12, 2
      // Predicated region
      $region49: #{basic_block_forward.5} parent=47 // pred_check
        %p1605 = pneg %p125
      $region50: #{basic_block_forward.5} parent=47 // pred_check_branch
        %1607 = sbr.rel (%p1605) target = $region52
      $region51: #{basic_block_forward.5} parent=47 // pred_region
        %s1608 = smul.u32 4, %s18
        %p1609 = scmp.lt.s32.totalorder %s1608, 7
        %s1610 = scalar_select %p1609, %s1608, 7
        %s1611 = smul.addr %s1610, 2
        %s1612 = smul.addr %s1611, 4
        %s1613 = scalar_lea.vmem %s4, %s1612
      $region52: #{basic_block_forward.5} parent=47 // pred_fallthru
        _
      // Predicated region
      $region53: #{basic_block_forward.5} parent=47 // pred_check
        %p1614 = pneg %p151
      $region54: #{basic_block_forward.5} parent=47 // pred_check_branch
        %1616 = sbr.rel (%p1614) target = $region56
      $region55: #{basic_block_forward.5} parent=47 // pred_region
        %p1617 = scmp.lt.s32.totalorder %s18, 1
        %s1618 = scalar_select %p1617, %s18, 1
        %s1619 = smul.addr %s1618, 2
        %s1620 = scalar_lea.vmem %s5, %s1619
      $region56: #{basic_block_forward.5} parent=47 // pred_fallthru
        _
    $region48: #{basic_block_forward.5} parent=5 // pred_fallthru
      _
  $region6: #{basic_block_forward.5} parent=0 // loop_footer
    %s16 = sadd.s32 1, %s12
  $region7: #{basic_block_forward.5} parent=0 // loop_footer_branch
    %11 = sbr.rel target = $region3
  $region8: #{basic_block_forward.5} parent=0 // loop_exit
    _

</llo_original>
